<compile_context>
chip_gen: v7x
topology: tpu7x:2x2x1
jax: 0.10.0
libtpu: 0.0.40
codegen_flags: <defaults>
</compile_context>

<pallas_src>
import math
from functools import partial

import jax
import jax.numpy as jnp
from jax import lax
from jax.experimental import pallas as pl
from jax.experimental.pallas import tpu as pltpu


_SUB = 8            # sublane tile
_LANE = 128         # lane tile
_SCAN_CHUNK = 8     # timesteps per scan chunk (one sublane tile)
VMEM_LIMIT = 32 * 1024 * 1024   # explicit, safe on v5e/v6e/v7x


def _round_up(x, m):
    return ((x + m - 1) // m) * m


def _pick_col_tile(n):
    """Largest column tile that divides n and is 128-aligned (or n itself)."""
    if n <= 512:
        return n
    for t in (512, 384, 256, 128):
        if n % t == 0:
            return t
    return n


# ----------------------------------------------------------------------------
# Tiled matmul (+ optional bias / activation), bf16 MXU inputs, f32 accumulate
# ----------------------------------------------------------------------------

def _matmul_kernel(*refs, act, has_bias):
    if has_bias:
        x_ref, w_ref, b_ref, o_ref = refs
    else:
        x_ref, w_ref, o_ref = refs
        b_ref = None
    y = jnp.dot(x_ref[...], w_ref[...], preferred_element_type=jnp.float32)
    if b_ref is not None:
        y = y + b_ref[...]
    if act == "tanh":
        y = jnp.tanh(y)
    elif act == "gelu":  # exact (erf) GELU, matches torch.nn.GELU default
        y = 0.5 * y * (1.0 + lax.erf(y * (1.0 / math.sqrt(2.0))))
    o_ref[...] = y.astype(o_ref.dtype)


def matmul_bias(x, w, b=None, act=None, mxu_dtype=jnp.bfloat16):
    """o = act(x @ w + b).  x:(M,K), w:(K,N), b:(N,)|None -> (M,N) float32."""
    M, K = x.shape
    K2, N = w.shape
    assert K == K2
    Mp = _round_up(M, _SUB)
    tm = min(256, Mp)
    Mp = _round_up(Mp, tm)
    if Mp != M:
        x = jnp.pad(x, ((0, Mp - M), (0, 0)))
    tn = _pick_col_tile(N)

    in_specs = [pl.BlockSpec((tm, K), lambda i, j: (i, 0)),
                pl.BlockSpec((K, tn), lambda i, j: (0, j))]
    args = [x.astype(mxu_dtype), w.astype(mxu_dtype)]
    if b is not None:
        in_specs.append(pl.BlockSpec((1, tn), lambda i, j: (0, j)))
        args.append(b.reshape(1, N).astype(jnp.float32))

    out = pl.pallas_call(
        partial(_matmul_kernel, act=act, has_bias=b is not None),
        out_shape=jax.ShapeDtypeStruct((Mp, N), jnp.float32),
        grid=(Mp // tm, N // tn),
        in_specs=in_specs,
        out_specs=pl.BlockSpec((tm, tn), lambda i, j: (i, j)),
        compiler_params=pltpu.CompilerParams(
            dimension_semantics=("parallel", "parallel"),
            vmem_limit_bytes=VMEM_LIMIT),
    )(*args)
    return out[:M] if Mp != M else out


# ----------------------------------------------------------------------------
# Row-tiled LayerNorm (optionally fused GELU)
# ----------------------------------------------------------------------------

def _layernorm_kernel(x_ref, g_ref, b_ref, o_ref, *, eps, gelu):
    x = x_ref[...]
    mean = jnp.mean(x, axis=-1, keepdims=True)
    xc = x - mean
    var = jnp.mean(xc * xc, axis=-1, keepdims=True)
    y = xc * lax.rsqrt(var + eps)
    y = y * g_ref[...] + b_ref[...]
    if gelu:
        y = 0.5 * y * (1.0 + lax.erf(y * (1.0 / math.sqrt(2.0))))
    o_ref[...] = y.astype(o_ref.dtype)


def layernorm(x2d, gamma, beta, eps=1e-5, gelu=False):
    M, C = x2d.shape
    Mp = _round_up(M, _SUB)
    tm = min(256, Mp)
    Mp = _round_up(Mp, tm)
    xp = jnp.pad(x2d, ((0, Mp - M), (0, 0))) if Mp != M else x2d
    out = pl.pallas_call(
        partial(_layernorm_kernel, eps=eps, gelu=gelu),
        out_shape=jax.ShapeDtypeStruct((Mp, C), jnp.float32),
        grid=(Mp // tm,),
        in_specs=[pl.BlockSpec((tm, C), lambda i: (i, 0)),
                  pl.BlockSpec((1, C), lambda i: (0, 0)),
                  pl.BlockSpec((1, C), lambda i: (0, 0))],
        out_specs=pl.BlockSpec((tm, C), lambda i: (i, 0)),
        compiler_params=pltpu.CompilerParams(
            dimension_semantics=("parallel",),
            vmem_limit_bytes=VMEM_LIMIT),
    )(xp.astype(jnp.float32), gamma.reshape(1, C).astype(jnp.float32),
      beta.reshape(1, C).astype(jnp.float32))
    return out[:M] if Mp != M else out


# ----------------------------------------------------------------------------
# Causal depthwise conv over time + SiLU  (grid over batch x channel chunks)
# ----------------------------------------------------------------------------

def _dwconv_silu_kernel(xpad_ref, w_ref, b_ref, o_ref, *, L, d_conv):
    w = w_ref[...]                                   # hoisted weight load
    y = xpad_ref[0:L, :] * w[0:1, :]
    for k in range(1, d_conv):                       # static unroll over taps
        y = y + xpad_ref[k:k + L, :] * w[k:k + 1, :]
    y = y + b_ref[...]
    o_ref[...] = (y * jax.nn.sigmoid(y)).astype(o_ref.dtype)   # SiLU


def dwconv_silu(xs, w, bias):
    """xs:(B, L, D), w:(d_conv, D), bias:(D,) -> (B, L, D)."""
    B, L, D = xs.shape
    d_conv = w.shape[0]
    xpad = jnp.pad(xs, ((0, 0), (d_conv - 1, 0), (0, 0)))
    Lp = L + d_conv - 1
    tD = _pick_col_tile(D)
    return pl.pallas_call(
        partial(_dwconv_silu_kernel, L=L, d_conv=d_conv),
        out_shape=jax.ShapeDtypeStruct((B, L, D), jnp.float32),
        grid=(B, D // tD),
        in_specs=[pl.BlockSpec((None, Lp, tD), lambda b, d: (b, 0, d)),
                  pl.BlockSpec((d_conv, tD), lambda b, d: (0, d)),
                  pl.BlockSpec((1, tD), lambda b, d: (0, d))],
        out_specs=pl.BlockSpec((None, L, tD), lambda b, d: (b, 0, d)),
        compiler_params=pltpu.CompilerParams(
            dimension_semantics=("parallel", "parallel"),
            vmem_limit_bytes=VMEM_LIMIT),
    )(xpad.astype(jnp.float32), w.astype(jnp.float32),
      bias.reshape(1, D).astype(jnp.float32))


# ----------------------------------------------------------------------------
# Selective scan: vectorized over d_state, time processed in 8-row chunks
# ----------------------------------------------------------------------------

def _make_scan_kernel(chunk):
    def kernel(u_ref, dt_ref, z_ref, b_ref, c_ref, a_ref, dvec_ref, y_ref):
        # u/dt/z/y: (nc, chunk, tD); b/c: (nc, S, chunk); a: (S, tD); d: (1, tD)
        a = a_ref[...]
        dvec = dvec_ref[...]
        row_ids = lax.broadcasted_iota(jnp.int32, (chunk, 1), 0)
        n_chunks = u_ref.shape[0]

        def chunk_body(ci, h):
            u_c = u_ref[ci]                 # (chunk, tD)
            dt_c = dt_ref[ci]
            z_c = z_ref[ci]
            b_c = b_ref[ci]                 # (S, chunk)
            c_c = c_ref[ci]
            y_chunk = jnp.zeros(u_c.shape, jnp.float32)
            for s in range(chunk):          # static unroll inside the chunk
                dt_t = dt_c[s:s + 1, :]
                # numerically stable softplus
                dt_t = jnp.maximum(dt_t, 0.0) + jnp.log1p(jnp.exp(-jnp.abs(dt_t)))
                u_t = u_c[s:s + 1, :]
                bcol = b_c[:, s:s + 1]      # (S, 1) -> broadcast over d_inner
                ccol = c_c[:, s:s + 1]
                # vectorized state update over all d_state rows at once
                h = jnp.exp(dt_t * a) * h + (dt_t * u_t) * bcol
                y_t = jnp.sum(ccol * h, axis=0, keepdims=True) + dvec * u_t
                z_t = z_c[s:s + 1, :]
                y_t = y_t * (z_t * jax.nn.sigmoid(z_t))      # y * SiLU(z)
                y_chunk = jnp.where(row_ids == s, y_t, y_chunk)
            y_ref[ci] = y_chunk.astype(y_ref.dtype)          # one dense store
            return h

        h0 = jnp.zeros(a.shape, jnp.float32)
        lax.fori_loop(0, n_chunks, chunk_body, h0)

    return kernel


def selective_scan(u, dt_raw, Bmat, Cmat, z, A_t, Dvec):
    """u, dt_raw, z: (B, L, Din); Bmat, Cmat: (B, L, S);
       A_t: (S, Din); Dvec: (Din,) -> (B, L, Din)."""
    Bb, L, Din = u.shape
    S = A_t.shape[0]
    chunk = _SCAN_CHUNK
    Lp = _round_up(L, chunk)
    if Lp != L:   # causal scan -> zero-padding the tail is safe
        pad = ((0, 0), (0, Lp - L), (0, 0))
        u, dt_raw, z = (jnp.pad(t, pad) for t in (u, dt_raw, z))
        Bmat, Cmat = (jnp.pad(t, pad) for t in (Bmat, Cmat))
    nc = Lp // chunk

    u_r = u.reshape(Bb, nc, chunk, Din).astype(jnp.float32)
    dt_r = dt_raw.reshape(Bb, nc, chunk, Din).astype(jnp.float32)
    z_r = z.reshape(Bb, nc, chunk, Din).astype(jnp.float32)
    # time on the lane axis so per-step columns broadcast over d_inner
    b_r = jnp.swapaxes(Bmat.reshape(Bb, nc, chunk, S), 2, 3).astype(jnp.float32)
    c_r = jnp.swapaxes(Cmat.reshape(Bb, nc, chunk, S), 2, 3).astype(jnp.float32)

    tD = _pick_col_tile(Din)
    seq_spec = lambda: pl.BlockSpec((None, nc, chunk, tD), lambda b, d: (b, 0, 0, d))
    bc_spec = lambda: pl.BlockSpec((None, nc, S, chunk), lambda b, d: (b, 0, 0, 0))

    y = pl.pallas_call(
        _make_scan_kernel(chunk),
        out_shape=jax.ShapeDtypeStruct((Bb, nc, chunk, Din), jnp.float32),
        grid=(Bb, Din // tD),
        in_specs=[seq_spec(), seq_spec(), seq_spec(), bc_spec(), bc_spec(),
                  pl.BlockSpec((S, tD), lambda b, d: (0, d)),
                  pl.BlockSpec((1, tD), lambda b, d: (0, d))],
        out_specs=pl.BlockSpec((None, nc, chunk, tD), lambda b, d: (b, 0, 0, d)),
        compiler_params=pltpu.CompilerParams(
            dimension_semantics=("parallel", "parallel"),
            vmem_limit_bytes=VMEM_LIMIT),
    )(u_r, dt_r, z_r, b_r, c_r, A_t.astype(jnp.float32),
      Dvec.reshape(1, Din).astype(jnp.float32))
    y = y.reshape(Bb, Lp, Din)
    return y[:, :L] if Lp != L else y


# ----------------------------------------------------------------------------
# Fused pose head: Linear -> Tanh -> Linear, lane-dense (padded) output
# ----------------------------------------------------------------------------

def _head_kernel(x_ref, w1_ref, b1_ref, w2_ref, b2_ref, o_ref):
    h = jnp.dot(x_ref[...], w1_ref[...], preferred_element_type=jnp.float32)
    h = jnp.tanh(h + b1_ref[...])
    y = jnp.dot(h.astype(w2_ref.dtype), w2_ref[...],
                preferred_element_type=jnp.float32) + b2_ref[...]
    o_ref[...] = y.astype(o_ref.dtype)


def pose_head(x2d, w1, b1, w2, b2, mxu_dtype=jnp.bfloat16):
    M, K1 = x2d.shape
    N1 = w1.shape[1]
    N2 = w2.shape[1]
    N2p = _LANE  # stage the 3-wide output in a 128-lane slab (unmasked stores)
    w2p = jnp.zeros((N1, N2p), jnp.float32).at[:, :N2].set(w2.astype(jnp.float32))
    b2p = jnp.zeros((1, N2p), jnp.float32).at[:, :N2].set(
        b2.reshape(1, N2).astype(jnp.float32))

    Mp = _round_up(M, _SUB)
    tm = min(256, Mp)
    Mp = _round_up(Mp, tm)
    xp = jnp.pad(x2d, ((0, Mp - M), (0, 0))) if Mp != M else x2d

    out = pl.pallas_call(
        _head_kernel,
        out_shape=jax.ShapeDtypeStruct((Mp, N2p), jnp.float32),
        grid=(Mp // tm,),
        in_specs=[pl.BlockSpec((tm, K1), lambda i: (i, 0)),
                  pl.BlockSpec((K1, N1), lambda i: (0, 0)),
                  pl.BlockSpec((1, N1), lambda i: (0, 0)),
                  pl.BlockSpec((N1, N2p), lambda i: (0, 0)),
                  pl.BlockSpec((1, N2p), lambda i: (0, 0))],
        out_specs=pl.BlockSpec((tm, N2p), lambda i: (i, 0)),
        compiler_params=pltpu.CompilerParams(
            dimension_semantics=("parallel",),
            vmem_limit_bytes=VMEM_LIMIT),
    )(xp.astype(mxu_dtype), w1.astype(mxu_dtype),
      b1.reshape(1, N1).astype(jnp.float32), w2p.astype(mxu_dtype), b2p)
    return out[:M, :N2]


# ----------------------------------------------------------------------------
# JAX glue (im2col / orchestration)
# ----------------------------------------------------------------------------

def im2col(x, kh, kw, ph, pw):
    """x: (B, H, W, C) -> (B, Ho, Wo, kh*kw*C) patches (PyTorch cross-corr order)."""
    B, H, W, C = x.shape
    xp = jnp.pad(x, ((0, 0), (ph, ph), (pw, pw), (0, 0)))
    Ho = H + 2 * ph - kh + 1
    Wo = W + 2 * pw - kw + 1
    cols = []
    for i in range(kh):
        for j in range(kw):
            cols.append(xp[:, i:i + Ho, j:j + Wo, :])
    pat = jnp.stack(cols, axis=3)                      # (B, Ho, Wo, kh*kw, C)
    return pat.reshape(B, Ho, Wo, kh * kw * C)


def patch_embedding(x, p, cfg):
    B, T, J, _ = x.shape
    fp = cfg["frame_patch"]
    M = B * T * J

    # Conv2d(dim_in, d_model//2, k=(fp, J), pad=((fp-1)//2,(J-1)//2)) + LN + GELU
    patches = im2col(x, fp, J, (fp - 1) // 2, (J - 1) // 2)
    h = matmul_bias(patches.reshape(M, -1), p["conv1_w"], p["conv1_b"])
    h = layernorm(h, p["ln1_g"], p["ln1_b"], gelu=True)
    h = h.reshape(B, T, J, -1)

    # Conv2d(d_model//2, d_model, k=(fp//3, J), pad=((fp//3-1)//2,(J-1)//2)) + LN
    k2 = fp // 3
    patches2 = im2col(h, k2, J, (k2 - 1) // 2, (J - 1) // 2)
    h = matmul_bias(patches2.reshape(M, -1), p["conv2_w"], p["conv2_b"])
    h = layernorm(h, p["ln2_g"], p["ln2_b"], gelu=False)
    C = h.shape[-1]
    h = h.reshape(B, T, J, C)

    # rearrange 'b (n tp) p c -> b n tp p c', flip patch dim, flatten, concat
    n = T // fp
    h5 = h.reshape(B, n, fp, J, C)
    rev = jnp.flip(h5, axis=1)
    xf = h5.reshape(B, -1, C)
    rf = rev.reshape(B, -1, C)
    return jnp.concatenate([xf, rf], axis=1)           # (B, 2*T*J, C)


def mamba_layer(x, p):
    Bb, L, Dm = x.shape
    d_inner = p["in_proj_w"].shape[1] // 2
    d_state = p["A_log"].shape[1]
    dt_rank = p["x_proj_w"].shape[1] - 2 * d_state

    # in_proj (no bias) -> split x, z
    xz = matmul_bias(x.reshape(Bb * L, Dm), p["in_proj_w"])
    xz = xz.reshape(Bb, L, 2 * d_inner)
    xs, z = xz[:, :, :d_inner], xz[:, :, d_inner:]

    # causal depthwise conv1d over time + SiLU
    xc = dwconv_silu(xs, p["conv_w"], p["conv_b"])     # (B, L, d_inner)

    # fused x_proj + dt_proj:  dt_raw = xc @ (Wx_dt @ W_dt) + b_dt ; [B, C] = xc @ Wx_BC
    w_dt = p["x_proj_w"][:, :dt_rank] @ p["dt_proj_w"]             # (d_inner, d_inner)
    w_fused = jnp.concatenate([w_dt, p["x_proj_w"][:, dt_rank:]], axis=1)
    b_fused = jnp.concatenate(
        [p["dt_proj_b"], jnp.zeros((2 * d_state,), jnp.float32)])
    dbc = matmul_bias(xc.reshape(Bb * L, d_inner), w_fused, b_fused)
    dt_raw = dbc[:, :d_inner].reshape(Bb, L, d_inner)
    Bmat = dbc[:, d_inner:d_inner + d_state].reshape(Bb, L, d_state)
    Cmat = dbc[:, d_inner + d_state:].reshape(Bb, L, d_state)

    A_t = -jnp.exp(p["A_log"]).T                       # (d_state, d_inner)
    y = selective_scan(xc, dt_raw, Bmat, Cmat, z, A_t, p["D"])

    # out_proj (no bias)
    out = matmul_bias(y.reshape(Bb * L, d_inner), p["out_proj_w"])
    return out.reshape(Bb, L, Dm)


def mamba_pose_forward(x, params, cfg):
    h = patch_embedding(x, params["patch"], cfg)       # (B, 2*T*J, d_model)
    Bb, L0, C = h.shape
    # pad the (causal) sequence once so all scan chunks are 8-aligned
    Lp = _round_up(L0, _SCAN_CHUNK)
    if Lp != L0:
        h = jnp.pad(h, ((0, 0), (0, Lp - L0), (0, 0)))
    for lp in params["layers"]:
        h = mamba_layer(h, lp)
    h = h[:, :L0]

    T, J = cfg["n_frames"], cfg["num_joints"]
    # rearrange 'b (t p n) c -> b t p (n c)' with n = 2
    h = h.reshape(Bb, T, J, 2, C).reshape(Bb, T, J, 2 * C)
    hp = params["head"]
    y = pose_head(h.reshape(Bb * T * J, 2 * C), hp["head1_w"], hp["head1_b"],
                  hp["head2_w"], hp["head2_b"])
    return y.reshape(Bb, T, J, 3)


# ----------------------------------------------------------------------------
# Deterministic parameter init (synthetic; shapes follow the PyTorch module)
# ----------------------------------------------------------------------------

def init_params(key, cfg):
    d_model, dim_in = cfg["d_model"], cfg["dim_in"]
    fp, J = cfg["frame_patch"], cfg["num_joints"]
    d_state, d_conv = cfg["d_state"], cfg["d_conv"]
    d_inner = 2 * d_model
    dt_rank = math.ceil(d_model / 16)
    dm2 = d_model // 2

    keys = iter(jax.random.split(key, 64))

    def nrm(shape, scale=0.02):
        return scale * jax.random.normal(next(keys), shape, jnp.float32)

    patch = dict(
        conv1_w=nrm((fp, J, dim_in, dm2)).reshape(fp * J * dim_in, dm2),
        conv1_b=nrm((dm2,)),
        ln1_g=jnp.ones((dm2,), jnp.float32),
        ln1_b=jnp.zeros((dm2,), jnp.float32),
        conv2_w=nrm((fp // 3, J, dm2, d_model)).reshape((fp // 3) * J * dm2, d_model),
        conv2_b=nrm((d_model,)),
        ln2_g=jnp.ones((d_model,), jnp.float32),
        ln2_b=jnp.zeros((d_model,), jnp.float32),
    )

    layers = []
    for _ in range(cfg["n_layers"]):
        layers.append(dict(
            in_proj_w=nrm((d_model, 2 * d_inner)),
            conv_w=nrm((d_conv, d_inner)),
            conv_b=nrm((d_inner,)),
            x_proj_w=nrm((d_inner, dt_rank + 2 * d_state)),
            dt_proj_w=nrm((dt_rank, d_inner)),
            dt_proj_b=nrm((d_inner,)),
            A_log=jnp.log(jnp.broadcast_to(
                jnp.arange(1, d_state + 1, dtype=jnp.float32), (d_inner, d_state))),
            D=jnp.ones((d_inner,), jnp.float32),
            out_proj_w=nrm((d_inner, d_model)),
        ))

    head = dict(
        head1_w=nrm((2 * d_model, d_model)),
        head1_b=nrm((d_model,)),
        head2_w=nrm((d_model, 3)),
        head2_b=nrm((3,)),
    )
    return dict(patch=patch, layers=layers, head=head)


if __name__ == "__main__":
    cfg = dict(dim_in=3, n_layers=2, d_model=32, frame_patch=3,
               d_state=4, d_conv=4, num_joints=5, n_frames=9)
    params = init_params(jax.random.PRNGKey(0), cfg)

    x = jax.random.normal(
        jax.random.PRNGKey(0),
        (2, cfg["n_frames"], cfg["num_joints"], cfg["dim_in"]), jnp.float32)

    fwd = jax.jit(partial(mamba_pose_forward, cfg=cfg))
    out = fwd(x, params)
    out = jax.block_until_ready(out)
    assert out.shape == (2, cfg["n_frames"], cfg["num_joints"], 3)
    assert bool(jnp.all(jnp.isfinite(out)))
    print("KERNEL_OK")
</pallas_src>

<mosaic_0001>
module attributes {stable_mosaic.version = 11 : i64} {
  func.func @_matmul_kernel(%arg0: i32, %arg1: i32, %arg2: memref<96x45xbf16, #tpu.memory_space<vmem>>, %arg3: memref<45x16xbf16, #tpu.memory_space<vmem>>, %arg4: memref<1x16xf32, #tpu.memory_space<vmem>>, %arg5: memref<96x16xf32, #tpu.memory_space<vmem>>) attributes {dimension_semantics = [#tpu.dimension_semantics<parallel>, #tpu.dimension_semantics<parallel>], iteration_bounds = array<i64: 1, 1>, scalar_prefetch = 0 : i64, scratch_operands = 0 : i64, tpu.core_type = #tpu.core_type<tc>, window_params = [{transform_indices = @transform_0, window_bounds = array<i64: 96, 45>}, {transform_indices = @transform_1, window_bounds = array<i64: 45, 16>}, {transform_indices = @transform_2, window_bounds = array<i64: 1, 16>}, {transform_indices = @transform_3, window_bounds = array<i64: 96, 16>}]} {
    %c0 = arith.constant 0 : index
    %c0_0 = arith.constant 0 : index
    %0 = vector.load %arg2[%c0, %c0_0] : memref<96x45xbf16, #tpu.memory_space<vmem>>, vector<96x45xbf16>
    %c0_1 = arith.constant 0 : index
    %c0_2 = arith.constant 0 : index
    %1 = vector.load %arg3[%c0_1, %c0_2] : memref<45x16xbf16, #tpu.memory_space<vmem>>, vector<45x16xbf16>
    %cst = arith.constant dense<0.000000e+00> : vector<96x16xf32>
    %2 = tpu.matmul %0, %1, %cst {dimension_numbers = #tpu.dot_dimension_numbers<[1], [0], [0], [1], [0, 0, 1, 1], [], []>} : vector<96x45xbf16>, vector<45x16xbf16>, vector<96x16xf32> -> vector<96x16xf32>
    %c0_3 = arith.constant 0 : index
    %c0_4 = arith.constant 0 : index
    %3 = vector.load %arg4[%c0_3, %c0_4] : memref<1x16xf32, #tpu.memory_space<vmem>>, vector<1x16xf32>
    %4 = vector.broadcast %3 : vector<1x16xf32> to vector<96x16xf32>
    %5 = arith.addf %2, %4 : vector<96x16xf32>
    %c0_5 = arith.constant 0 : index
    %c0_6 = arith.constant 0 : index
    %6 = vector.load %arg5[%c0_5, %c0_6] : memref<96x16xf32, #tpu.memory_space<vmem>>, vector<96x16xf32>
    tpu.vector_store %arg5[%c0_5, %c0_6], %5 {strides = array<i32>} : memref<96x16xf32, #tpu.memory_space<vmem>>, vector<96x16xf32>,
    return
  }
  func.func @transform_0(%arg0: i32, %arg1: i32) -> (i32, i32) {
    %c0_i32 = arith.constant 0 : i32
    %c0_i32_0 = arith.constant 0 : i32
    return %arg0, %c0_i32 : i32, i32
  }
  func.func @transform_1(%arg0: i32, %arg1: i32) -> (i32, i32) {
    %c0_i32 = arith.constant 0 : i32
    %c0_i32_0 = arith.constant 0 : i32
    return %c0_i32, %arg1 : i32, i32
  }
  func.func @transform_2(%arg0: i32, %arg1: i32) -> (i32, i32) {
    %c0_i32 = arith.constant 0 : i32
    %c0_i32_0 = arith.constant 0 : i32
    return %c0_i32, %arg1 : i32, i32
  }
  func.func @transform_3(%arg0: i32, %arg1: i32) -> (i32, i32) {
    %c0_i32 = arith.constant 0 : i32
    return %arg0, %arg1 : i32, i32
  }
}

module attributes {stable_mosaic.version = 11 : i64} {
  func.func @_layernorm_kernel(%arg0: i32, %arg1: memref<96x16xf32, #tpu.memory_space<vmem>>, %arg2: memref<1x16xf32, #tpu.memory_space<vmem>>, %arg3: memref<1x16xf32, #tpu.memory_space<vmem>>, %arg4: memref<96x16xf32, #tpu.memory_space<vmem>>) attributes {dimension_semantics = [#tpu.dimension_semantics<parallel>], iteration_bounds = array<i64: 1>, scalar_prefetch = 0 : i64, scratch_operands = 0 : i64, tpu.core_type = #tpu.core_type<tc>, window_params = [{transform_indices = @transform_0, window_bounds = array<i64: 96, 16>}, {pipeline_mode = #tpu.pipeline_mode<synchronous>, transform_indices = @transform_1, window_bounds = array<i64: 1, 16>}, {pipeline_mode = #tpu.pipeline_mode<synchronous>, transform_indices = @transform_2, window_bounds = array<i64: 1, 16>}, {transform_indices = @transform_3, window_bounds = array<i64: 96, 16>}]} {
    %c0 = arith.constant 0 : index
    %c0_0 = arith.constant 0 : index
    %0 = vector.load %arg1[%c0, %c0_0] : memref<96x16xf32, #tpu.memory_space<vmem>>, vector<96x16xf32>
    %cst = arith.constant dense<0.000000e+00> : vector<96xf32>
    %1 = vector.multi_reduction <add>, %0, %cst [1] : vector<96x16xf32> to vector<96xf32>
    %2 = vector.shape_cast %1 : vector<96xf32> to vector<96x1xf32>
    %cst_1 = arith.constant 1.600000e+01 : f32
    %3 = vector.broadcast %cst_1 : f32 to vector<96x1xf32>
    %4 = arith.divf %2, %3 : vector<96x1xf32>
    %5 = vector.broadcast %4 : vector<96x1xf32> to vector<96x16xf32>
    %6 = arith.subf %0, %5 : vector<96x16xf32>
    %7 = arith.mulf %6, %6 : vector<96x16xf32>
    %cst_2 = arith.constant dense<0.000000e+00> : vector<96xf32>
    %8 = vector.multi_reduction <add>, %7, %cst_2 [1] : vector<96x16xf32> to vector<96xf32>
    %9 = vector.shape_cast %8 : vector<96xf32> to vector<96x1xf32>
    %cst_3 = arith.constant 1.600000e+01 : f32
    %10 = vector.broadcast %cst_3 : f32 to vector<96x1xf32>
    %11 = arith.divf %9, %10 : vector<96x1xf32>
    %cst_4 = arith.constant 9.99999974E-6 : f32
    %12 = vector.broadcast %cst_4 : f32 to vector<96x1xf32>
    %13 = arith.addf %11, %12 : vector<96x1xf32>
    %14 = math.rsqrt %13 : vector<96x1xf32>
    %15 = vector.broadcast %14 : vector<96x1xf32> to vector<96x16xf32>
    %16 = arith.mulf %6, %15 : vector<96x16xf32>
    %c0_5 = arith.constant 0 : index
    %c0_6 = arith.constant 0 : index
    %17 = vector.load %arg2[%c0_5, %c0_6] : memref<1x16xf32, #tpu.memory_space<vmem>>, vector<1x16xf32>
    %18 = vector.broadcast %17 : vector<1x16xf32> to vector<96x16xf32>
    %19 = arith.mulf %16, %18 : vector<96x16xf32>
    %c0_7 = arith.constant 0 : index
    %c0_8 = arith.constant 0 : index
    %20 = vector.load %arg3[%c0_7, %c0_8] : memref<1x16xf32, #tpu.memory_space<vmem>>, vector<1x16xf32>
    %21 = vector.broadcast %20 : vector<1x16xf32> to vector<96x16xf32>
    %22 = arith.addf %19, %21 : vector<96x16xf32>
    %cst_9 = arith.constant 5.000000e-01 : f32
    %23 = vector.broadcast %cst_9 : f32 to vector<96x16xf32>
    %24 = arith.mulf %23, %22 : vector<96x16xf32>
    %cst_10 = arith.constant 0.707106769 : f32
    %25 = vector.broadcast %cst_10 : f32 to vector<96x16xf32>
    %26 = arith.mulf %22, %25 : vector<96x16xf32>
    %27 = math.erf %26 : vector<96x16xf32>
    %cst_11 = arith.constant 1.000000e+00 : f32
    %28 = vector.broadcast %cst_11 : f32 to vector<96x16xf32>
    %29 = arith.addf %28, %27 : vector<96x16xf32>
    %30 = arith.mulf %24, %29 : vector<96x16xf32>
    %c0_12 = arith.constant 0 : index
    %c0_13 = arith.constant 0 : index
    %31 = vector.load %arg4[%c0_12, %c0_13] : memref<96x16xf32, #tpu.memory_space<vmem>>, vector<96x16xf32>
    tpu.vector_store %arg4[%c0_12, %c0_13], %30 {strides = array<i32>} : memref<96x16xf32, #tpu.memory_space<vmem>>, vector<96x16xf32>,
    return
  }
  func.func @transform_0(%arg0: i32) -> (i32, i32) {
    %c0_i32 = arith.constant 0 : i32
    %c0_i32_0 = arith.constant 0 : i32
    return %arg0, %c0_i32 : i32, i32
  }
  func.func @transform_1(%arg0: i32) -> (i32, i32) {
    %c0_i32 = arith.constant 0 : i32
    %c0_i32_0 = arith.constant 0 : i32
    %c0_i32_1 = arith.constant 0 : i32
    return %c0_i32, %c0_i32_0 : i32, i32
  }
  func.func @transform_2(%arg0: i32) -> (i32, i32) {
    %c0_i32 = arith.constant 0 : i32
    %c0_i32_0 = arith.constant 0 : i32
    %c0_i32_1 = arith.constant 0 : i32
    return %c0_i32, %c0_i32_0 : i32, i32
  }
  func.func @transform_3(%arg0: i32) -> (i32, i32) {
    %c0_i32 = arith.constant 0 : i32
    %c0_i32_0 = arith.constant 0 : i32
    return %arg0, %c0_i32 : i32, i32
  }
}

module attributes {stable_mosaic.version = 11 : i64} {
  func.func @_matmul_kernel(%arg0: i32, %arg1: i32, %arg2: memref<96x80xbf16, #tpu.memory_space<vmem>>, %arg3: memref<80x32xbf16, #tpu.memory_space<vmem>>, %arg4: memref<1x32xf32, #tpu.memory_space<vmem>>, %arg5: memref<96x32xf32, #tpu.memory_space<vmem>>) attributes {dimension_semantics = [#tpu.dimension_semantics<parallel>, #tpu.dimension_semantics<parallel>], iteration_bounds = array<i64: 1, 1>, scalar_prefetch = 0 : i64, scratch_operands = 0 : i64, tpu.core_type = #tpu.core_type<tc>, window_params = [{transform_indices = @transform_0, window_bounds = array<i64: 96, 80>}, {transform_indices = @transform_1, window_bounds = array<i64: 80, 32>}, {transform_indices = @transform_2, window_bounds = array<i64: 1, 32>}, {transform_indices = @transform_3, window_bounds = array<i64: 96, 32>}]} {
    %c0 = arith.constant 0 : index
    %c0_0 = arith.constant 0 : index
    %0 = vector.load %arg2[%c0, %c0_0] : memref<96x80xbf16, #tpu.memory_space<vmem>>, vector<96x80xbf16>
    %c0_1 = arith.constant 0 : index
    %c0_2 = arith.constant 0 : index
    %1 = vector.load %arg3[%c0_1, %c0_2] : memref<80x32xbf16, #tpu.memory_space<vmem>>, vector<80x32xbf16>
    %cst = arith.constant dense<0.000000e+00> : vector<96x32xf32>
    %2 = tpu.matmul %0, %1, %cst {dimension_numbers = #tpu.dot_dimension_numbers<[1], [0], [0], [1], [0, 0, 1, 1], [], []>} : vector<96x80xbf16>, vector<80x32xbf16>, vector<96x32xf32> -> vector<96x32xf32>
    %c0_3 = arith.constant 0 : index
    %c0_4 = arith.constant 0 : index
    %3 = vector.load %arg4[%c0_3, %c0_4] : memref<1x32xf32, #tpu.memory_space<vmem>>, vector<1x32xf32>
    %4 = vector.broadcast %3 : vector<1x32xf32> to vector<96x32xf32>
    %5 = arith.addf %2, %4 : vector<96x32xf32>
    %c0_5 = arith.constant 0 : index
    %c0_6 = arith.constant 0 : index
    %6 = vector.load %arg5[%c0_5, %c0_6] : memref<96x32xf32, #tpu.memory_space<vmem>>, vector<96x32xf32>
    tpu.vector_store %arg5[%c0_5, %c0_6], %5 {strides = array<i32>} : memref<96x32xf32, #tpu.memory_space<vmem>>, vector<96x32xf32>,
    return
  }
  func.func @transform_0(%arg0: i32, %arg1: i32) -> (i32, i32) {
    %c0_i32 = arith.constant 0 : i32
    %c0_i32_0 = arith.constant 0 : i32
    return %arg0, %c0_i32 : i32, i32
  }
  func.func @transform_1(%arg0: i32, %arg1: i32) -> (i32, i32) {
    %c0_i32 = arith.constant 0 : i32
    %c0_i32_0 = arith.constant 0 : i32
    return %c0_i32, %arg1 : i32, i32
  }
  func.func @transform_2(%arg0: i32, %arg1: i32) -> (i32, i32) {
    %c0_i32 = arith.constant 0 : i32
    %c0_i32_0 = arith.constant 0 : i32
    return %c0_i32, %arg1 : i32, i32
  }
  func.func @transform_3(%arg0: i32, %arg1: i32) -> (i32, i32) {
    %c0_i32 = arith.constant 0 : i32
    return %arg0, %arg1 : i32, i32
  }
}

module attributes {stable_mosaic.version = 11 : i64} {
  func.func @_layernorm_kernel(%arg0: i32, %arg1: memref<96x32xf32, #tpu.memory_space<vmem>>, %arg2: memref<1x32xf32, #tpu.memory_space<vmem>>, %arg3: memref<1x32xf32, #tpu.memory_space<vmem>>, %arg4: memref<96x32xf32, #tpu.memory_space<vmem>>) attributes {dimension_semantics = [#tpu.dimension_semantics<parallel>], iteration_bounds = array<i64: 1>, scalar_prefetch = 0 : i64, scratch_operands = 0 : i64, tpu.core_type = #tpu.core_type<tc>, window_params = [{transform_indices = @transform_0, window_bounds = array<i64: 96, 32>}, {pipeline_mode = #tpu.pipeline_mode<synchronous>, transform_indices = @transform_1, window_bounds = array<i64: 1, 32>}, {pipeline_mode = #tpu.pipeline_mode<synchronous>, transform_indices = @transform_2, window_bounds = array<i64: 1, 32>}, {transform_indices = @transform_3, window_bounds = array<i64: 96, 32>}]} {
    %c0 = arith.constant 0 : index
    %c0_0 = arith.constant 0 : index
    %0 = vector.load %arg1[%c0, %c0_0] : memref<96x32xf32, #tpu.memory_space<vmem>>, vector<96x32xf32>
    %cst = arith.constant dense<0.000000e+00> : vector<96xf32>
    %1 = vector.multi_reduction <add>, %0, %cst [1] : vector<96x32xf32> to vector<96xf32>
    %2 = vector.shape_cast %1 : vector<96xf32> to vector<96x1xf32>
    %cst_1 = arith.constant 3.200000e+01 : f32
    %3 = vector.broadcast %cst_1 : f32 to vector<96x1xf32>
    %4 = arith.divf %2, %3 : vector<96x1xf32>
    %5 = vector.broadcast %4 : vector<96x1xf32> to vector<96x32xf32>
    %6 = arith.subf %0, %5 : vector<96x32xf32>
    %7 = arith.mulf %6, %6 : vector<96x32xf32>
    %cst_2 = arith.constant dense<0.000000e+00> : vector<96xf32>
    %8 = vector.multi_reduction <add>, %7, %cst_2 [1] : vector<96x32xf32> to vector<96xf32>
    %9 = vector.shape_cast %8 : vector<96xf32> to vector<96x1xf32>
    %cst_3 = arith.constant 3.200000e+01 : f32
    %10 = vector.broadcast %cst_3 : f32 to vector<96x1xf32>
    %11 = arith.divf %9, %10 : vector<96x1xf32>
    %cst_4 = arith.constant 9.99999974E-6 : f32
    %12 = vector.broadcast %cst_4 : f32 to vector<96x1xf32>
    %13 = arith.addf %11, %12 : vector<96x1xf32>
    %14 = math.rsqrt %13 : vector<96x1xf32>
    %15 = vector.broadcast %14 : vector<96x1xf32> to vector<96x32xf32>
    %16 = arith.mulf %6, %15 : vector<96x32xf32>
    %c0_5 = arith.constant 0 : index
    %c0_6 = arith.constant 0 : index
    %17 = vector.load %arg2[%c0_5, %c0_6] : memref<1x32xf32, #tpu.memory_space<vmem>>, vector<1x32xf32>
    %18 = vector.broadcast %17 : vector<1x32xf32> to vector<96x32xf32>
    %19 = arith.mulf %16, %18 : vector<96x32xf32>
    %c0_7 = arith.constant 0 : index
    %c0_8 = arith.constant 0 : index
    %20 = vector.load %arg3[%c0_7, %c0_8] : memref<1x32xf32, #tpu.memory_space<vmem>>, vector<1x32xf32>
    %21 = vector.broadcast %20 : vector<1x32xf32> to vector<96x32xf32>
    %22 = arith.addf %19, %21 : vector<96x32xf32>
    %c0_9 = arith.constant 0 : index
    %c0_10 = arith.constant 0 : index
    %23 = vector.load %arg4[%c0_9, %c0_10] : memref<96x32xf32, #tpu.memory_space<vmem>>, vector<96x32xf32>
    tpu.vector_store %arg4[%c0_9, %c0_10], %22 {strides = array<i32>} : memref<96x32xf32, #tpu.memory_space<vmem>>, vector<96x32xf32>,
    return
  }
  func.func @transform_0(%arg0: i32) -> (i32, i32) {
    %c0_i32 = arith.constant 0 : i32
    %c0_i32_0 = arith.constant 0 : i32
    return %arg0, %c0_i32 : i32, i32
  }
  func.func @transform_1(%arg0: i32) -> (i32, i32) {
    %c0_i32 = arith.constant 0 : i32
    %c0_i32_0 = arith.constant 0 : i32
    %c0_i32_1 = arith.constant 0 : i32
    return %c0_i32, %c0_i32_0 : i32, i32
  }
  func.func @transform_2(%arg0: i32) -> (i32, i32) {
    %c0_i32 = arith.constant 0 : i32
    %c0_i32_0 = arith.constant 0 : i32
    %c0_i32_1 = arith.constant 0 : i32
    return %c0_i32, %c0_i32_0 : i32, i32
  }
  func.func @transform_3(%arg0: i32) -> (i32, i32) {
    %c0_i32 = arith.constant 0 : i32
    %c0_i32_0 = arith.constant 0 : i32
    return %arg0, %c0_i32 : i32, i32
  }
}

module attributes {stable_mosaic.version = 11 : i64} {
  func.func @_matmul_kernel(%arg0: i32, %arg1: i32, %arg2: memref<192x32xbf16, #tpu.memory_space<vmem>>, %arg3: memref<32x128xbf16, #tpu.memory_space<vmem>>, %arg4: memref<192x128xf32, #tpu.memory_space<vmem>>) attributes {dimension_semantics = [#tpu.dimension_semantics<parallel>, #tpu.dimension_semantics<parallel>], iteration_bounds = array<i64: 1, 1>, scalar_prefetch = 0 : i64, scratch_operands = 0 : i64, tpu.core_type = #tpu.core_type<tc>, window_params = [{transform_indices = @transform_0, window_bounds = array<i64: 192, 32>}, {transform_indices = @transform_1, window_bounds = array<i64: 32, 128>}, {transform_indices = @transform_2, window_bounds = array<i64: 192, 128>}]} {
    %c0 = arith.constant 0 : index
    %c0_0 = arith.constant 0 : index
    %0 = vector.load %arg2[%c0, %c0_0] : memref<192x32xbf16, #tpu.memory_space<vmem>>, vector<192x32xbf16>
    %c0_1 = arith.constant 0 : index
    %c0_2 = arith.constant 0 : index
    %1 = vector.load %arg3[%c0_1, %c0_2] : memref<32x128xbf16, #tpu.memory_space<vmem>>, vector<32x128xbf16>
    %cst = arith.constant dense<0.000000e+00> : vector<192x128xf32>
    %2 = tpu.matmul %0, %1, %cst {dimension_numbers = #tpu.dot_dimension_numbers<[1], [0], [0], [1], [0, 0, 1, 1], [], []>} : vector<192x32xbf16>, vector<32x128xbf16>, vector<192x128xf32> -> vector<192x128xf32>
    %c0_3 = arith.constant 0 : index
    %c0_4 = arith.constant 0 : index
    %3 = vector.load %arg4[%c0_3, %c0_4] : memref<192x128xf32, #tpu.memory_space<vmem>>, vector<192x128xf32>
    tpu.vector_store %arg4[%c0_3, %c0_4], %2 {strides = array<i32>} : memref<192x128xf32, #tpu.memory_space<vmem>>, vector<192x128xf32>,
    return
  }
  func.func @transform_0(%arg0: i32, %arg1: i32) -> (i32, i32) {
    %c0_i32 = arith.constant 0 : i32
    %c0_i32_0 = arith.constant 0 : i32
    return %arg0, %c0_i32 : i32, i32
  }
  func.func @transform_1(%arg0: i32, %arg1: i32) -> (i32, i32) {
    %c0_i32 = arith.constant 0 : i32
    %c0_i32_0 = arith.constant 0 : i32
    return %c0_i32, %arg1 : i32, i32
  }
  func.func @transform_2(%arg0: i32, %arg1: i32) -> (i32, i32) {
    %c0_i32 = arith.constant 0 : i32
    return %arg0, %arg1 : i32, i32
  }
}

module attributes {stable_mosaic.version = 11 : i64} {
  func.func @_dwconv_silu_kernel(%arg0: i32, %arg1: i32, %arg2: memref<1x99x64xf32, #tpu.memory_space<vmem>>, %arg3: memref<4x64xf32, #tpu.memory_space<vmem>>, %arg4: memref<1x64xf32, #tpu.memory_space<vmem>>, %arg5: memref<1x96x64xf32, #tpu.memory_space<vmem>>) attributes {dimension_semantics = [#tpu.dimension_semantics<parallel>, #tpu.dimension_semantics<parallel>], iteration_bounds = array<i64: 2, 1>, scalar_prefetch = 0 : i64, scratch_operands = 0 : i64, tpu.core_type = #tpu.core_type<tc>, window_params = [{transform_indices = @transform_0, window_bounds = array<i64: 1, 99, 64>}, {transform_indices = @transform_1, window_bounds = array<i64: 4, 64>}, {transform_indices = @transform_2, window_bounds = array<i64: 1, 64>}, {transform_indices = @transform_3, window_bounds = array<i64: 1, 96, 64>}]} {
    %c0 = arith.constant 0 : index
    %c0_0 = arith.constant 0 : index
    %0 = vector.load %arg3[%c0, %c0_0] : memref<4x64xf32, #tpu.memory_space<vmem>>, vector<4x64xf32>
    %c0_1 = arith.constant 0 : index
    %c0_2 = arith.constant 0 : index
    %c0_3 = arith.constant 0 : index
    %1 = vector.load %arg2[%c0_1, %c0_2, %c0_3] : memref<1x99x64xf32, #tpu.memory_space<vmem>>, vector<1x96x64xf32>
    %2 = vector.shape_cast %1 : vector<1x96x64xf32> to vector<96x64xf32>
    %3 = vector.extract_strided_slice %0 {offsets = [0, 0], sizes = [1, 64], strides = [1, 1]} : vector<4x64xf32> to vector<1x64xf32>
    %4 = vector.broadcast %3 : vector<1x64xf32> to vector<96x64xf32>
    %5 = arith.mulf %2, %4 : vector<96x64xf32>
    %c0_4 = arith.constant 0 : index
    %c1 = arith.constant 1 : index
    %c0_5 = arith.constant 0 : index
    %6 = vector.load %arg2[%c0_4, %c1, %c0_5] : memref<1x99x64xf32, #tpu.memory_space<vmem>>, vector<1x96x64xf32>
    %7 = vector.shape_cast %6 : vector<1x96x64xf32> to vector<96x64xf32>
    %8 = vector.extract_strided_slice %0 {offsets = [1, 0], sizes = [1, 64], strides = [1, 1]} : vector<4x64xf32> to vector<1x64xf32>
    %9 = vector.broadcast %8 : vector<1x64xf32> to vector<96x64xf32>
    %10 = arith.mulf %7, %9 : vector<96x64xf32>
    %11 = arith.addf %5, %10 : vector<96x64xf32>
    %c0_6 = arith.constant 0 : index
    %c2 = arith.constant 2 : index
    %c0_7 = arith.constant 0 : index
    %12 = vector.load %arg2[%c0_6, %c2, %c0_7] : memref<1x99x64xf32, #tpu.memory_space<vmem>>, vector<1x96x64xf32>
    %13 = vector.shape_cast %12 : vector<1x96x64xf32> to vector<96x64xf32>
    %14 = vector.extract_strided_slice %0 {offsets = [2, 0], sizes = [1, 64], strides = [1, 1]} : vector<4x64xf32> to vector<1x64xf32>
    %15 = vector.broadcast %14 : vector<1x64xf32> to vector<96x64xf32>
    %16 = arith.mulf %13, %15 : vector<96x64xf32>
    %17 = arith.addf %11, %16 : vector<96x64xf32>
    %c0_8 = arith.constant 0 : index
    %c3 = arith.constant 3 : index
    %c0_9 = arith.constant 0 : index
    %18 = vector.load %arg2[%c0_8, %c3, %c0_9] : memref<1x99x64xf32, #tpu.memory_space<vmem>>, vector<1x96x64xf32>
    %19 = vector.shape_cast %18 : vector<1x96x64xf32> to vector<96x64xf32>
    %20 = vector.extract_strided_slice %0 {offsets = [3, 0], sizes = [1, 64], strides = [1, 1]} : vector<4x64xf32> to vector<1x64xf32>
    %21 = vector.broadcast %20 : vector<1x64xf32> to vector<96x64xf32>
    %22 = arith.mulf %19, %21 : vector<96x64xf32>
    %23 = arith.addf %17, %22 : vector<96x64xf32>
    %c0_10 = arith.constant 0 : index
    %c0_11 = arith.constant 0 : index
    %24 = vector.load %arg4[%c0_10, %c0_11] : memref<1x64xf32, #tpu.memory_space<vmem>>, vector<1x64xf32>
    %25 = vector.broadcast %24 : vector<1x64xf32> to vector<96x64xf32>
    %26 = arith.addf %23, %25 : vector<96x64xf32>
    %27 = arith.negf %26 : vector<96x64xf32>
    %28 = math.exp %27 : vector<96x64xf32>
    %cst = arith.constant 1.000000e+00 : f32
    %29 = vector.broadcast %cst : f32 to vector<96x64xf32>
    %30 = arith.addf %29, %28 : vector<96x64xf32>
    %31 = arith.divf %29, %30 : vector<96x64xf32>
    %32 = arith.mulf %26, %31 : vector<96x64xf32>
    %c0_12 = arith.constant 0 : index
    %c0_13 = arith.constant 0 : index
    %c0_14 = arith.constant 0 : index
    %33 = vector.load %arg5[%c0_12, %c0_13, %c0_14] : memref<1x96x64xf32, #tpu.memory_space<vmem>>, vector<1x96x64xf32>
    %34 = vector.shape_cast %33 : vector<1x96x64xf32> to vector<96x64xf32>
    %35 = vector.shape_cast %32 : vector<96x64xf32> to vector<1x96x64xf32>
    tpu.vector_store %arg5[%c0_12, %c0_13, %c0_14], %35 {strides = array<i32>} : memref<1x96x64xf32, #tpu.memory_space<vmem>>, vector<1x96x64xf32>,
    return
  }
  func.func @transform_0(%arg0: i32, %arg1: i32) -> (i32, i32, i32) {
    %c0_i32 = arith.constant 0 : i32
    %c0_i32_0 = arith.constant 0 : i32
    return %arg0, %c0_i32, %arg1 : i32, i32, i32
  }
  func.func @transform_1(%arg0: i32, %arg1: i32) -> (i32, i32) {
    %c0_i32 = arith.constant 0 : i32
    %c0_i32_0 = arith.constant 0 : i32
    return %c0_i32, %arg1 : i32, i32
  }
  func.func @transform_2(%arg0: i32, %arg1: i32) -> (i32, i32) {
    %c0_i32 = arith.constant 0 : i32
    %c0_i32_0 = arith.constant 0 : i32
    return %c0_i32, %arg1 : i32, i32
  }
  func.func @transform_3(%arg0: i32, %arg1: i32) -> (i32, i32, i32) {
    %c0_i32 = arith.constant 0 : i32
    %c0_i32_0 = arith.constant 0 : i32
    return %arg0, %c0_i32, %arg1 : i32, i32, i32
  }
}

module attributes {stable_mosaic.version = 11 : i64} {
  func.func @_matmul_kernel(%arg0: i32, %arg1: i32, %arg2: memref<192x64xbf16, #tpu.memory_space<vmem>>, %arg3: memref<64x72xbf16, #tpu.memory_space<vmem>>, %arg4: memref<1x72xf32, #tpu.memory_space<vmem>>, %arg5: memref<192x72xf32, #tpu.memory_space<vmem>>) attributes {dimension_semantics = [#tpu.dimension_semantics<parallel>, #tpu.dimension_semantics<parallel>], iteration_bounds = array<i64: 1, 1>, scalar_prefetch = 0 : i64, scratch_operands = 0 : i64, tpu.core_type = #tpu.core_type<tc>, window_params = [{transform_indices = @transform_0, window_bounds = array<i64: 192, 64>}, {transform_indices = @transform_1, window_bounds = array<i64: 64, 72>}, {transform_indices = @transform_2, window_bounds = array<i64: 1, 72>}, {transform_indices = @transform_3, window_bounds = array<i64: 192, 72>}]} {
    %c0 = arith.constant 0 : index
    %c0_0 = arith.constant 0 : index
    %0 = vector.load %arg2[%c0, %c0_0] : memref<192x64xbf16, #tpu.memory_space<vmem>>, vector<192x64xbf16>
    %c0_1 = arith.constant 0 : index
    %c0_2 = arith.constant 0 : index
    %1 = vector.load %arg3[%c0_1, %c0_2] : memref<64x72xbf16, #tpu.memory_space<vmem>>, vector<64x72xbf16>
    %cst = arith.constant dense<0.000000e+00> : vector<192x72xf32>
    %2 = tpu.matmul %0, %1, %cst {dimension_numbers = #tpu.dot_dimension_numbers<[1], [0], [0], [1], [0, 0, 1, 1], [], []>} : vector<192x64xbf16>, vector<64x72xbf16>, vector<192x72xf32> -> vector<192x72xf32>
    %c0_3 = arith.constant 0 : index
    %c0_4 = arith.constant 0 : index
    %3 = vector.load %arg4[%c0_3, %c0_4] : memref<1x72xf32, #tpu.memory_space<vmem>>, vector<1x72xf32>
    %4 = vector.broadcast %3 : vector<1x72xf32> to vector<192x72xf32>
    %5 = arith.addf %2, %4 : vector<192x72xf32>
    %c0_5 = arith.constant 0 : index
    %c0_6 = arith.constant 0 : index
    %6 = vector.load %arg5[%c0_5, %c0_6] : memref<192x72xf32, #tpu.memory_space<vmem>>, vector<192x72xf32>
    tpu.vector_store %arg5[%c0_5, %c0_6], %5 {strides = array<i32>} : memref<192x72xf32, #tpu.memory_space<vmem>>, vector<192x72xf32>,
    return
  }
  func.func @transform_0(%arg0: i32, %arg1: i32) -> (i32, i32) {
    %c0_i32 = arith.constant 0 : i32
    %c0_i32_0 = arith.constant 0 : i32
    return %arg0, %c0_i32 : i32, i32
  }
  func.func @transform_1(%arg0: i32, %arg1: i32) -> (i32, i32) {
    %c0_i32 = arith.constant 0 : i32
    %c0_i32_0 = arith.constant 0 : i32
    return %c0_i32, %arg1 : i32, i32
  }
  func.func @transform_2(%arg0: i32, %arg1: i32) -> (i32, i32) {
    %c0_i32 = arith.constant 0 : i32
    %c0_i32_0 = arith.constant 0 : i32
    return %c0_i32, %arg1 : i32, i32
  }
  func.func @transform_3(%arg0: i32, %arg1: i32) -> (i32, i32) {
    %c0_i32 = arith.constant 0 : i32
    return %arg0, %arg1 : i32, i32
  }
}

module attributes {stable_mosaic.version = 11 : i64} {
  func.func @kernel(%arg0: i32, %arg1: i32, %arg2: memref<1x12x8x64xf32, #tpu.memory_space<vmem>>, %arg3: memref<1x12x8x64xf32, #tpu.memory_space<vmem>>, %arg4: memref<1x12x8x64xf32, #tpu.memory_space<vmem>>, %arg5: memref<1x12x4x8xf32, #tpu.memory_space<vmem>>, %arg6: memref<1x12x4x8xf32, #tpu.memory_space<vmem>>, %arg7: memref<4x64xf32, #tpu.memory_space<vmem>>, %arg8: memref<1x64xf32, #tpu.memory_space<vmem>>, %arg9: memref<1x12x8x64xf32, #tpu.memory_space<vmem>>) attributes {dimension_semantics = [#tpu.dimension_semantics<parallel>, #tpu.dimension_semantics<parallel>], iteration_bounds = array<i64: 2, 1>, scalar_prefetch = 0 : i64, scratch_operands = 0 : i64, tpu.core_type = #tpu.core_type<tc>, window_params = [{transform_indices = @transform_0, window_bounds = array<i64: 1, 12, 8, 64>}, {transform_indices = @transform_1, window_bounds = array<i64: 1, 12, 8, 64>}, {transform_indices = @transform_2, window_bounds = array<i64: 1, 12, 8, 64>}, {transform_indices = @transform_3, window_bounds = array<i64: 1, 12, 4, 8>}, {transform_indices = @transform_4, window_bounds = array<i64: 1, 12, 4, 8>}, {transform_indices = @transform_5, window_bounds = array<i64: 4, 64>}, {transform_indices = @transform_6, window_bounds = array<i64: 1, 64>}, {transform_indices = @transform_7, window_bounds = array<i64: 1, 12, 8, 64>}]} {
    %c0 = arith.constant 0 : index
    %c0_0 = arith.constant 0 : index
    %0 = vector.load %arg7[%c0, %c0_0] : memref<4x64xf32, #tpu.memory_space<vmem>>, vector<4x64xf32>
    %c0_1 = arith.constant 0 : index
    %c0_2 = arith.constant 0 : index
    %1 = vector.load %arg8[%c0_1, %c0_2] : memref<1x64xf32, #tpu.memory_space<vmem>>, vector<1x64xf32>
    %2 = tpu.iota {dimensions = array<i32: 0>} : vector<8x1xi32>
    %cst = arith.constant 0.000000e+00 : f32
    %3 = vector.broadcast %cst : f32 to vector<4x64xf32>
    %c0_i32 = arith.constant 0 : i32
    %c12_i32 = arith.constant 12 : i32
    %4 = arith.addi %c0_i32, %c12_i32 : i32
    %c1_i32 = arith.constant 1 : i32
    %5 = scf.for %arg10 = %c0_i32 to %4 step %c1_i32 iter_args(%arg11 = %3) -> (vector<4x64xf32>)  : i32 {
      %c0_4 = arith.constant 0 : index
      %6 = arith.index_cast %arg10 : i32 to index
      %c0_5 = arith.constant 0 : index
      %c0_6 = arith.constant 0 : index
      %7 = vector.load %arg2[%c0_4, %6, %c0_5, %c0_6] : memref<1x12x8x64xf32, #tpu.memory_space<vmem>>, vector<1x1x8x64xf32>
      %8 = vector.shape_cast %7 : vector<1x1x8x64xf32> to vector<8x64xf32>
      %c0_7 = arith.constant 0 : index
      %9 = arith.index_cast %arg10 : i32 to index
      %c0_8 = arith.constant 0 : index
      %c0_9 = arith.constant 0 : index
      %10 = vector.load %arg3[%c0_7, %9, %c0_8, %c0_9] : memref<1x12x8x64xf32, #tpu.memory_space<vmem>>, vector<1x1x8x64xf32>
      %11 = vector.shape_cast %10 : vector<1x1x8x64xf32> to vector<8x64xf32>
      %c0_10 = arith.constant 0 : index
      %12 = arith.index_cast %arg10 : i32 to index
      %c0_11 = arith.constant 0 : index
      %c0_12 = arith.constant 0 : index
      %13 = vector.load %arg4[%c0_10, %12, %c0_11, %c0_12] : memref<1x12x8x64xf32, #tpu.memory_space<vmem>>, vector<1x1x8x64xf32>
      %14 = vector.shape_cast %13 : vector<1x1x8x64xf32> to vector<8x64xf32>
      %c0_13 = arith.constant 0 : index
      %15 = arith.index_cast %arg10 : i32 to index
      %c0_14 = arith.constant 0 : index
      %c0_15 = arith.constant 0 : index
      %16 = vector.load %arg5[%c0_13, %15, %c0_14, %c0_15] : memref<1x12x4x8xf32, #tpu.memory_space<vmem>>, vector<1x1x4x8xf32>
      %17 = vector.shape_cast %16 : vector<1x1x4x8xf32> to vector<4x8xf32>
      %c0_16 = arith.constant 0 : index
      %18 = arith.index_cast %arg10 : i32 to index
      %c0_17 = arith.constant 0 : index
      %c0_18 = arith.constant 0 : index
      %19 = vector.load %arg6[%c0_16, %18, %c0_17, %c0_18] : memref<1x12x4x8xf32, #tpu.memory_space<vmem>>, vector<1x1x4x8xf32>
      %20 = vector.shape_cast %19 : vector<1x1x4x8xf32> to vector<4x8xf32>
      %cst_19 = arith.constant 0.000000e+00 : f32
      %21 = vector.broadcast %cst_19 : f32 to vector<8x64xf32>
      %22 = vector.extract_strided_slice %11 {offsets = [0, 0], sizes = [1, 64], strides = [1, 1]} : vector<8x64xf32> to vector<1x64xf32>
      %cst_20 = arith.constant 0.000000e+00 : f32
      %23 = vector.broadcast %cst_20 : f32 to vector<1x64xf32>
      %24 = arith.maximumf %22, %23 : vector<1x64xf32>
      %25 = math.absf %22 : vector<1x64xf32>
      %cst_21 = arith.constant 0.000000e+00 : f32
      %26 = vector.broadcast %cst_21 : f32 to vector<1x64xf32>
      %27 = arith.subf %26, %25 : vector<1x64xf32>
      %28 = math.exp %27 : vector<1x64xf32>
      %29 = math.log1p %28 : vector<1x64xf32>
      %30 = arith.addf %24, %29 : vector<1x64xf32>
      %31 = vector.extract_strided_slice %8 {offsets = [0, 0], sizes = [1, 64], strides = [1, 1]} : vector<8x64xf32> to vector<1x64xf32>
      %32 = vector.extract_strided_slice %17 {offsets = [0, 0], sizes = [4, 1], strides = [1, 1]} : vector<4x8xf32> to vector<4x1xf32>
      %33 = vector.extract_strided_slice %20 {offsets = [0, 0], sizes = [4, 1], strides = [1, 1]} : vector<4x8xf32> to vector<4x1xf32>
      %34 = vector.broadcast %30 : vector<1x64xf32> to vector<4x64xf32>
      %35 = arith.mulf %34, %0 : vector<4x64xf32>
      %36 = math.exp %35 : vector<4x64xf32>
      %37 = arith.mulf %36, %arg11 : vector<4x64xf32>
      %38 = arith.mulf %30, %31 : vector<1x64xf32>
      %39 = vector.broadcast %38 : vector<1x64xf32> to vector<4x64xf32>
      %40 = vector.broadcast %32 : vector<4x1xf32> to vector<4x64xf32>
      %41 = arith.mulf %39, %40 : vector<4x64xf32>
      %42 = arith.addf %37, %41 : vector<4x64xf32>
      %43 = vector.broadcast %33 : vector<4x1xf32> to vector<4x64xf32>
      %44 = arith.mulf %43, %42 : vector<4x64xf32>
      %cst_22 = arith.constant dense<0.000000e+00> : vector<64xf32>
      %45 = vector.multi_reduction <add>, %44, %cst_22 [0] : vector<4x64xf32> to vector<64xf32>
      %46 = vector.shape_cast %45 : vector<64xf32> to vector<1x64xf32>
      %47 = arith.mulf %1, %31 : vector<1x64xf32>
      %48 = arith.addf %46, %47 : vector<1x64xf32>
      %49 = vector.extract_strided_slice %14 {offsets = [0, 0], sizes = [1, 64], strides = [1, 1]} : vector<8x64xf32> to vector<1x64xf32>
      %50 = arith.negf %49 : vector<1x64xf32>
      %51 = math.exp %50 : vector<1x64xf32>
      %cst_23 = arith.constant 1.000000e+00 : f32
      %52 = vector.broadcast %cst_23 : f32 to vector<1x64xf32>
      %53 = arith.addf %52, %51 : vector<1x64xf32>
      %54 = arith.divf %52, %53 : vector<1x64xf32>
      %55 = arith.mulf %49, %54 : vector<1x64xf32>
      %56 = arith.mulf %48, %55 : vector<1x64xf32>
      %c0_i32_24 = arith.constant 0 : i32
      %57 = vector.broadcast %c0_i32_24 : i32 to vector<8x1xi32>
      %58 = arith.cmpi eq, %2, %57 : vector<8x1xi32>
      %59 = vector.shape_cast %58 : vector<8x1xi1> to vector<8x1xi1>
      %60 = vector.broadcast %59 : vector<8x1xi1> to vector<8x64xi1>
      %61 = vector.shape_cast %56 : vector<1x64xf32> to vector<1x64xf32>
      %62 = vector.broadcast %61 : vector<1x64xf32> to vector<8x64xf32>
      %63 = arith.select %60, %62, %21 : vector<8x64xi1>, vector<8x64xf32>
      %64 = vector.extract_strided_slice %11 {offsets = [1, 0], sizes = [1, 64], strides = [1, 1]} : vector<8x64xf32> to vector<1x64xf32>
      %cst_25 = arith.constant 0.000000e+00 : f32
      %65 = vector.broadcast %cst_25 : f32 to vector<1x64xf32>
      %66 = arith.maximumf %64, %65 : vector<1x64xf32>
      %67 = math.absf %64 : vector<1x64xf32>
      %cst_26 = arith.constant 0.000000e+00 : f32
      %68 = vector.broadcast %cst_26 : f32 to vector<1x64xf32>
      %69 = arith.subf %68, %67 : vector<1x64xf32>
      %70 = math.exp %69 : vector<1x64xf32>
      %71 = math.log1p %70 : vector<1x64xf32>
      %72 = arith.addf %66, %71 : vector<1x64xf32>
      %73 = vector.extract_strided_slice %8 {offsets = [1, 0], sizes = [1, 64], strides = [1, 1]} : vector<8x64xf32> to vector<1x64xf32>
      %74 = vector.extract_strided_slice %17 {offsets = [0, 1], sizes = [4, 1], strides = [1, 1]} : vector<4x8xf32> to vector<4x1xf32>
      %75 = vector.extract_strided_slice %20 {offsets = [0, 1], sizes = [4, 1], strides = [1, 1]} : vector<4x8xf32> to vector<4x1xf32>
      %76 = vector.broadcast %72 : vector<1x64xf32> to vector<4x64xf32>
      %77 = arith.mulf %76, %0 : vector<4x64xf32>
      %78 = math.exp %77 : vector<4x64xf32>
      %79 = arith.mulf %78, %42 : vector<4x64xf32>
      %80 = arith.mulf %72, %73 : vector<1x64xf32>
      %81 = vector.broadcast %80 : vector<1x64xf32> to vector<4x64xf32>
      %82 = vector.broadcast %74 : vector<4x1xf32> to vector<4x64xf32>
      %83 = arith.mulf %81, %82 : vector<4x64xf32>
      %84 = arith.addf %79, %83 : vector<4x64xf32>
      %85 = vector.broadcast %75 : vector<4x1xf32> to vector<4x64xf32>
      %86 = arith.mulf %85, %84 : vector<4x64xf32>
      %cst_27 = arith.constant dense<0.000000e+00> : vector<64xf32>
      %87 = vector.multi_reduction <add>, %86, %cst_27 [0] : vector<4x64xf32> to vector<64xf32>
      %88 = vector.shape_cast %87 : vector<64xf32> to vector<1x64xf32>
      %89 = arith.mulf %1, %73 : vector<1x64xf32>
      %90 = arith.addf %88, %89 : vector<1x64xf32>
      %91 = vector.extract_strided_slice %14 {offsets = [1, 0], sizes = [1, 64], strides = [1, 1]} : vector<8x64xf32> to vector<1x64xf32>
      %92 = arith.negf %91 : vector<1x64xf32>
      %93 = math.exp %92 : vector<1x64xf32>
      %cst_28 = arith.constant 1.000000e+00 : f32
      %94 = vector.broadcast %cst_28 : f32 to vector<1x64xf32>
      %95 = arith.addf %94, %93 : vector<1x64xf32>
      %96 = arith.divf %94, %95 : vector<1x64xf32>
      %97 = arith.mulf %91, %96 : vector<1x64xf32>
      %98 = arith.mulf %90, %97 : vector<1x64xf32>
      %c1_i32_29 = arith.constant 1 : i32
      %99 = vector.broadcast %c1_i32_29 : i32 to vector<8x1xi32>
      %100 = arith.cmpi eq, %2, %99 : vector<8x1xi32>
      %101 = vector.shape_cast %100 : vector<8x1xi1> to vector<8x1xi1>
      %102 = vector.broadcast %101 : vector<8x1xi1> to vector<8x64xi1>
      %103 = vector.shape_cast %98 : vector<1x64xf32> to vector<1x64xf32>
      %104 = vector.broadcast %103 : vector<1x64xf32> to vector<8x64xf32>
      %105 = arith.select %102, %104, %63 : vector<8x64xi1>, vector<8x64xf32>
      %106 = vector.extract_strided_slice %11 {offsets = [2, 0], sizes = [1, 64], strides = [1, 1]} : vector<8x64xf32> to vector<1x64xf32>
      %cst_30 = arith.constant 0.000000e+00 : f32
      %107 = vector.broadcast %cst_30 : f32 to vector<1x64xf32>
      %108 = arith.maximumf %106, %107 : vector<1x64xf32>
      %109 = math.absf %106 : vector<1x64xf32>
      %cst_31 = arith.constant 0.000000e+00 : f32
      %110 = vector.broadcast %cst_31 : f32 to vector<1x64xf32>
      %111 = arith.subf %110, %109 : vector<1x64xf32>
      %112 = math.exp %111 : vector<1x64xf32>
      %113 = math.log1p %112 : vector<1x64xf32>
      %114 = arith.addf %108, %113 : vector<1x64xf32>
      %115 = vector.extract_strided_slice %8 {offsets = [2, 0], sizes = [1, 64], strides = [1, 1]} : vector<8x64xf32> to vector<1x64xf32>
      %116 = vector.extract_strided_slice %17 {offsets = [0, 2], sizes = [4, 1], strides = [1, 1]} : vector<4x8xf32> to vector<4x1xf32>
      %117 = vector.extract_strided_slice %20 {offsets = [0, 2], sizes = [4, 1], strides = [1, 1]} : vector<4x8xf32> to vector<4x1xf32>
      %118 = vector.broadcast %114 : vector<1x64xf32> to vector<4x64xf32>
      %119 = arith.mulf %118, %0 : vector<4x64xf32>
      %120 = math.exp %119 : vector<4x64xf32>
      %121 = arith.mulf %120, %84 : vector<4x64xf32>
      %122 = arith.mulf %114, %115 : vector<1x64xf32>
      %123 = vector.broadcast %122 : vector<1x64xf32> to vector<4x64xf32>
      %124 = vector.broadcast %116 : vector<4x1xf32> to vector<4x64xf32>
      %125 = arith.mulf %123, %124 : vector<4x64xf32>
      %126 = arith.addf %121, %125 : vector<4x64xf32>
      %127 = vector.broadcast %117 : vector<4x1xf32> to vector<4x64xf32>
      %128 = arith.mulf %127, %126 : vector<4x64xf32>
      %cst_32 = arith.constant dense<0.000000e+00> : vector<64xf32>
      %129 = vector.multi_reduction <add>, %128, %cst_32 [0] : vector<4x64xf32> to vector<64xf32>
      %130 = vector.shape_cast %129 : vector<64xf32> to vector<1x64xf32>
      %131 = arith.mulf %1, %115 : vector<1x64xf32>
      %132 = arith.addf %130, %131 : vector<1x64xf32>
      %133 = vector.extract_strided_slice %14 {offsets = [2, 0], sizes = [1, 64], strides = [1, 1]} : vector<8x64xf32> to vector<1x64xf32>
      %134 = arith.negf %133 : vector<1x64xf32>
      %135 = math.exp %134 : vector<1x64xf32>
      %cst_33 = arith.constant 1.000000e+00 : f32
      %136 = vector.broadcast %cst_33 : f32 to vector<1x64xf32>
      %137 = arith.addf %136, %135 : vector<1x64xf32>
      %138 = arith.divf %136, %137 : vector<1x64xf32>
      %139 = arith.mulf %133, %138 : vector<1x64xf32>
      %140 = arith.mulf %132, %139 : vector<1x64xf32>
      %c2_i32 = arith.constant 2 : i32
      %141 = vector.broadcast %c2_i32 : i32 to vector<8x1xi32>
      %142 = arith.cmpi eq, %2, %141 : vector<8x1xi32>
      %143 = vector.shape_cast %142 : vector<8x1xi1> to vector<8x1xi1>
      %144 = vector.broadcast %143 : vector<8x1xi1> to vector<8x64xi1>
      %145 = vector.shape_cast %140 : vector<1x64xf32> to vector<1x64xf32>
      %146 = vector.broadcast %145 : vector<1x64xf32> to vector<8x64xf32>
      %147 = arith.select %144, %146, %105 : vector<8x64xi1>, vector<8x64xf32>
      %148 = vector.extract_strided_slice %11 {offsets = [3, 0], sizes = [1, 64], strides = [1, 1]} : vector<8x64xf32> to vector<1x64xf32>
      %cst_34 = arith.constant 0.000000e+00 : f32
      %149 = vector.broadcast %cst_34 : f32 to vector<1x64xf32>
      %150 = arith.maximumf %148, %149 : vector<1x64xf32>
      %151 = math.absf %148 : vector<1x64xf32>
      %cst_35 = arith.constant 0.000000e+00 : f32
      %152 = vector.broadcast %cst_35 : f32 to vector<1x64xf32>
      %153 = arith.subf %152, %151 : vector<1x64xf32>
      %154 = math.exp %153 : vector<1x64xf32>
      %155 = math.log1p %154 : vector<1x64xf32>
      %156 = arith.addf %150, %155 : vector<1x64xf32>
      %157 = vector.extract_strided_slice %8 {offsets = [3, 0], sizes = [1, 64], strides = [1, 1]} : vector<8x64xf32> to vector<1x64xf32>
      %158 = vector.extract_strided_slice %17 {offsets = [0, 3], sizes = [4, 1], strides = [1, 1]} : vector<4x8xf32> to vector<4x1xf32>
      %159 = vector.extract_strided_slice %20 {offsets = [0, 3], sizes = [4, 1], strides = [1, 1]} : vector<4x8xf32> to vector<4x1xf32>
      %160 = vector.broadcast %156 : vector<1x64xf32> to vector<4x64xf32>
      %161 = arith.mulf %160, %0 : vector<4x64xf32>
      %162 = math.exp %161 : vector<4x64xf32>
      %163 = arith.mulf %162, %126 : vector<4x64xf32>
      %164 = arith.mulf %156, %157 : vector<1x64xf32>
      %165 = vector.broadcast %164 : vector<1x64xf32> to vector<4x64xf32>
      %166 = vector.broadcast %158 : vector<4x1xf32> to vector<4x64xf32>
      %167 = arith.mulf %165, %166 : vector<4x64xf32>
      %168 = arith.addf %163, %167 : vector<4x64xf32>
      %169 = vector.broadcast %159 : vector<4x1xf32> to vector<4x64xf32>
      %170 = arith.mulf %169, %168 : vector<4x64xf32>
      %cst_36 = arith.constant dense<0.000000e+00> : vector<64xf32>
      %171 = vector.multi_reduction <add>, %170, %cst_36 [0] : vector<4x64xf32> to vector<64xf32>
      %172 = vector.shape_cast %171 : vector<64xf32> to vector<1x64xf32>
      %173 = arith.mulf %1, %157 : vector<1x64xf32>
      %174 = arith.addf %172, %173 : vector<1x64xf32>
      %175 = vector.extract_strided_slice %14 {offsets = [3, 0], sizes = [1, 64], strides = [1, 1]} : vector<8x64xf32> to vector<1x64xf32>
      %176 = arith.negf %175 : vector<1x64xf32>
      %177 = math.exp %176 : vector<1x64xf32>
      %cst_37 = arith.constant 1.000000e+00 : f32
      %178 = vector.broadcast %cst_37 : f32 to vector<1x64xf32>
      %179 = arith.addf %178, %177 : vector<1x64xf32>
      %180 = arith.divf %178, %179 : vector<1x64xf32>
      %181 = arith.mulf %175, %180 : vector<1x64xf32>
      %182 = arith.mulf %174, %181 : vector<1x64xf32>
      %c3_i32 = arith.constant 3 : i32
      %183 = vector.broadcast %c3_i32 : i32 to vector<8x1xi32>
      %184 = arith.cmpi eq, %2, %183 : vector<8x1xi32>
      %185 = vector.shape_cast %184 : vector<8x1xi1> to vector<8x1xi1>
      %186 = vector.broadcast %185 : vector<8x1xi1> to vector<8x64xi1>
      %187 = vector.shape_cast %182 : vector<1x64xf32> to vector<1x64xf32>
      %188 = vector.broadcast %187 : vector<1x64xf32> to vector<8x64xf32>
      %189 = arith.select %186, %188, %147 : vector<8x64xi1>, vector<8x64xf32>
      %190 = vector.extract_strided_slice %11 {offsets = [4, 0], sizes = [1, 64], strides = [1, 1]} : vector<8x64xf32> to vector<1x64xf32>
      %cst_38 = arith.constant 0.000000e+00 : f32
      %191 = vector.broadcast %cst_38 : f32 to vector<1x64xf32>
      %192 = arith.maximumf %190, %191 : vector<1x64xf32>
      %193 = math.absf %190 : vector<1x64xf32>
      %cst_39 = arith.constant 0.000000e+00 : f32
      %194 = vector.broadcast %cst_39 : f32 to vector<1x64xf32>
      %195 = arith.subf %194, %193 : vector<1x64xf32>
      %196 = math.exp %195 : vector<1x64xf32>
      %197 = math.log1p %196 : vector<1x64xf32>
      %198 = arith.addf %192, %197 : vector<1x64xf32>
      %199 = vector.extract_strided_slice %8 {offsets = [4, 0], sizes = [1, 64], strides = [1, 1]} : vector<8x64xf32> to vector<1x64xf32>
      %200 = vector.extract_strided_slice %17 {offsets = [0, 4], sizes = [4, 1], strides = [1, 1]} : vector<4x8xf32> to vector<4x1xf32>
      %201 = vector.extract_strided_slice %20 {offsets = [0, 4], sizes = [4, 1], strides = [1, 1]} : vector<4x8xf32> to vector<4x1xf32>
      %202 = vector.broadcast %198 : vector<1x64xf32> to vector<4x64xf32>
      %203 = arith.mulf %202, %0 : vector<4x64xf32>
      %204 = math.exp %203 : vector<4x64xf32>
      %205 = arith.mulf %204, %168 : vector<4x64xf32>
      %206 = arith.mulf %198, %199 : vector<1x64xf32>
      %207 = vector.broadcast %206 : vector<1x64xf32> to vector<4x64xf32>
      %208 = vector.broadcast %200 : vector<4x1xf32> to vector<4x64xf32>
      %209 = arith.mulf %207, %208 : vector<4x64xf32>
      %210 = arith.addf %205, %209 : vector<4x64xf32>
      %211 = vector.broadcast %201 : vector<4x1xf32> to vector<4x64xf32>
      %212 = arith.mulf %211, %210 : vector<4x64xf32>
      %cst_40 = arith.constant dense<0.000000e+00> : vector<64xf32>
      %213 = vector.multi_reduction <add>, %212, %cst_40 [0] : vector<4x64xf32> to vector<64xf32>
      %214 = vector.shape_cast %213 : vector<64xf32> to vector<1x64xf32>
      %215 = arith.mulf %1, %199 : vector<1x64xf32>
      %216 = arith.addf %214, %215 : vector<1x64xf32>
      %217 = vector.extract_strided_slice %14 {offsets = [4, 0], sizes = [1, 64], strides = [1, 1]} : vector<8x64xf32> to vector<1x64xf32>
      %218 = arith.negf %217 : vector<1x64xf32>
      %219 = math.exp %218 : vector<1x64xf32>
      %cst_41 = arith.constant 1.000000e+00 : f32
      %220 = vector.broadcast %cst_41 : f32 to vector<1x64xf32>
      %221 = arith.addf %220, %219 : vector<1x64xf32>
      %222 = arith.divf %220, %221 : vector<1x64xf32>
      %223 = arith.mulf %217, %222 : vector<1x64xf32>
      %224 = arith.mulf %216, %223 : vector<1x64xf32>
      %c4_i32 = arith.constant 4 : i32
      %225 = vector.broadcast %c4_i32 : i32 to vector<8x1xi32>
      %226 = arith.cmpi eq, %2, %225 : vector<8x1xi32>
      %227 = vector.shape_cast %226 : vector<8x1xi1> to vector<8x1xi1>
      %228 = vector.broadcast %227 : vector<8x1xi1> to vector<8x64xi1>
      %229 = vector.shape_cast %224 : vector<1x64xf32> to vector<1x64xf32>
      %230 = vector.broadcast %229 : vector<1x64xf32> to vector<8x64xf32>
      %231 = arith.select %228, %230, %189 : vector<8x64xi1>, vector<8x64xf32>
      %232 = vector.extract_strided_slice %11 {offsets = [5, 0], sizes = [1, 64], strides = [1, 1]} : vector<8x64xf32> to vector<1x64xf32>
      %cst_42 = arith.constant 0.000000e+00 : f32
      %233 = vector.broadcast %cst_42 : f32 to vector<1x64xf32>
      %234 = arith.maximumf %232, %233 : vector<1x64xf32>
      %235 = math.absf %232 : vector<1x64xf32>
      %cst_43 = arith.constant 0.000000e+00 : f32
      %236 = vector.broadcast %cst_43 : f32 to vector<1x64xf32>
      %237 = arith.subf %236, %235 : vector<1x64xf32>
      %238 = math.exp %237 : vector<1x64xf32>
      %239 = math.log1p %238 : vector<1x64xf32>
      %240 = arith.addf %234, %239 : vector<1x64xf32>
      %241 = vector.extract_strided_slice %8 {offsets = [5, 0], sizes = [1, 64], strides = [1, 1]} : vector<8x64xf32> to vector<1x64xf32>
      %242 = vector.extract_strided_slice %17 {offsets = [0, 5], sizes = [4, 1], strides = [1, 1]} : vector<4x8xf32> to vector<4x1xf32>
      %243 = vector.extract_strided_slice %20 {offsets = [0, 5], sizes = [4, 1], strides = [1, 1]} : vector<4x8xf32> to vector<4x1xf32>
      %244 = vector.broadcast %240 : vector<1x64xf32> to vector<4x64xf32>
      %245 = arith.mulf %244, %0 : vector<4x64xf32>
      %246 = math.exp %245 : vector<4x64xf32>
      %247 = arith.mulf %246, %210 : vector<4x64xf32>
      %248 = arith.mulf %240, %241 : vector<1x64xf32>
      %249 = vector.broadcast %248 : vector<1x64xf32> to vector<4x64xf32>
      %250 = vector.broadcast %242 : vector<4x1xf32> to vector<4x64xf32>
      %251 = arith.mulf %249, %250 : vector<4x64xf32>
      %252 = arith.addf %247, %251 : vector<4x64xf32>
      %253 = vector.broadcast %243 : vector<4x1xf32> to vector<4x64xf32>
      %254 = arith.mulf %253, %252 : vector<4x64xf32>
      %cst_44 = arith.constant dense<0.000000e+00> : vector<64xf32>
      %255 = vector.multi_reduction <add>, %254, %cst_44 [0] : vector<4x64xf32> to vector<64xf32>
      %256 = vector.shape_cast %255 : vector<64xf32> to vector<1x64xf32>
      %257 = arith.mulf %1, %241 : vector<1x64xf32>
      %258 = arith.addf %256, %257 : vector<1x64xf32>
      %259 = vector.extract_strided_slice %14 {offsets = [5, 0], sizes = [1, 64], strides = [1, 1]} : vector<8x64xf32> to vector<1x64xf32>
      %260 = arith.negf %259 : vector<1x64xf32>
      %261 = math.exp %260 : vector<1x64xf32>
      %cst_45 = arith.constant 1.000000e+00 : f32
      %262 = vector.broadcast %cst_45 : f32 to vector<1x64xf32>
      %263 = arith.addf %262, %261 : vector<1x64xf32>
      %264 = arith.divf %262, %263 : vector<1x64xf32>
      %265 = arith.mulf %259, %264 : vector<1x64xf32>
      %266 = arith.mulf %258, %265 : vector<1x64xf32>
      %c5_i32 = arith.constant 5 : i32
      %267 = vector.broadcast %c5_i32 : i32 to vector<8x1xi32>
      %268 = arith.cmpi eq, %2, %267 : vector<8x1xi32>
      %269 = vector.shape_cast %268 : vector<8x1xi1> to vector<8x1xi1>
      %270 = vector.broadcast %269 : vector<8x1xi1> to vector<8x64xi1>
      %271 = vector.shape_cast %266 : vector<1x64xf32> to vector<1x64xf32>
      %272 = vector.broadcast %271 : vector<1x64xf32> to vector<8x64xf32>
      %273 = arith.select %270, %272, %231 : vector<8x64xi1>, vector<8x64xf32>
      %274 = vector.extract_strided_slice %11 {offsets = [6, 0], sizes = [1, 64], strides = [1, 1]} : vector<8x64xf32> to vector<1x64xf32>
      %cst_46 = arith.constant 0.000000e+00 : f32
      %275 = vector.broadcast %cst_46 : f32 to vector<1x64xf32>
      %276 = arith.maximumf %274, %275 : vector<1x64xf32>
      %277 = math.absf %274 : vector<1x64xf32>
      %cst_47 = arith.constant 0.000000e+00 : f32
      %278 = vector.broadcast %cst_47 : f32 to vector<1x64xf32>
      %279 = arith.subf %278, %277 : vector<1x64xf32>
      %280 = math.exp %279 : vector<1x64xf32>
      %281 = math.log1p %280 : vector<1x64xf32>
      %282 = arith.addf %276, %281 : vector<1x64xf32>
      %283 = vector.extract_strided_slice %8 {offsets = [6, 0], sizes = [1, 64], strides = [1, 1]} : vector<8x64xf32> to vector<1x64xf32>
      %284 = vector.extract_strided_slice %17 {offsets = [0, 6], sizes = [4, 1], strides = [1, 1]} : vector<4x8xf32> to vector<4x1xf32>
      %285 = vector.extract_strided_slice %20 {offsets = [0, 6], sizes = [4, 1], strides = [1, 1]} : vector<4x8xf32> to vector<4x1xf32>
      %286 = vector.broadcast %282 : vector<1x64xf32> to vector<4x64xf32>
      %287 = arith.mulf %286, %0 : vector<4x64xf32>
      %288 = math.exp %287 : vector<4x64xf32>
      %289 = arith.mulf %288, %252 : vector<4x64xf32>
      %290 = arith.mulf %282, %283 : vector<1x64xf32>
      %291 = vector.broadcast %290 : vector<1x64xf32> to vector<4x64xf32>
      %292 = vector.broadcast %284 : vector<4x1xf32> to vector<4x64xf32>
      %293 = arith.mulf %291, %292 : vector<4x64xf32>
      %294 = arith.addf %289, %293 : vector<4x64xf32>
      %295 = vector.broadcast %285 : vector<4x1xf32> to vector<4x64xf32>
      %296 = arith.mulf %295, %294 : vector<4x64xf32>
      %cst_48 = arith.constant dense<0.000000e+00> : vector<64xf32>
      %297 = vector.multi_reduction <add>, %296, %cst_48 [0] : vector<4x64xf32> to vector<64xf32>
      %298 = vector.shape_cast %297 : vector<64xf32> to vector<1x64xf32>
      %299 = arith.mulf %1, %283 : vector<1x64xf32>
      %300 = arith.addf %298, %299 : vector<1x64xf32>
      %301 = vector.extract_strided_slice %14 {offsets = [6, 0], sizes = [1, 64], strides = [1, 1]} : vector<8x64xf32> to vector<1x64xf32>
      %302 = arith.negf %301 : vector<1x64xf32>
      %303 = math.exp %302 : vector<1x64xf32>
      %cst_49 = arith.constant 1.000000e+00 : f32
      %304 = vector.broadcast %cst_49 : f32 to vector<1x64xf32>
      %305 = arith.addf %304, %303 : vector<1x64xf32>
      %306 = arith.divf %304, %305 : vector<1x64xf32>
      %307 = arith.mulf %301, %306 : vector<1x64xf32>
      %308 = arith.mulf %300, %307 : vector<1x64xf32>
      %c6_i32 = arith.constant 6 : i32
      %309 = vector.broadcast %c6_i32 : i32 to vector<8x1xi32>
      %310 = arith.cmpi eq, %2, %309 : vector<8x1xi32>
      %311 = vector.shape_cast %310 : vector<8x1xi1> to vector<8x1xi1>
      %312 = vector.broadcast %311 : vector<8x1xi1> to vector<8x64xi1>
      %313 = vector.shape_cast %308 : vector<1x64xf32> to vector<1x64xf32>
      %314 = vector.broadcast %313 : vector<1x64xf32> to vector<8x64xf32>
      %315 = arith.select %312, %314, %273 : vector<8x64xi1>, vector<8x64xf32>
      %316 = vector.extract_strided_slice %11 {offsets = [7, 0], sizes = [1, 64], strides = [1, 1]} : vector<8x64xf32> to vector<1x64xf32>
      %cst_50 = arith.constant 0.000000e+00 : f32
      %317 = vector.broadcast %cst_50 : f32 to vector<1x64xf32>
      %318 = arith.maximumf %316, %317 : vector<1x64xf32>
      %319 = math.absf %316 : vector<1x64xf32>
      %cst_51 = arith.constant 0.000000e+00 : f32
      %320 = vector.broadcast %cst_51 : f32 to vector<1x64xf32>
      %321 = arith.subf %320, %319 : vector<1x64xf32>
      %322 = math.exp %321 : vector<1x64xf32>
      %323 = math.log1p %322 : vector<1x64xf32>
      %324 = arith.addf %318, %323 : vector<1x64xf32>
      %325 = vector.extract_strided_slice %8 {offsets = [7, 0], sizes = [1, 64], strides = [1, 1]} : vector<8x64xf32> to vector<1x64xf32>
      %326 = vector.extract_strided_slice %17 {offsets = [0, 7], sizes = [4, 1], strides = [1, 1]} : vector<4x8xf32> to vector<4x1xf32>
      %327 = vector.extract_strided_slice %20 {offsets = [0, 7], sizes = [4, 1], strides = [1, 1]} : vector<4x8xf32> to vector<4x1xf32>
      %328 = vector.broadcast %324 : vector<1x64xf32> to vector<4x64xf32>
      %329 = arith.mulf %328, %0 : vector<4x64xf32>
      %330 = math.exp %329 : vector<4x64xf32>
      %331 = arith.mulf %330, %294 : vector<4x64xf32>
      %332 = arith.mulf %324, %325 : vector<1x64xf32>
      %333 = vector.broadcast %332 : vector<1x64xf32> to vector<4x64xf32>
      %334 = vector.broadcast %326 : vector<4x1xf32> to vector<4x64xf32>
      %335 = arith.mulf %333, %334 : vector<4x64xf32>
      %336 = arith.addf %331, %335 : vector<4x64xf32>
      %337 = vector.broadcast %327 : vector<4x1xf32> to vector<4x64xf32>
      %338 = arith.mulf %337, %336 : vector<4x64xf32>
      %cst_52 = arith.constant dense<0.000000e+00> : vector<64xf32>
      %339 = vector.multi_reduction <add>, %338, %cst_52 [0] : vector<4x64xf32> to vector<64xf32>
      %340 = vector.shape_cast %339 : vector<64xf32> to vector<1x64xf32>
      %341 = arith.mulf %1, %325 : vector<1x64xf32>
      %342 = arith.addf %340, %341 : vector<1x64xf32>
      %343 = vector.extract_strided_slice %14 {offsets = [7, 0], sizes = [1, 64], strides = [1, 1]} : vector<8x64xf32> to vector<1x64xf32>
      %344 = arith.negf %343 : vector<1x64xf32>
      %345 = math.exp %344 : vector<1x64xf32>
      %cst_53 = arith.constant 1.000000e+00 : f32
      %346 = vector.broadcast %cst_53 : f32 to vector<1x64xf32>
      %347 = arith.addf %346, %345 : vector<1x64xf32>
      %348 = arith.divf %346, %347 : vector<1x64xf32>
      %349 = arith.mulf %343, %348 : vector<1x64xf32>
      %350 = arith.mulf %342, %349 : vector<1x64xf32>
      %c7_i32 = arith.constant 7 : i32
      %351 = vector.broadcast %c7_i32 : i32 to vector<8x1xi32>
      %352 = arith.cmpi eq, %2, %351 : vector<8x1xi32>
      %353 = vector.shape_cast %352 : vector<8x1xi1> to vector<8x1xi1>
      %354 = vector.broadcast %353 : vector<8x1xi1> to vector<8x64xi1>
      %355 = vector.shape_cast %350 : vector<1x64xf32> to vector<1x64xf32>
      %356 = vector.broadcast %355 : vector<1x64xf32> to vector<8x64xf32>
      %357 = arith.select %354, %356, %315 : vector<8x64xi1>, vector<8x64xf32>
      %c0_54 = arith.constant 0 : index
      %358 = arith.index_cast %arg10 : i32 to index
      %c0_55 = arith.constant 0 : index
      %c0_56 = arith.constant 0 : index
      %359 = vector.load %arg9[%c0_54, %358, %c0_55, %c0_56] : memref<1x12x8x64xf32, #tpu.memory_space<vmem>>, vector<1x1x8x64xf32>
      %360 = vector.shape_cast %359 : vector<1x1x8x64xf32> to vector<8x64xf32>
      %361 = vector.shape_cast %357 : vector<8x64xf32> to vector<1x1x8x64xf32>
      tpu.vector_store %arg9[%c0_54, %358, %c0_55, %c0_56], %361 {strides = array<i32>} : memref<1x12x8x64xf32, #tpu.memory_space<vmem>>, vector<1x1x8x64xf32>,
      scf.yield %336 : vector<4x64xf32>
    }
    %c12_i32_3 = arith.constant 12 : i32
    return
  }
  func.func @transform_0(%arg0: i32, %arg1: i32) -> (i32, i32, i32, i32) {
    %c0_i32 = arith.constant 0 : i32
    %c0_i32_0 = arith.constant 0 : i32
    %c0_i32_1 = arith.constant 0 : i32
    return %arg0, %c0_i32, %c0_i32_0, %arg1 : i32, i32, i32, i32
  }
  func.func @transform_1(%arg0: i32, %arg1: i32) -> (i32, i32, i32, i32) {
    %c0_i32 = arith.constant 0 : i32
    %c0_i32_0 = arith.constant 0 : i32
    %c0_i32_1 = arith.constant 0 : i32
    return %arg0, %c0_i32, %c0_i32_0, %arg1 : i32, i32, i32, i32
  }
  func.func @transform_2(%arg0: i32, %arg1: i32) -> (i32, i32, i32, i32) {
    %c0_i32 = arith.constant 0 : i32
    %c0_i32_0 = arith.constant 0 : i32
    %c0_i32_1 = arith.constant 0 : i32
    return %arg0, %c0_i32, %c0_i32_0, %arg1 : i32, i32, i32, i32
  }
  func.func @transform_3(%arg0: i32, %arg1: i32) -> (i32, i32, i32, i32) {
    %c0_i32 = arith.constant 0 : i32
    %c0_i32_0 = arith.constant 0 : i32
    %c0_i32_1 = arith.constant 0 : i32
    %c0_i32_2 = arith.constant 0 : i32
    return %arg0, %c0_i32, %c0_i32_0, %c0_i32_1 : i32, i32, i32, i32
  }
  func.func @transform_4(%arg0: i32, %arg1: i32) -> (i32, i32, i32, i32) {
    %c0_i32 = arith.constant 0 : i32
    %c0_i32_0 = arith.constant 0 : i32
    %c0_i32_1 = arith.constant 0 : i32
    %c0_i32_2 = arith.constant 0 : i32
    return %arg0, %c0_i32, %c0_i32_0, %c0_i32_1 : i32, i32, i32, i32
  }
  func.func @transform_5(%arg0: i32, %arg1: i32) -> (i32, i32) {
    %c0_i32 = arith.constant 0 : i32
    %c0_i32_0 = arith.constant 0 : i32
    return %c0_i32, %arg1 : i32, i32
  }
  func.func @transform_6(%arg0: i32, %arg1: i32) -> (i32, i32) {
    %c0_i32 = arith.constant 0 : i32
    %c0_i32_0 = arith.constant 0 : i32
    return %c0_i32, %arg1 : i32, i32
  }
  func.func @transform_7(%arg0: i32, %arg1: i32) -> (i32, i32, i32, i32) {
    %c0_i32 = arith.constant 0 : i32
    %c0_i32_0 = arith.constant 0 : i32
    %c0_i32_1 = arith.constant 0 : i32
    return %arg0, %c0_i32, %c0_i32_0, %arg1 : i32, i32, i32, i32
  }
}

module attributes {stable_mosaic.version = 11 : i64} {
  func.func @_matmul_kernel(%arg0: i32, %arg1: i32, %arg2: memref<192x64xbf16, #tpu.memory_space<vmem>>, %arg3: memref<64x32xbf16, #tpu.memory_space<vmem>>, %arg4: memref<192x32xf32, #tpu.memory_space<vmem>>) attributes {dimension_semantics = [#tpu.dimension_semantics<parallel>, #tpu.dimension_semantics<parallel>], iteration_bounds = array<i64: 1, 1>, scalar_prefetch = 0 : i64, scratch_operands = 0 : i64, tpu.core_type = #tpu.core_type<tc>, window_params = [{transform_indices = @transform_0, window_bounds = array<i64: 192, 64>}, {transform_indices = @transform_1, window_bounds = array<i64: 64, 32>}, {transform_indices = @transform_2, window_bounds = array<i64: 192, 32>}]} {
    %c0 = arith.constant 0 : index
    %c0_0 = arith.constant 0 : index
    %0 = vector.load %arg2[%c0, %c0_0] : memref<192x64xbf16, #tpu.memory_space<vmem>>, vector<192x64xbf16>
    %c0_1 = arith.constant 0 : index
    %c0_2 = arith.constant 0 : index
    %1 = vector.load %arg3[%c0_1, %c0_2] : memref<64x32xbf16, #tpu.memory_space<vmem>>, vector<64x32xbf16>
    %cst = arith.constant dense<0.000000e+00> : vector<192x32xf32>
    %2 = tpu.matmul %0, %1, %cst {dimension_numbers = #tpu.dot_dimension_numbers<[1], [0], [0], [1], [0, 0, 1, 1], [], []>} : vector<192x64xbf16>, vector<64x32xbf16>, vector<192x32xf32> -> vector<192x32xf32>
    %c0_3 = arith.constant 0 : index
    %c0_4 = arith.constant 0 : index
    %3 = vector.load %arg4[%c0_3, %c0_4] : memref<192x32xf32, #tpu.memory_space<vmem>>, vector<192x32xf32>
    tpu.vector_store %arg4[%c0_3, %c0_4], %2 {strides = array<i32>} : memref<192x32xf32, #tpu.memory_space<vmem>>, vector<192x32xf32>,
    return
  }
  func.func @transform_0(%arg0: i32, %arg1: i32) -> (i32, i32) {
    %c0_i32 = arith.constant 0 : i32
    %c0_i32_0 = arith.constant 0 : i32
    return %arg0, %c0_i32 : i32, i32
  }
  func.func @transform_1(%arg0: i32, %arg1: i32) -> (i32, i32) {
    %c0_i32 = arith.constant 0 : i32
    %c0_i32_0 = arith.constant 0 : i32
    return %c0_i32, %arg1 : i32, i32
  }
  func.func @transform_2(%arg0: i32, %arg1: i32) -> (i32, i32) {
    %c0_i32 = arith.constant 0 : i32
    return %arg0, %arg1 : i32, i32
  }
}

module attributes {stable_mosaic.version = 11 : i64} {
  func.func @_head_kernel(%arg0: i32, %arg1: memref<96x64xbf16, #tpu.memory_space<vmem>>, %arg2: memref<64x32xbf16, #tpu.memory_space<vmem>>, %arg3: memref<1x32xf32, #tpu.memory_space<vmem>>, %arg4: memref<32x128xbf16, #tpu.memory_space<vmem>>, %arg5: memref<1x128xf32, #tpu.memory_space<vmem>>, %arg6: memref<96x128xf32, #tpu.memory_space<vmem>>) attributes {dimension_semantics = [#tpu.dimension_semantics<parallel>], iteration_bounds = array<i64: 1>, scalar_prefetch = 0 : i64, scratch_operands = 0 : i64, tpu.core_type = #tpu.core_type<tc>, window_params = [{transform_indices = @transform_0, window_bounds = array<i64: 96, 64>}, {pipeline_mode = #tpu.pipeline_mode<synchronous>, transform_indices = @transform_1, window_bounds = array<i64: 64, 32>}, {pipeline_mode = #tpu.pipeline_mode<synchronous>, transform_indices = @transform_2, window_bounds = array<i64: 1, 32>}, {pipeline_mode = #tpu.pipeline_mode<synchronous>, transform_indices = @transform_3, window_bounds = array<i64: 32, 128>}, {pipeline_mode = #tpu.pipeline_mode<synchronous>, transform_indices = @transform_4, window_bounds = array<i64: 1, 128>}, {transform_indices = @transform_5, window_bounds = array<i64: 96, 128>}]} {
    %c0 = arith.constant 0 : index
    %c0_0 = arith.constant 0 : index
    %0 = vector.load %arg1[%c0, %c0_0] : memref<96x64xbf16, #tpu.memory_space<vmem>>, vector<96x64xbf16>
    %c0_1 = arith.constant 0 : index
    %c0_2 = arith.constant 0 : index
    %1 = vector.load %arg2[%c0_1, %c0_2] : memref<64x32xbf16, #tpu.memory_space<vmem>>, vector<64x32xbf16>
    %cst = arith.constant dense<0.000000e+00> : vector<96x32xf32>
    %2 = tpu.matmul %0, %1, %cst {dimension_numbers = #tpu.dot_dimension_numbers<[1], [0], [0], [1], [0, 0, 1, 1], [], []>} : vector<96x64xbf16>, vector<64x32xbf16>, vector<96x32xf32> -> vector<96x32xf32>
    %c0_3 = arith.constant 0 : index
    %c0_4 = arith.constant 0 : index
    %3 = vector.load %arg3[%c0_3, %c0_4] : memref<1x32xf32, #tpu.memory_space<vmem>>, vector<1x32xf32>
    %4 = vector.broadcast %3 : vector<1x32xf32> to vector<96x32xf32>
    %5 = arith.addf %2, %4 : vector<96x32xf32>
    %6 = math.tanh %5 : vector<96x32xf32>
    %7 = arith.truncf %6 : vector<96x32xf32> to vector<96x32xbf16>
    %c0_5 = arith.constant 0 : index
    %c0_6 = arith.constant 0 : index
    %8 = vector.load %arg4[%c0_5, %c0_6] : memref<32x128xbf16, #tpu.memory_space<vmem>>, vector<32x128xbf16>
    %cst_7 = arith.constant dense<0.000000e+00> : vector<96x128xf32>
    %9 = tpu.matmul %7, %8, %cst_7 {dimension_numbers = #tpu.dot_dimension_numbers<[1], [0], [0], [1], [0, 0, 1, 1], [], []>} : vector<96x32xbf16>, vector<32x128xbf16>, vector<96x128xf32> -> vector<96x128xf32>
    %c0_8 = arith.constant 0 : index
    %c0_9 = arith.constant 0 : index
    %10 = vector.load %arg5[%c0_8, %c0_9] : memref<1x128xf32, #tpu.memory_space<vmem>>, vector<1x128xf32>
    %11 = vector.broadcast %10 : vector<1x128xf32> to vector<96x128xf32>
    %12 = arith.addf %9, %11 : vector<96x128xf32>
    %c0_10 = arith.constant 0 : index
    %c0_11 = arith.constant 0 : index
    %13 = vector.load %arg6[%c0_10, %c0_11] : memref<96x128xf32, #tpu.memory_space<vmem>>, vector<96x128xf32>
    tpu.vector_store %arg6[%c0_10, %c0_11], %12 {strides = array<i32>} : memref<96x128xf32, #tpu.memory_space<vmem>>, vector<96x128xf32>,
    return
  }
  func.func @transform_0(%arg0: i32) -> (i32, i32) {
    %c0_i32 = arith.constant 0 : i32
    %c0_i32_0 = arith.constant 0 : i32
    return %arg0, %c0_i32 : i32, i32
  }
  func.func @transform_1(%arg0: i32) -> (i32, i32) {
    %c0_i32 = arith.constant 0 : i32
    %c0_i32_0 = arith.constant 0 : i32
    %c0_i32_1 = arith.constant 0 : i32
    return %c0_i32, %c0_i32_0 : i32, i32
  }
  func.func @transform_2(%arg0: i32) -> (i32, i32) {
    %c0_i32 = arith.constant 0 : i32
    %c0_i32_0 = arith.constant 0 : i32
    %c0_i32_1 = arith.constant 0 : i32
    return %c0_i32, %c0_i32_0 : i32, i32
  }
  func.func @transform_3(%arg0: i32) -> (i32, i32) {
    %c0_i32 = arith.constant 0 : i32
    %c0_i32_0 = arith.constant 0 : i32
    %c0_i32_1 = arith.constant 0 : i32
    return %c0_i32, %c0_i32_0 : i32, i32
  }
  func.func @transform_4(%arg0: i32) -> (i32, i32) {
    %c0_i32 = arith.constant 0 : i32
    %c0_i32_0 = arith.constant 0 : i32
    %c0_i32_1 = arith.constant 0 : i32
    return %c0_i32, %c0_i32_0 : i32, i32
  }
  func.func @transform_5(%arg0: i32) -> (i32, i32) {
    %c0_i32 = arith.constant 0 : i32
    %c0_i32_0 = arith.constant 0 : i32
    return %arg0, %c0_i32 : i32, i32
  }
}

</mosaic_0001>

<llo_original>
// kernel: mamba_pose_forward.15
$region0: #{mamba_pose_forward.15}
  #allocation0 [shape = 'u32[]', space=smem, size = 0x4, offset = 0x4, fixed_abs, tag = 'smem constant byte address 0x4 - core index']
  #allocation1 [shape = 'u32[144,128]{1,0:T(1,128)}', space=vmem, size = 0x12000, scoped, tag = 'internal scratch']
  %s0 = inlined_call_operand.vmem [shape: bf16[96,45], index: 0, kind: input, shape index: {}]
  %s1 = inlined_call_operand.vmem [shape: bf16[45,16], index: 1, kind: input, shape index: {}]
  %s2 = inlined_call_operand.vmem [shape: f32[1,16], index: 2, kind: input, shape index: {}]
  %s3 = inlined_call_operand.vmem [shape: f32[96,16], index: 3, kind: output, shape index: {}]
  %s4 = sld [smem:[#allocation0]]
  $region22: #{mamba_pose_forward.15} parent=0
    _
  %s6 = ssub.s32 1, %s4
  %s7 = scalar_select 0, %s6, %s4
  // Predicated region
  $region2: #{mamba_pose_forward.15} parent=0 // pred_check
    _
  $region3: #{mamba_pose_forward.15} parent=0 // pred_check_branch
    %9 = sbr.rel (0) target = $region5
  $region4: #{mamba_pose_forward.15} parent=0 // pred_region
    _
  $region5: #{mamba_pose_forward.15} parent=0 // pred_fallthru
    _
  // Predicated region
  $region6: #{mamba_pose_forward.15} parent=0 // pred_check
    _
  $region7: #{mamba_pose_forward.15} parent=0 // pred_check_branch
    %11 = sbr.rel (0) target = $region9
  $region8: #{mamba_pose_forward.15} parent=0 // pred_region
    _
  $region9: #{mamba_pose_forward.15} parent=0 // pred_fallthru
    _
  // Predicated region
  $region10: #{mamba_pose_forward.15} parent=0 // pred_check
    _
  $region11: #{mamba_pose_forward.15} parent=0 // pred_check_branch
    %13 = sbr.rel (0) target = $region13
  $region12: #{mamba_pose_forward.15} parent=0 // pred_region
    _
  $region13: #{mamba_pose_forward.15} parent=0 // pred_fallthru
    _
  %v15 = vld [vmem:[%s0] sm:$0xf]
  %v16 = vld [vmem:[%s0 + $0x4] sm:$0xf]
  %v17 = vld [vmem:[%s0 + $0x8] sm:$0xf]
  %v18 = vld [vmem:[%s0 + $0xc] sm:$0xf]
  %v19 = vld [vmem:[%s0 + $0x10] sm:$0xf]
  %v20 = vld [vmem:[%s0 + $0x14] sm:$0xf]
  %v21 = vld [vmem:[%s0 + $0x18] sm:$0xf]
  %v22 = vld [vmem:[%s0 + $0x1c] sm:$0xf]
  %v23 = vld [vmem:[%s0 + $0x20] sm:$0xf]
  %v24 = vld [vmem:[%s0 + $0x24] sm:$0xf]
  %v25 = vld [vmem:[%s0 + $0x28] sm:$0xf]
  %v26 = vld [vmem:[%s0 + $0x2c] sm:$0xf]
  %v27 = vld [vmem:[%s1] sm:$0xf]
  %v28 = vld [vmem:[%s1 + $0x4] sm:$0xf]
  %v29 = vld [vmem:[%s1 + $0x8] sm:$0xf]
  %v30 = vld [vmem:[%s1 + $0xc] sm:$0xf]
  %v31 = vld [vmem:[%s1 + $0x10] sm:$0xf]
  %v32 = vld [vmem:[%s1 + $0x14] sm:$0x7]
  %v33 = vld [vmem:[%s2] sm:$0x1]
  %v35 = vlaneseq
  %v36 = vshrl.u32 %v35, 7
  %v37 = vsub.s32 0, %v36
  %v38 = vrot.slane %v33, %v37
  %v52 = vunpack.c.l.b16 %v15
  %v53 = vunpack.c.l.b16 %v16
  %v54 = vunpack.c.l.b16 %v17
  %v55 = vunpack.c.l.b16 %v18
  %v56 = vunpack.c.l.b16 %v19
  %v57 = vunpack.c.l.b16 %v20
  %v58 = vunpack.c.l.b16 %v21
  %v59 = vunpack.c.l.b16 %v22
  %v60 = vunpack.c.l.b16 %v23
  %v61 = vunpack.c.l.b16 %v24
  %v62 = vunpack.c.l.b16 %v25
  %v63 = vunpack.c.l.b16 %v26
  %v64 = vpack.c.b16 %v53, %v52
  %v65 = vpack.c.b16 %v55, %v54
  %v66 = vpack.c.b16 %v57, %v56
  %v67 = vpack.c.b16 %v59, %v58
  %v68 = vpack.c.b16 %v61, %v60
  %v69 = vpack.c.b16 %v63, %v62
  %v76 = vunpack.c.l.b16 %v27
  %v77 = vunpack.c.l.b16 %v28
  %v78 = vunpack.c.l.b16 %v29
  %v79 = vunpack.c.l.b16 %v30
  %v80 = vunpack.c.l.b16 %v31
  %v81 = vunpack.c.l.b16 %v32
  %v82 = vpack.c.b16 %v77, %v76
  %v83 = vpack.c.b16 %v79, %v78
  %v84 = vpack.c.b16 %v81, %v80
  %vm87 = vcmask 367616
  %v89 = vsel %vm87, %v64, 0
  %v92 = vsel %vm87, %v65, 0
  %v95 = vsel %vm87, %v66, 0
  %v98 = vsel %vm87, %v67, 0
  %v101 = vsel %vm87, %v68, 0
  %v104 = vsel %vm87, %v69, 0
  %vm106 = vcmask 1045504
  %vm107 = vcmask 1046528
  %v108 = vsel %vm106, 4294967295, 65535
  %v109 = vsel %vm107, %v108, 0
  %v111 = vand.u32 %v84, %v109
  %113 = vmatprep.subr.bf16.mxu0 0
  %114 = vmatpush1.bf16.msra.mxu0 %v82
  %115 = vmatprep.subr.bf16.mxu0 0
  %116 = vmatpush1.bf16.msra.mxu0 %v83
  %117 = vmatprep.subr.bf16.mxu0 0
  %118 = vmatpush1.bf16.msra.mxu0 %v111
  %119 = vmatprep.subr.bf16.mxu0 0
  %120 = vmatpush1.bf16.msra.mxu0 0
  %121 = vmatprep.subr.bf16.mxu0 0
  %122 = vmatpush1.bf16.msra.mxu0 0
  %123 = vmatprep.subr.bf16.mxu0 0
  %124 = vmatpush1.bf16.msra.mxu0 0
  %125 = vmatprep.subr.bf16.mxu0 0
  %126 = vmatpush1.bf16.msra.mxu0 0
  %127 = vmatprep.subr.bf16.mxu0 0
  %128 = vmatpush1.bf16.msra.mxu0 0
  %129 = vmatprep.subr.bf16.mxu0 0
  %130 = vmatpush1.bf16.msra.mxu0 0
  %131 = vmatprep.subr.bf16.mxu0 0
  %132 = vmatpush1.bf16.msra.mxu0 0
  %133 = vmatprep.subr.bf16.mxu0 0
  %134 = vmatpush1.bf16.msra.mxu0 0
  %135 = vmatprep.subr.bf16.mxu0 0
  %136 = vmatpush1.bf16.msra.mxu0 0
  %137 = vmatprep.subr.bf16.mxu0 0
  %138 = vmatpush1.bf16.msra.mxu0 0
  %139 = vmatprep.subr.bf16.mxu0 0
  %140 = vmatpush1.bf16.msra.mxu0 0
  %141 = vmatprep.subr.bf16.mxu0 0
  %142 = vmatpush1.bf16.msra.mxu0 0
  %143 = vmatprep.subr.bf16.mxu0 0
  %144 = vmatpush1.bf16.msra.mxu0 0
  %145 = vmatprep.mubr.bf16.mxu0 0
  %146 = vmatmul.mubr.bf16.gmra.mrb[0].mxu0 %v89
  %v147 = vpop.f32.mrb[0].mxu0
  %v148 = vadd.f32 %v38, %v147
  %v149 = vpop.f32.mrb[0].mxu0
  %v150 = vpop.f32.mrb[0].mxu0
  %v151 = vadd.f32 %v38, %v150
  %v152 = vpop.f32.mrb[0].mxu0
  %153 = vmatprep.mubr.bf16.mxu0 0
  %154 = vmatmul.mubr.bf16.gmra.mrb[0].mxu0 %v92
  %v155 = vpop.f32.mrb[0].mxu0
  %v156 = vadd.f32 %v38, %v155
  %v157 = vpop.f32.mrb[0].mxu0
  %v158 = vpop.f32.mrb[0].mxu0
  %v159 = vadd.f32 %v38, %v158
  %v160 = vpop.f32.mrb[0].mxu0
  %161 = vmatprep.mubr.bf16.mxu0 0
  %162 = vmatmul.mubr.bf16.gmra.mrb[0].mxu0 %v95
  %v163 = vpop.f32.mrb[0].mxu0
  %v164 = vadd.f32 %v38, %v163
  %v165 = vpop.f32.mrb[0].mxu0
  %v166 = vpop.f32.mrb[0].mxu0
  %v167 = vadd.f32 %v38, %v166
  %v168 = vpop.f32.mrb[0].mxu0
  %169 = vmatprep.mubr.bf16.mxu0 0
  %170 = vmatmul.mubr.bf16.gmra.mrb[0].mxu0 %v98
  %v171 = vpop.f32.mrb[0].mxu0
  %v172 = vadd.f32 %v38, %v171
  %v173 = vpop.f32.mrb[0].mxu0
  %v174 = vpop.f32.mrb[0].mxu0
  %v175 = vadd.f32 %v38, %v174
  %v176 = vpop.f32.mrb[0].mxu0
  %177 = vmatprep.mubr.bf16.mxu0 0
  %178 = vmatmul.mubr.bf16.gmra.mrb[0].mxu0 %v101
  %v179 = vpop.f32.mrb[0].mxu0
  %v180 = vadd.f32 %v38, %v179
  %v181 = vpop.f32.mrb[0].mxu0
  %v182 = vpop.f32.mrb[0].mxu0
  %v183 = vadd.f32 %v38, %v182
  %v184 = vpop.f32.mrb[0].mxu0
  %185 = vmatprep.mubr.bf16.mxu0 0
  %186 = vmatmul.mubr.bf16.gmra.mrb[0].mxu0 %v104
  %v187 = vpop.f32.mrb[0].mxu0
  %v188 = vadd.f32 %v38, %v187
  %v189 = vpop.f32.mrb[0].mxu0
  %v190 = vpop.f32.mrb[0].mxu0
  %v191 = vadd.f32 %v38, %v190
  %v192 = vpop.f32.mrb[0].mxu0
  %193 = vdwg.mxu0
  %vm194 = vcmask 130048
  %195 = vst.msk [vmem:[%s3] sm:$0xff] %vm194, %v148
  %196 = vst.msk [vmem:[%s3 + $0x8] sm:$0xff] %vm194, %v151
  %197 = vst.msk [vmem:[%s3 + $0x10] sm:$0xff] %vm194, %v156
  %198 = vst.msk [vmem:[%s3 + $0x18] sm:$0xff] %vm194, %v159
  %199 = vst.msk [vmem:[%s3 + $0x20] sm:$0xff] %vm194, %v164
  %200 = vst.msk [vmem:[%s3 + $0x28] sm:$0xff] %vm194, %v167
  %201 = vst.msk [vmem:[%s3 + $0x30] sm:$0xff] %vm194, %v172
  %202 = vst.msk [vmem:[%s3 + $0x38] sm:$0xff] %vm194, %v175
  %203 = vst.msk [vmem:[%s3 + $0x40] sm:$0xff] %vm194, %v180
  %204 = vst.msk [vmem:[%s3 + $0x48] sm:$0xff] %vm194, %v183
  %205 = vst.msk [vmem:[%s3 + $0x50] sm:$0xff] %vm194, %v188
  %206 = vst.msk [vmem:[%s3 + $0x58] sm:$0xff] %vm194, %v191
  // Predicated region
  $region14: #{mamba_pose_forward.15} parent=0 // pred_check
    _
  $region15: #{mamba_pose_forward.15} parent=0 // pred_check_branch
    %208 = sbr.rel (0) target = $region17
  $region16: #{mamba_pose_forward.15} parent=0 // pred_region
    _
  $region17: #{mamba_pose_forward.15} parent=0 // pred_fallthru
    _
  // Predicated region
  $region18: #{mamba_pose_forward.15} parent=0 // pred_check
    _
  $region19: #{mamba_pose_forward.15} parent=0 // pred_check_branch
    %210 = sbr.rel (0) target = $region21
  $region20: #{mamba_pose_forward.15} parent=0 // pred_region
    _
  $region21: #{mamba_pose_forward.15} parent=0 // pred_fallthru
    _

// kernel: mamba_pose_forward.16
$region0: #{mamba_pose_forward.16}
  #allocation0 [shape = 'u32[]', space=smem, size = 0x4, offset = 0x4, fixed_abs, tag = 'smem constant byte address 0x4 - core index']
  #allocation1 [shape = 'u32[144,128]{1,0:T(1,128)}', space=vmem, size = 0x12000, scoped, tag = 'internal scratch']
  %s0 = inlined_call_operand.vmem [shape: f32[96,16], index: 0, kind: input, shape index: {}]
  %s1 = inlined_call_operand.vmem [shape: f32[1,16], index: 1, kind: input, shape index: {}]
  %s2 = inlined_call_operand.vmem [shape: f32[1,16], index: 2, kind: input, shape index: {}]
  %s3 = inlined_call_operand.vmem [shape: f32[96,16], index: 3, kind: output, shape index: {}]
  %s4 = sld [smem:[#allocation0]]
  $region22: #{mamba_pose_forward.16} parent=0
    _
  %s6 = ssub.s32 1, %s4
  %s7 = scalar_select 0, %s6, %s4
  // Predicated region
  $region2: #{mamba_pose_forward.16} parent=0 // pred_check
    _
  $region3: #{mamba_pose_forward.16} parent=0 // pred_check_branch
    %9 = sbr.rel (0) target = $region5
  $region4: #{mamba_pose_forward.16} parent=0 // pred_region
    _
  $region5: #{mamba_pose_forward.16} parent=0 // pred_fallthru
    _
  // Predicated region
  $region6: #{mamba_pose_forward.16} parent=0 // pred_check
    _
  $region7: #{mamba_pose_forward.16} parent=0 // pred_check_branch
    %11 = sbr.rel (0) target = $region9
  $region8: #{mamba_pose_forward.16} parent=0 // pred_region
    _
  $region9: #{mamba_pose_forward.16} parent=0 // pred_fallthru
    _
  // Predicated region
  $region10: #{mamba_pose_forward.16} parent=0 // pred_check
    _
  $region11: #{mamba_pose_forward.16} parent=0 // pred_check_branch
    %13 = sbr.rel (0) target = $region13
  $region12: #{mamba_pose_forward.16} parent=0 // pred_region
    _
  $region13: #{mamba_pose_forward.16} parent=0 // pred_fallthru
    _
  %v14 = vld [vmem:[%s0] sm:$0xff]
  %v15 = vld [vmem:[%s0 + $0x8] sm:$0xff]
  %v16 = vld [vmem:[%s0 + $0x10] sm:$0xff]
  %v17 = vld [vmem:[%s0 + $0x18] sm:$0xff]
  %v18 = vld [vmem:[%s0 + $0x20] sm:$0xff]
  %v19 = vld [vmem:[%s0 + $0x28] sm:$0xff]
  %v20 = vld [vmem:[%s0 + $0x30] sm:$0xff]
  %v21 = vld [vmem:[%s0 + $0x38] sm:$0xff]
  %v22 = vld [vmem:[%s0 + $0x40] sm:$0xff]
  %v23 = vld [vmem:[%s0 + $0x48] sm:$0xff]
  %v24 = vld [vmem:[%s0 + $0x50] sm:$0xff]
  %v25 = vld [vmem:[%s0 + $0x58] sm:$0xff]
  %vm26 = vcmask 130048
  %v27 = vsel %vm26, %v14, 0.0
  %28 = vadd.xlane.f32.xlu0 %v27
  %v29 = vpop.xlane.xlu0 %28
  %v30 = vsel %vm26, %v15, 0.0
  %31 = vadd.xlane.f32.xlu0 %v30
  %v32 = vpop.xlane.xlu0 %31
  %v33 = vsel %vm26, %v16, 0.0
  %34 = vadd.xlane.f32.xlu0 %v33
  %v35 = vpop.xlane.xlu0 %34
  %v36 = vsel %vm26, %v17, 0.0
  %37 = vadd.xlane.f32.xlu0 %v36
  %v38 = vpop.xlane.xlu0 %37
  %v39 = vsel %vm26, %v18, 0.0
  %40 = vadd.xlane.f32.xlu0 %v39
  %v41 = vpop.xlane.xlu0 %40
  %v42 = vsel %vm26, %v19, 0.0
  %43 = vadd.xlane.f32.xlu0 %v42
  %v44 = vpop.xlane.xlu0 %43
  %v45 = vsel %vm26, %v20, 0.0
  %46 = vadd.xlane.f32.xlu0 %v45
  %v47 = vpop.xlane.xlu0 %46
  %v48 = vsel %vm26, %v21, 0.0
  %49 = vadd.xlane.f32.xlu0 %v48
  %v50 = vpop.xlane.xlu0 %49
  %v51 = vsel %vm26, %v22, 0.0
  %52 = vadd.xlane.f32.xlu0 %v51
  %v53 = vpop.xlane.xlu0 %52
  %v54 = vsel %vm26, %v23, 0.0
  %55 = vadd.xlane.f32.xlu0 %v54
  %v56 = vpop.xlane.xlu0 %55
  %v57 = vsel %vm26, %v24, 0.0
  %58 = vadd.xlane.f32.xlu0 %v57
  %v59 = vpop.xlane.xlu0 %58
  %v60 = vsel %vm26, %v25, 0.0
  %61 = vadd.xlane.f32.xlu0 %v60
  %v62 = vpop.xlane.xlu0 %61
  %v63 = vrcp.pop 16.0
  %v64 = vmul.f32 %v29, %v63
  %v65 = vmul.f32 %v32, %v63
  %v66 = vmul.f32 %v35, %v63
  %v67 = vmul.f32 %v38, %v63
  %v68 = vmul.f32 %v41, %v63
  %v69 = vmul.f32 %v44, %v63
  %v70 = vmul.f32 %v47, %v63
  %v71 = vmul.f32 %v50, %v63
  %v72 = vmul.f32 %v53, %v63
  %v73 = vmul.f32 %v56, %v63
  %v74 = vmul.f32 %v59, %v63
  %v75 = vmul.f32 %v62, %v63
  %v76 = vsub.f32 %v14, %v64
  %v77 = vsub.f32 %v15, %v65
  %v78 = vsub.f32 %v16, %v66
  %v79 = vsub.f32 %v17, %v67
  %v80 = vsub.f32 %v18, %v68
  %v81 = vsub.f32 %v19, %v69
  %v82 = vsub.f32 %v20, %v70
  %v83 = vsub.f32 %v21, %v71
  %v84 = vsub.f32 %v22, %v72
  %v85 = vsub.f32 %v23, %v73
  %v86 = vsub.f32 %v24, %v74
  %v87 = vsub.f32 %v25, %v75
  %v88 = vmul.f32 %v76, %v76
  %v89 = vmul.f32 %v77, %v77
  %v90 = vmul.f32 %v78, %v78
  %v91 = vmul.f32 %v79, %v79
  %v92 = vmul.f32 %v80, %v80
  %v93 = vmul.f32 %v81, %v81
  %v94 = vmul.f32 %v82, %v82
  %v95 = vmul.f32 %v83, %v83
  %v96 = vmul.f32 %v84, %v84
  %v97 = vmul.f32 %v85, %v85
  %v98 = vmul.f32 %v86, %v86
  %v99 = vmul.f32 %v87, %v87
  %v100 = vsel %vm26, %v88, 0.0
  %101 = vadd.xlane.f32.xlu0 %v100
  %v102 = vpop.xlane.xlu0 %101
  %v103 = vsel %vm26, %v89, 0.0
  %104 = vadd.xlane.f32.xlu0 %v103
  %v105 = vpop.xlane.xlu0 %104
  %v106 = vsel %vm26, %v90, 0.0
  %107 = vadd.xlane.f32.xlu0 %v106
  %v108 = vpop.xlane.xlu0 %107
  %v109 = vsel %vm26, %v91, 0.0
  %110 = vadd.xlane.f32.xlu0 %v109
  %v111 = vpop.xlane.xlu0 %110
  %v112 = vsel %vm26, %v92, 0.0
  %113 = vadd.xlane.f32.xlu0 %v112
  %v114 = vpop.xlane.xlu0 %113
  %v115 = vsel %vm26, %v93, 0.0
  %116 = vadd.xlane.f32.xlu0 %v115
  %v117 = vpop.xlane.xlu0 %116
  %v118 = vsel %vm26, %v94, 0.0
  %119 = vadd.xlane.f32.xlu0 %v118
  %v120 = vpop.xlane.xlu0 %119
  %v121 = vsel %vm26, %v95, 0.0
  %122 = vadd.xlane.f32.xlu0 %v121
  %v123 = vpop.xlane.xlu0 %122
  %v124 = vsel %vm26, %v96, 0.0
  %125 = vadd.xlane.f32.xlu0 %v124
  %v126 = vpop.xlane.xlu0 %125
  %v127 = vsel %vm26, %v97, 0.0
  %128 = vadd.xlane.f32.xlu0 %v127
  %v129 = vpop.xlane.xlu0 %128
  %v130 = vsel %vm26, %v98, 0.0
  %131 = vadd.xlane.f32.xlu0 %v130
  %v132 = vpop.xlane.xlu0 %131
  %v133 = vsel %vm26, %v99, 0.0
  %134 = vadd.xlane.f32.xlu0 %v133
  %v135 = vpop.xlane.xlu0 %134
  %v136 = vmul.f32 %v102, %v63
  %v137 = vmul.f32 %v105, %v63
  %v138 = vmul.f32 %v108, %v63
  %v139 = vmul.f32 %v111, %v63
  %v140 = vmul.f32 %v114, %v63
  %v141 = vmul.f32 %v117, %v63
  %v142 = vmul.f32 %v120, %v63
  %v143 = vmul.f32 %v123, %v63
  %v144 = vmul.f32 %v126, %v63
  %v145 = vmul.f32 %v129, %v63
  %v146 = vmul.f32 %v132, %v63
  %v147 = vmul.f32 %v135, %v63
  %v148 = vadd.f32 %v136, 1e-05
  %v149 = vadd.f32 %v137, 1e-05
  %v150 = vadd.f32 %v138, 1e-05
  %v151 = vadd.f32 %v139, 1e-05
  %v152 = vadd.f32 %v140, 1e-05
  %v153 = vadd.f32 %v141, 1e-05
  %v154 = vadd.f32 %v142, 1e-05
  %v155 = vadd.f32 %v143, 1e-05
  %v156 = vadd.f32 %v144, 1e-05
  %v157 = vadd.f32 %v145, 1e-05
  %v158 = vadd.f32 %v146, 1e-05
  %v159 = vadd.f32 %v147, 1e-05
  %v160 = vrsqrt.pop %v148
  %v161 = vrsqrt.pop %v149
  %v162 = vrsqrt.pop %v150
  %v163 = vrsqrt.pop %v151
  %v164 = vrsqrt.pop %v152
  %v165 = vrsqrt.pop %v153
  %v166 = vrsqrt.pop %v154
  %v167 = vrsqrt.pop %v155
  %v168 = vrsqrt.pop %v156
  %v169 = vrsqrt.pop %v157
  %v170 = vrsqrt.pop %v158
  %v171 = vrsqrt.pop %v159
  %v172 = vmul.f32 %v76, %v160
  %v173 = vmul.f32 %v77, %v161
  %v174 = vmul.f32 %v78, %v162
  %v175 = vmul.f32 %v79, %v163
  %v176 = vmul.f32 %v80, %v164
  %v177 = vmul.f32 %v81, %v165
  %v178 = vmul.f32 %v82, %v166
  %v179 = vmul.f32 %v83, %v167
  %v180 = vmul.f32 %v84, %v168
  %v181 = vmul.f32 %v85, %v169
  %v182 = vmul.f32 %v86, %v170
  %v183 = vmul.f32 %v87, %v171
  %v184 = vld [vmem:[%s1] sm:$0x1]
  %v186 = vlaneseq
  %v187 = vshrl.u32 %v186, 7
  %v188 = vsub.s32 0, %v187
  %v189 = vrot.slane %v184, %v188
  %v191 = vmul.f32 %v172, %v189
  %v192 = vmul.f32 %v173, %v189
  %v193 = vmul.f32 %v174, %v189
  %v194 = vmul.f32 %v175, %v189
  %v195 = vmul.f32 %v176, %v189
  %v196 = vmul.f32 %v177, %v189
  %v197 = vmul.f32 %v178, %v189
  %v198 = vmul.f32 %v179, %v189
  %v199 = vmul.f32 %v180, %v189
  %v200 = vmul.f32 %v181, %v189
  %v201 = vmul.f32 %v182, %v189
  %v202 = vmul.f32 %v183, %v189
  %v203 = vld [vmem:[%s2] sm:$0x1]
  %v205 = vlaneseq
  %v206 = vshrl.u32 %v205, 7
  %v207 = vsub.s32 0, %v206
  %v208 = vrot.slane %v203, %v207
  %v210 = vadd.f32 %v191, %v208
  %v211 = vadd.f32 %v192, %v208
  %v212 = vadd.f32 %v193, %v208
  %v213 = vadd.f32 %v194, %v208
  %v214 = vadd.f32 %v195, %v208
  %v215 = vadd.f32 %v196, %v208
  %v216 = vadd.f32 %v197, %v208
  %v217 = vadd.f32 %v198, %v208
  %v218 = vadd.f32 %v199, %v208
  %v219 = vadd.f32 %v200, %v208
  %v220 = vadd.f32 %v201, %v208
  %v221 = vadd.f32 %v202, %v208
  %v222 = vmul.f32 %v210, 0.5
  %v223 = vmul.f32 %v211, 0.5
  %v224 = vmul.f32 %v212, 0.5
  %v225 = vmul.f32 %v213, 0.5
  %v226 = vmul.f32 %v214, 0.5
  %v227 = vmul.f32 %v215, 0.5
  %v228 = vmul.f32 %v216, 0.5
  %v229 = vmul.f32 %v217, 0.5
  %v230 = vmul.f32 %v218, 0.5
  %v231 = vmul.f32 %v219, 0.5
  %v232 = vmul.f32 %v220, 0.5
  %v233 = vmul.f32 %v221, 0.5
  %v234 = vmul.f32 %v210, 0.70710677
  %v235 = vmul.f32 %v211, 0.70710677
  %v236 = vmul.f32 %v212, 0.70710677
  %v237 = vmul.f32 %v213, 0.70710677
  %v238 = vmul.f32 %v214, 0.70710677
  %v239 = vmul.f32 %v215, 0.70710677
  %v240 = vmul.f32 %v216, 0.70710677
  %v241 = vmul.f32 %v217, 0.70710677
  %v242 = vmul.f32 %v218, 0.70710677
  %v243 = vmul.f32 %v219, 0.70710677
  %v244 = vmul.f32 %v220, 0.70710677
  %v245 = vmul.f32 %v221, 0.70710677
  %v246 = verf.f32.pop %v234
  %v247 = verf.f32.pop %v235
  %v248 = verf.f32.pop %v236
  %v249 = verf.f32.pop %v237
  %v250 = verf.f32.pop %v238
  %v251 = verf.f32.pop %v239
  %v252 = verf.f32.pop %v240
  %v253 = verf.f32.pop %v241
  %v254 = verf.f32.pop %v242
  %v255 = verf.f32.pop %v243
  %v256 = verf.f32.pop %v244
  %v257 = verf.f32.pop %v245
  %v258 = vadd.f32 %v246, 1.0
  %v259 = vadd.f32 %v247, 1.0
  %v260 = vadd.f32 %v248, 1.0
  %v261 = vadd.f32 %v249, 1.0
  %v262 = vadd.f32 %v250, 1.0
  %v263 = vadd.f32 %v251, 1.0
  %v264 = vadd.f32 %v252, 1.0
  %v265 = vadd.f32 %v253, 1.0
  %v266 = vadd.f32 %v254, 1.0
  %v267 = vadd.f32 %v255, 1.0
  %v268 = vadd.f32 %v256, 1.0
  %v269 = vadd.f32 %v257, 1.0
  %v270 = vmul.f32 %v222, %v258
  %v271 = vmul.f32 %v223, %v259
  %v272 = vmul.f32 %v224, %v260
  %v273 = vmul.f32 %v225, %v261
  %v274 = vmul.f32 %v226, %v262
  %v275 = vmul.f32 %v227, %v263
  %v276 = vmul.f32 %v228, %v264
  %v277 = vmul.f32 %v229, %v265
  %v278 = vmul.f32 %v230, %v266
  %v279 = vmul.f32 %v231, %v267
  %v280 = vmul.f32 %v232, %v268
  %v281 = vmul.f32 %v233, %v269
  %282 = vst.msk [vmem:[%s3] sm:$0xff] %vm26, %v270
  %283 = vst.msk [vmem:[%s3 + $0x8] sm:$0xff] %vm26, %v271
  %284 = vst.msk [vmem:[%s3 + $0x10] sm:$0xff] %vm26, %v272
  %285 = vst.msk [vmem:[%s3 + $0x18] sm:$0xff] %vm26, %v273
  %286 = vst.msk [vmem:[%s3 + $0x20] sm:$0xff] %vm26, %v274
  %287 = vst.msk [vmem:[%s3 + $0x28] sm:$0xff] %vm26, %v275
  %288 = vst.msk [vmem:[%s3 + $0x30] sm:$0xff] %vm26, %v276
  %289 = vst.msk [vmem:[%s3 + $0x38] sm:$0xff] %vm26, %v277
  %290 = vst.msk [vmem:[%s3 + $0x40] sm:$0xff] %vm26, %v278
  %291 = vst.msk [vmem:[%s3 + $0x48] sm:$0xff] %vm26, %v279
  %292 = vst.msk [vmem:[%s3 + $0x50] sm:$0xff] %vm26, %v280
  %293 = vst.msk [vmem:[%s3 + $0x58] sm:$0xff] %vm26, %v281
  // Predicated region
  $region14: #{mamba_pose_forward.16} parent=0 // pred_check
    _
  $region15: #{mamba_pose_forward.16} parent=0 // pred_check_branch
    %295 = sbr.rel (0) target = $region17
  $region16: #{mamba_pose_forward.16} parent=0 // pred_region
    _
  $region17: #{mamba_pose_forward.16} parent=0 // pred_fallthru
    _
  // Predicated region
  $region18: #{mamba_pose_forward.16} parent=0 // pred_check
    _
  $region19: #{mamba_pose_forward.16} parent=0 // pred_check_branch
    %297 = sbr.rel (0) target = $region21
  $region20: #{mamba_pose_forward.16} parent=0 // pred_region
    _
  $region21: #{mamba_pose_forward.16} parent=0 // pred_fallthru
    _

// kernel: mamba_pose_forward.17
$region0: #{mamba_pose_forward.17}
  #allocation0 [shape = 'u32[]', space=smem, size = 0x4, offset = 0x4, fixed_abs, tag = 'smem constant byte address 0x4 - core index']
  #allocation1 [shape = 'u32[144,128]{1,0:T(1,128)}', space=vmem, size = 0x12000, scoped, tag = 'internal scratch']
  %s0 = inlined_call_operand.vmem [shape: bf16[96,80], index: 0, kind: input, shape index: {}]
  %s1 = inlined_call_operand.vmem [shape: bf16[80,32], index: 1, kind: input, shape index: {}]
  %s2 = inlined_call_operand.vmem [shape: f32[1,32], index: 2, kind: input, shape index: {}]
  %s3 = inlined_call_operand.vmem [shape: f32[96,32], index: 3, kind: output, shape index: {}]
  %s4 = sld [smem:[#allocation0]]
  $region22: #{mamba_pose_forward.17} parent=0
    _
  %s6 = ssub.s32 1, %s4
  %s7 = scalar_select 0, %s6, %s4
  // Predicated region
  $region2: #{mamba_pose_forward.17} parent=0 // pred_check
    _
  $region3: #{mamba_pose_forward.17} parent=0 // pred_check_branch
    %9 = sbr.rel (0) target = $region5
  $region4: #{mamba_pose_forward.17} parent=0 // pred_region
    _
  $region5: #{mamba_pose_forward.17} parent=0 // pred_fallthru
    _
  // Predicated region
  $region6: #{mamba_pose_forward.17} parent=0 // pred_check
    _
  $region7: #{mamba_pose_forward.17} parent=0 // pred_check_branch
    %11 = sbr.rel (0) target = $region9
  $region8: #{mamba_pose_forward.17} parent=0 // pred_region
    _
  $region9: #{mamba_pose_forward.17} parent=0 // pred_fallthru
    _
  // Predicated region
  $region10: #{mamba_pose_forward.17} parent=0 // pred_check
    _
  $region11: #{mamba_pose_forward.17} parent=0 // pred_check_branch
    %13 = sbr.rel (0) target = $region13
  $region12: #{mamba_pose_forward.17} parent=0 // pred_region
    _
  $region13: #{mamba_pose_forward.17} parent=0 // pred_fallthru
    _
  %v15 = vld [vmem:[%s0] sm:$0xf]
  %v16 = vld [vmem:[%s0 + $0x4] sm:$0xf]
  %v17 = vld [vmem:[%s0 + $0x8] sm:$0xf]
  %v18 = vld [vmem:[%s0 + $0xc] sm:$0xf]
  %v19 = vld [vmem:[%s0 + $0x10] sm:$0xf]
  %v20 = vld [vmem:[%s0 + $0x14] sm:$0xf]
  %v21 = vld [vmem:[%s0 + $0x18] sm:$0xf]
  %v22 = vld [vmem:[%s0 + $0x1c] sm:$0xf]
  %v23 = vld [vmem:[%s0 + $0x20] sm:$0xf]
  %v24 = vld [vmem:[%s0 + $0x24] sm:$0xf]
  %v25 = vld [vmem:[%s0 + $0x28] sm:$0xf]
  %v26 = vld [vmem:[%s0 + $0x2c] sm:$0xf]
  %v27 = vld [vmem:[%s1] sm:$0xf]
  %v28 = vld [vmem:[%s1 + $0x4] sm:$0xf]
  %v29 = vld [vmem:[%s1 + $0x8] sm:$0xf]
  %v30 = vld [vmem:[%s1 + $0xc] sm:$0xf]
  %v31 = vld [vmem:[%s1 + $0x10] sm:$0xf]
  %v32 = vld [vmem:[%s1 + $0x14] sm:$0xf]
  %v33 = vld [vmem:[%s1 + $0x18] sm:$0xf]
  %v34 = vld [vmem:[%s1 + $0x1c] sm:$0xf]
  %v35 = vld [vmem:[%s1 + $0x20] sm:$0xf]
  %v36 = vld [vmem:[%s1 + $0x24] sm:$0xf]
  %v37 = vld [vmem:[%s2] sm:$0x1]
  %v39 = vlaneseq
  %v40 = vshrl.u32 %v39, 7
  %v41 = vsub.s32 0, %v40
  %v42 = vrot.slane %v37, %v41
  %v56 = vunpack.c.l.b16 %v15
  %v57 = vunpack.c.l.b16 %v16
  %v58 = vunpack.c.l.b16 %v17
  %v59 = vunpack.c.l.b16 %v18
  %v60 = vunpack.c.l.b16 %v19
  %v61 = vunpack.c.l.b16 %v20
  %v62 = vunpack.c.l.b16 %v21
  %v63 = vunpack.c.l.b16 %v22
  %v64 = vunpack.c.l.b16 %v23
  %v65 = vunpack.c.l.b16 %v24
  %v66 = vunpack.c.l.b16 %v25
  %v67 = vunpack.c.l.b16 %v26
  %v68 = vpack.c.b16 %v57, %v56
  %v69 = vpack.c.b16 %v59, %v58
  %v70 = vpack.c.b16 %v61, %v60
  %v71 = vpack.c.b16 %v63, %v62
  %v72 = vpack.c.b16 %v65, %v64
  %v73 = vpack.c.b16 %v67, %v66
  %v84 = vunpack.c.l.b16 %v27
  %v85 = vunpack.c.l.b16 %v28
  %v86 = vunpack.c.l.b16 %v29
  %v87 = vunpack.c.l.b16 %v30
  %v88 = vunpack.c.l.b16 %v31
  %v89 = vunpack.c.l.b16 %v32
  %v90 = vunpack.c.l.b16 %v33
  %v91 = vunpack.c.l.b16 %v34
  %v92 = vunpack.c.l.b16 %v35
  %v93 = vunpack.c.l.b16 %v36
  %v94 = vpack.c.b16 %v85, %v84
  %v95 = vpack.c.b16 %v87, %v86
  %v96 = vpack.c.b16 %v89, %v88
  %v97 = vpack.c.b16 %v91, %v90
  %v98 = vpack.c.b16 %v93, %v92
  %vm104 = vcmask 654336
  %v106 = vsel %vm104, %v68, 0
  %v109 = vsel %vm104, %v69, 0
  %v112 = vsel %vm104, %v70, 0
  %v115 = vsel %vm104, %v71, 0
  %v118 = vsel %vm104, %v72, 0
  %v121 = vsel %vm104, %v73, 0
  %123 = vmatprep.subr.bf16.mxu0 0
  %124 = vmatpush1.bf16.msra.mxu0 %v94
  %125 = vmatprep.subr.bf16.mxu0 0
  %126 = vmatpush1.bf16.msra.mxu0 %v95
  %127 = vmatprep.subr.bf16.mxu0 0
  %128 = vmatpush1.bf16.msra.mxu0 %v96
  %129 = vmatprep.subr.bf16.mxu0 0
  %130 = vmatpush1.bf16.msra.mxu0 %v97
  %131 = vmatprep.subr.bf16.mxu0 0
  %132 = vmatpush1.bf16.msra.mxu0 %v98
  %133 = vmatprep.subr.bf16.mxu0 0
  %134 = vmatpush1.bf16.msra.mxu0 0
  %135 = vmatprep.subr.bf16.mxu0 0
  %136 = vmatpush1.bf16.msra.mxu0 0
  %137 = vmatprep.subr.bf16.mxu0 0
  %138 = vmatpush1.bf16.msra.mxu0 0
  %139 = vmatprep.subr.bf16.mxu0 0
  %140 = vmatpush1.bf16.msra.mxu0 0
  %141 = vmatprep.subr.bf16.mxu0 0
  %142 = vmatpush1.bf16.msra.mxu0 0
  %143 = vmatprep.subr.bf16.mxu0 0
  %144 = vmatpush1.bf16.msra.mxu0 0
  %145 = vmatprep.subr.bf16.mxu0 0
  %146 = vmatpush1.bf16.msra.mxu0 0
  %147 = vmatprep.subr.bf16.mxu0 0
  %148 = vmatpush1.bf16.msra.mxu0 0
  %149 = vmatprep.subr.bf16.mxu0 0
  %150 = vmatpush1.bf16.msra.mxu0 0
  %151 = vmatprep.subr.bf16.mxu0 0
  %152 = vmatpush1.bf16.msra.mxu0 0
  %153 = vmatprep.subr.bf16.mxu0 0
  %154 = vmatpush1.bf16.msra.mxu0 0
  %155 = vmatprep.mubr.bf16.mxu0 0
  %156 = vmatmul.mubr.bf16.gmra.mrb[0].mxu0 %v106
  %v157 = vpop.f32.mrb[0].mxu0
  %v158 = vadd.f32 %v42, %v157
  %v159 = vpop.f32.mrb[0].mxu0
  %v160 = vpop.f32.mrb[0].mxu0
  %v161 = vadd.f32 %v42, %v160
  %v162 = vpop.f32.mrb[0].mxu0
  %163 = vmatprep.mubr.bf16.mxu0 0
  %164 = vmatmul.mubr.bf16.gmra.mrb[0].mxu0 %v109
  %v165 = vpop.f32.mrb[0].mxu0
  %v166 = vadd.f32 %v42, %v165
  %v167 = vpop.f32.mrb[0].mxu0
  %v168 = vpop.f32.mrb[0].mxu0
  %v169 = vadd.f32 %v42, %v168
  %v170 = vpop.f32.mrb[0].mxu0
  %171 = vmatprep.mubr.bf16.mxu0 0
  %172 = vmatmul.mubr.bf16.gmra.mrb[0].mxu0 %v112
  %v173 = vpop.f32.mrb[0].mxu0
  %v174 = vadd.f32 %v42, %v173
  %v175 = vpop.f32.mrb[0].mxu0
  %v176 = vpop.f32.mrb[0].mxu0
  %v177 = vadd.f32 %v42, %v176
  %v178 = vpop.f32.mrb[0].mxu0
  %179 = vmatprep.mubr.bf16.mxu0 0
  %180 = vmatmul.mubr.bf16.gmra.mrb[0].mxu0 %v115
  %v181 = vpop.f32.mrb[0].mxu0
  %v182 = vadd.f32 %v42, %v181
  %v183 = vpop.f32.mrb[0].mxu0
  %v184 = vpop.f32.mrb[0].mxu0
  %v185 = vadd.f32 %v42, %v184
  %v186 = vpop.f32.mrb[0].mxu0
  %187 = vmatprep.mubr.bf16.mxu0 0
  %188 = vmatmul.mubr.bf16.gmra.mrb[0].mxu0 %v118
  %v189 = vpop.f32.mrb[0].mxu0
  %v190 = vadd.f32 %v42, %v189
  %v191 = vpop.f32.mrb[0].mxu0
  %v192 = vpop.f32.mrb[0].mxu0
  %v193 = vadd.f32 %v42, %v192
  %v194 = vpop.f32.mrb[0].mxu0
  %195 = vmatprep.mubr.bf16.mxu0 0
  %196 = vmatmul.mubr.bf16.gmra.mrb[0].mxu0 %v121
  %v197 = vpop.f32.mrb[0].mxu0
  %v198 = vadd.f32 %v42, %v197
  %v199 = vpop.f32.mrb[0].mxu0
  %v200 = vpop.f32.mrb[0].mxu0
  %v201 = vadd.f32 %v42, %v200
  %v202 = vpop.f32.mrb[0].mxu0
  %203 = vdwg.mxu0
  %vm204 = vcmask 261120
  %205 = vst.msk [vmem:[%s3] sm:$0xff] %vm204, %v158
  %206 = vst.msk [vmem:[%s3 + $0x8] sm:$0xff] %vm204, %v161
  %207 = vst.msk [vmem:[%s3 + $0x10] sm:$0xff] %vm204, %v166
  %208 = vst.msk [vmem:[%s3 + $0x18] sm:$0xff] %vm204, %v169
  %209 = vst.msk [vmem:[%s3 + $0x20] sm:$0xff] %vm204, %v174
  %210 = vst.msk [vmem:[%s3 + $0x28] sm:$0xff] %vm204, %v177
  %211 = vst.msk [vmem:[%s3 + $0x30] sm:$0xff] %vm204, %v182
  %212 = vst.msk [vmem:[%s3 + $0x38] sm:$0xff] %vm204, %v185
  %213 = vst.msk [vmem:[%s3 + $0x40] sm:$0xff] %vm204, %v190
  %214 = vst.msk [vmem:[%s3 + $0x48] sm:$0xff] %vm204, %v193
  %215 = vst.msk [vmem:[%s3 + $0x50] sm:$0xff] %vm204, %v198
  %216 = vst.msk [vmem:[%s3 + $0x58] sm:$0xff] %vm204, %v201
  // Predicated region
  $region14: #{mamba_pose_forward.17} parent=0 // pred_check
    _
  $region15: #{mamba_pose_forward.17} parent=0 // pred_check_branch
    %218 = sbr.rel (0) target = $region17
  $region16: #{mamba_pose_forward.17} parent=0 // pred_region
    _
  $region17: #{mamba_pose_forward.17} parent=0 // pred_fallthru
    _
  // Predicated region
  $region18: #{mamba_pose_forward.17} parent=0 // pred_check
    _
  $region19: #{mamba_pose_forward.17} parent=0 // pred_check_branch
    %220 = sbr.rel (0) target = $region21
  $region20: #{mamba_pose_forward.17} parent=0 // pred_region
    _
  $region21: #{mamba_pose_forward.17} parent=0 // pred_fallthru
    _

// kernel: mamba_pose_forward.18
$region0: #{mamba_pose_forward.18}
  #allocation0 [shape = 'u32[]', space=smem, size = 0x4, offset = 0x4, fixed_abs, tag = 'smem constant byte address 0x4 - core index']
  #allocation1 [shape = 'u32[144,128]{1,0:T(1,128)}', space=vmem, size = 0x12000, scoped, tag = 'internal scratch']
  %s0 = inlined_call_operand.vmem [shape: f32[96,32], index: 0, kind: input, shape index: {}]
  %s1 = inlined_call_operand.vmem [shape: f32[1,32], index: 1, kind: input, shape index: {}]
  %s2 = inlined_call_operand.vmem [shape: f32[1,32], index: 2, kind: input, shape index: {}]
  %s3 = inlined_call_operand.vmem [shape: f32[96,32], index: 3, kind: output, shape index: {}]
  %s4 = sld [smem:[#allocation0]]
  $region22: #{mamba_pose_forward.18} parent=0
    _
  %s6 = ssub.s32 1, %s4
  %s7 = scalar_select 0, %s6, %s4
  // Predicated region
  $region2: #{mamba_pose_forward.18} parent=0 // pred_check
    _
  $region3: #{mamba_pose_forward.18} parent=0 // pred_check_branch
    %9 = sbr.rel (0) target = $region5
  $region4: #{mamba_pose_forward.18} parent=0 // pred_region
    _
  $region5: #{mamba_pose_forward.18} parent=0 // pred_fallthru
    _
  // Predicated region
  $region6: #{mamba_pose_forward.18} parent=0 // pred_check
    _
  $region7: #{mamba_pose_forward.18} parent=0 // pred_check_branch
    %11 = sbr.rel (0) target = $region9
  $region8: #{mamba_pose_forward.18} parent=0 // pred_region
    _
  $region9: #{mamba_pose_forward.18} parent=0 // pred_fallthru
    _
  // Predicated region
  $region10: #{mamba_pose_forward.18} parent=0 // pred_check
    _
  $region11: #{mamba_pose_forward.18} parent=0 // pred_check_branch
    %13 = sbr.rel (0) target = $region13
  $region12: #{mamba_pose_forward.18} parent=0 // pred_region
    _
  $region13: #{mamba_pose_forward.18} parent=0 // pred_fallthru
    _
  %v14 = vld [vmem:[%s0] sm:$0xff]
  %v15 = vld [vmem:[%s0 + $0x8] sm:$0xff]
  %v16 = vld [vmem:[%s0 + $0x10] sm:$0xff]
  %v17 = vld [vmem:[%s0 + $0x18] sm:$0xff]
  %v18 = vld [vmem:[%s0 + $0x20] sm:$0xff]
  %v19 = vld [vmem:[%s0 + $0x28] sm:$0xff]
  %v20 = vld [vmem:[%s0 + $0x30] sm:$0xff]
  %v21 = vld [vmem:[%s0 + $0x38] sm:$0xff]
  %v22 = vld [vmem:[%s0 + $0x40] sm:$0xff]
  %v23 = vld [vmem:[%s0 + $0x48] sm:$0xff]
  %v24 = vld [vmem:[%s0 + $0x50] sm:$0xff]
  %v25 = vld [vmem:[%s0 + $0x58] sm:$0xff]
  %vm26 = vcmask 261120
  %v27 = vsel %vm26, %v14, 0.0
  %28 = vadd.xlane.f32.xlu0 %v27
  %v29 = vpop.xlane.xlu0 %28
  %v30 = vsel %vm26, %v15, 0.0
  %31 = vadd.xlane.f32.xlu0 %v30
  %v32 = vpop.xlane.xlu0 %31
  %v33 = vsel %vm26, %v16, 0.0
  %34 = vadd.xlane.f32.xlu0 %v33
  %v35 = vpop.xlane.xlu0 %34
  %v36 = vsel %vm26, %v17, 0.0
  %37 = vadd.xlane.f32.xlu0 %v36
  %v38 = vpop.xlane.xlu0 %37
  %v39 = vsel %vm26, %v18, 0.0
  %40 = vadd.xlane.f32.xlu0 %v39
  %v41 = vpop.xlane.xlu0 %40
  %v42 = vsel %vm26, %v19, 0.0
  %43 = vadd.xlane.f32.xlu0 %v42
  %v44 = vpop.xlane.xlu0 %43
  %v45 = vsel %vm26, %v20, 0.0
  %46 = vadd.xlane.f32.xlu0 %v45
  %v47 = vpop.xlane.xlu0 %46
  %v48 = vsel %vm26, %v21, 0.0
  %49 = vadd.xlane.f32.xlu0 %v48
  %v50 = vpop.xlane.xlu0 %49
  %v51 = vsel %vm26, %v22, 0.0
  %52 = vadd.xlane.f32.xlu0 %v51
  %v53 = vpop.xlane.xlu0 %52
  %v54 = vsel %vm26, %v23, 0.0
  %55 = vadd.xlane.f32.xlu0 %v54
  %v56 = vpop.xlane.xlu0 %55
  %v57 = vsel %vm26, %v24, 0.0
  %58 = vadd.xlane.f32.xlu0 %v57
  %v59 = vpop.xlane.xlu0 %58
  %v60 = vsel %vm26, %v25, 0.0
  %61 = vadd.xlane.f32.xlu0 %v60
  %v62 = vpop.xlane.xlu0 %61
  %v63 = vrcp.pop 32.0
  %v64 = vmul.f32 %v29, %v63
  %v65 = vmul.f32 %v32, %v63
  %v66 = vmul.f32 %v35, %v63
  %v67 = vmul.f32 %v38, %v63
  %v68 = vmul.f32 %v41, %v63
  %v69 = vmul.f32 %v44, %v63
  %v70 = vmul.f32 %v47, %v63
  %v71 = vmul.f32 %v50, %v63
  %v72 = vmul.f32 %v53, %v63
  %v73 = vmul.f32 %v56, %v63
  %v74 = vmul.f32 %v59, %v63
  %v75 = vmul.f32 %v62, %v63
  %v76 = vsub.f32 %v14, %v64
  %v77 = vsub.f32 %v15, %v65
  %v78 = vsub.f32 %v16, %v66
  %v79 = vsub.f32 %v17, %v67
  %v80 = vsub.f32 %v18, %v68
  %v81 = vsub.f32 %v19, %v69
  %v82 = vsub.f32 %v20, %v70
  %v83 = vsub.f32 %v21, %v71
  %v84 = vsub.f32 %v22, %v72
  %v85 = vsub.f32 %v23, %v73
  %v86 = vsub.f32 %v24, %v74
  %v87 = vsub.f32 %v25, %v75
  %v88 = vmul.f32 %v76, %v76
  %v89 = vmul.f32 %v77, %v77
  %v90 = vmul.f32 %v78, %v78
  %v91 = vmul.f32 %v79, %v79
  %v92 = vmul.f32 %v80, %v80
  %v93 = vmul.f32 %v81, %v81
  %v94 = vmul.f32 %v82, %v82
  %v95 = vmul.f32 %v83, %v83
  %v96 = vmul.f32 %v84, %v84
  %v97 = vmul.f32 %v85, %v85
  %v98 = vmul.f32 %v86, %v86
  %v99 = vmul.f32 %v87, %v87
  %v100 = vsel %vm26, %v88, 0.0
  %101 = vadd.xlane.f32.xlu0 %v100
  %v102 = vpop.xlane.xlu0 %101
  %v103 = vsel %vm26, %v89, 0.0
  %104 = vadd.xlane.f32.xlu0 %v103
  %v105 = vpop.xlane.xlu0 %104
  %v106 = vsel %vm26, %v90, 0.0
  %107 = vadd.xlane.f32.xlu0 %v106
  %v108 = vpop.xlane.xlu0 %107
  %v109 = vsel %vm26, %v91, 0.0
  %110 = vadd.xlane.f32.xlu0 %v109
  %v111 = vpop.xlane.xlu0 %110
  %v112 = vsel %vm26, %v92, 0.0
  %113 = vadd.xlane.f32.xlu0 %v112
  %v114 = vpop.xlane.xlu0 %113
  %v115 = vsel %vm26, %v93, 0.0
  %116 = vadd.xlane.f32.xlu0 %v115
  %v117 = vpop.xlane.xlu0 %116
  %v118 = vsel %vm26, %v94, 0.0
  %119 = vadd.xlane.f32.xlu0 %v118
  %v120 = vpop.xlane.xlu0 %119
  %v121 = vsel %vm26, %v95, 0.0
  %122 = vadd.xlane.f32.xlu0 %v121
  %v123 = vpop.xlane.xlu0 %122
  %v124 = vsel %vm26, %v96, 0.0
  %125 = vadd.xlane.f32.xlu0 %v124
  %v126 = vpop.xlane.xlu0 %125
  %v127 = vsel %vm26, %v97, 0.0
  %128 = vadd.xlane.f32.xlu0 %v127
  %v129 = vpop.xlane.xlu0 %128
  %v130 = vsel %vm26, %v98, 0.0
  %131 = vadd.xlane.f32.xlu0 %v130
  %v132 = vpop.xlane.xlu0 %131
  %v133 = vsel %vm26, %v99, 0.0
  %134 = vadd.xlane.f32.xlu0 %v133
  %v135 = vpop.xlane.xlu0 %134
  %v136 = vmul.f32 %v102, %v63
  %v137 = vmul.f32 %v105, %v63
  %v138 = vmul.f32 %v108, %v63
  %v139 = vmul.f32 %v111, %v63
  %v140 = vmul.f32 %v114, %v63
  %v141 = vmul.f32 %v117, %v63
  %v142 = vmul.f32 %v120, %v63
  %v143 = vmul.f32 %v123, %v63
  %v144 = vmul.f32 %v126, %v63
  %v145 = vmul.f32 %v129, %v63
  %v146 = vmul.f32 %v132, %v63
  %v147 = vmul.f32 %v135, %v63
  %v148 = vadd.f32 %v136, 1e-05
  %v149 = vadd.f32 %v137, 1e-05
  %v150 = vadd.f32 %v138, 1e-05
  %v151 = vadd.f32 %v139, 1e-05
  %v152 = vadd.f32 %v140, 1e-05
  %v153 = vadd.f32 %v141, 1e-05
  %v154 = vadd.f32 %v142, 1e-05
  %v155 = vadd.f32 %v143, 1e-05
  %v156 = vadd.f32 %v144, 1e-05
  %v157 = vadd.f32 %v145, 1e-05
  %v158 = vadd.f32 %v146, 1e-05
  %v159 = vadd.f32 %v147, 1e-05
  %v160 = vrsqrt.pop %v148
  %v161 = vrsqrt.pop %v149
  %v162 = vrsqrt.pop %v150
  %v163 = vrsqrt.pop %v151
  %v164 = vrsqrt.pop %v152
  %v165 = vrsqrt.pop %v153
  %v166 = vrsqrt.pop %v154
  %v167 = vrsqrt.pop %v155
  %v168 = vrsqrt.pop %v156
  %v169 = vrsqrt.pop %v157
  %v170 = vrsqrt.pop %v158
  %v171 = vrsqrt.pop %v159
  %v172 = vmul.f32 %v76, %v160
  %v173 = vmul.f32 %v77, %v161
  %v174 = vmul.f32 %v78, %v162
  %v175 = vmul.f32 %v79, %v163
  %v176 = vmul.f32 %v80, %v164
  %v177 = vmul.f32 %v81, %v165
  %v178 = vmul.f32 %v82, %v166
  %v179 = vmul.f32 %v83, %v167
  %v180 = vmul.f32 %v84, %v168
  %v181 = vmul.f32 %v85, %v169
  %v182 = vmul.f32 %v86, %v170
  %v183 = vmul.f32 %v87, %v171
  %v184 = vld [vmem:[%s1] sm:$0x1]
  %v186 = vlaneseq
  %v187 = vshrl.u32 %v186, 7
  %v188 = vsub.s32 0, %v187
  %v189 = vrot.slane %v184, %v188
  %v191 = vmul.f32 %v172, %v189
  %v192 = vmul.f32 %v173, %v189
  %v193 = vmul.f32 %v174, %v189
  %v194 = vmul.f32 %v175, %v189
  %v195 = vmul.f32 %v176, %v189
  %v196 = vmul.f32 %v177, %v189
  %v197 = vmul.f32 %v178, %v189
  %v198 = vmul.f32 %v179, %v189
  %v199 = vmul.f32 %v180, %v189
  %v200 = vmul.f32 %v181, %v189
  %v201 = vmul.f32 %v182, %v189
  %v202 = vmul.f32 %v183, %v189
  %v203 = vld [vmem:[%s2] sm:$0x1]
  %v205 = vlaneseq
  %v206 = vshrl.u32 %v205, 7
  %v207 = vsub.s32 0, %v206
  %v208 = vrot.slane %v203, %v207
  %v210 = vadd.f32 %v191, %v208
  %v211 = vadd.f32 %v192, %v208
  %v212 = vadd.f32 %v193, %v208
  %v213 = vadd.f32 %v194, %v208
  %v214 = vadd.f32 %v195, %v208
  %v215 = vadd.f32 %v196, %v208
  %v216 = vadd.f32 %v197, %v208
  %v217 = vadd.f32 %v198, %v208
  %v218 = vadd.f32 %v199, %v208
  %v219 = vadd.f32 %v200, %v208
  %v220 = vadd.f32 %v201, %v208
  %v221 = vadd.f32 %v202, %v208
  %222 = vst.msk [vmem:[%s3] sm:$0xff] %vm26, %v210
  %223 = vst.msk [vmem:[%s3 + $0x8] sm:$0xff] %vm26, %v211
  %224 = vst.msk [vmem:[%s3 + $0x10] sm:$0xff] %vm26, %v212
  %225 = vst.msk [vmem:[%s3 + $0x18] sm:$0xff] %vm26, %v213
  %226 = vst.msk [vmem:[%s3 + $0x20] sm:$0xff] %vm26, %v214
  %227 = vst.msk [vmem:[%s3 + $0x28] sm:$0xff] %vm26, %v215
  %228 = vst.msk [vmem:[%s3 + $0x30] sm:$0xff] %vm26, %v216
  %229 = vst.msk [vmem:[%s3 + $0x38] sm:$0xff] %vm26, %v217
  %230 = vst.msk [vmem:[%s3 + $0x40] sm:$0xff] %vm26, %v218
  %231 = vst.msk [vmem:[%s3 + $0x48] sm:$0xff] %vm26, %v219
  %232 = vst.msk [vmem:[%s3 + $0x50] sm:$0xff] %vm26, %v220
  %233 = vst.msk [vmem:[%s3 + $0x58] sm:$0xff] %vm26, %v221
  // Predicated region
  $region14: #{mamba_pose_forward.18} parent=0 // pred_check
    _
  $region15: #{mamba_pose_forward.18} parent=0 // pred_check_branch
    %235 = sbr.rel (0) target = $region17
  $region16: #{mamba_pose_forward.18} parent=0 // pred_region
    _
  $region17: #{mamba_pose_forward.18} parent=0 // pred_fallthru
    _
  // Predicated region
  $region18: #{mamba_pose_forward.18} parent=0 // pred_check
    _
  $region19: #{mamba_pose_forward.18} parent=0 // pred_check_branch
    %237 = sbr.rel (0) target = $region21
  $region20: #{mamba_pose_forward.18} parent=0 // pred_region
    _
  $region21: #{mamba_pose_forward.18} parent=0 // pred_fallthru
    _

// kernel: mamba_pose_forward.19
$region0: #{mamba_pose_forward.19}
  #allocation0 [shape = 'u32[]', space=smem, size = 0x4, offset = 0x4, fixed_abs, tag = 'smem constant byte address 0x4 - core index']
  #allocation1 [shape = 'u32[144,128]{1,0:T(1,128)}', space=vmem, size = 0x12000, scoped, tag = 'internal scratch']
  %s0 = inlined_call_operand.vmem [shape: bf16[192,32], index: 0, kind: input, shape index: {}]
  %s1 = inlined_call_operand.vmem [shape: bf16[32,128], index: 1, kind: input, shape index: {}]
  %s2 = inlined_call_operand.vmem [shape: f32[192,128], index: 2, kind: output, shape index: {}]
  %s3 = sld [smem:[#allocation0]]
  $region18: #{mamba_pose_forward.19} parent=0
    _
  %s5 = ssub.s32 1, %s3
  %s6 = scalar_select 0, %s5, %s3
  // Predicated region
  $region2: #{mamba_pose_forward.19} parent=0 // pred_check
    _
  $region3: #{mamba_pose_forward.19} parent=0 // pred_check_branch
    %8 = sbr.rel (0) target = $region5
  $region4: #{mamba_pose_forward.19} parent=0 // pred_region
    _
  $region5: #{mamba_pose_forward.19} parent=0 // pred_fallthru
    _
  // Predicated region
  $region6: #{mamba_pose_forward.19} parent=0 // pred_check
    _
  $region7: #{mamba_pose_forward.19} parent=0 // pred_check_branch
    %10 = sbr.rel (0) target = $region9
  $region8: #{mamba_pose_forward.19} parent=0 // pred_region
    _
  $region9: #{mamba_pose_forward.19} parent=0 // pred_fallthru
    _
  %v12 = vld [vmem:[%s0] sm:$0xf]
  %v13 = vld [vmem:[%s0 + $0x4] sm:$0xf]
  %v14 = vld [vmem:[%s0 + $0x8] sm:$0xf]
  %v15 = vld [vmem:[%s0 + $0xc] sm:$0xf]
  %v16 = vld [vmem:[%s0 + $0x10] sm:$0xf]
  %v17 = vld [vmem:[%s0 + $0x14] sm:$0xf]
  %v18 = vld [vmem:[%s0 + $0x18] sm:$0xf]
  %v19 = vld [vmem:[%s0 + $0x1c] sm:$0xf]
  %v20 = vld [vmem:[%s0 + $0x20] sm:$0xf]
  %v21 = vld [vmem:[%s0 + $0x24] sm:$0xf]
  %v22 = vld [vmem:[%s0 + $0x28] sm:$0xf]
  %v23 = vld [vmem:[%s0 + $0x2c] sm:$0xf]
  %v24 = vld [vmem:[%s0 + $0x30] sm:$0xf]
  %v25 = vld [vmem:[%s0 + $0x34] sm:$0xf]
  %v26 = vld [vmem:[%s0 + $0x38] sm:$0xf]
  %v27 = vld [vmem:[%s0 + $0x3c] sm:$0xf]
  %v28 = vld [vmem:[%s0 + $0x40] sm:$0xf]
  %v29 = vld [vmem:[%s0 + $0x44] sm:$0xf]
  %v30 = vld [vmem:[%s0 + $0x48] sm:$0xf]
  %v31 = vld [vmem:[%s0 + $0x4c] sm:$0xf]
  %v32 = vld [vmem:[%s0 + $0x50] sm:$0xf]
  %v33 = vld [vmem:[%s0 + $0x54] sm:$0xf]
  %v34 = vld [vmem:[%s0 + $0x58] sm:$0xf]
  %v35 = vld [vmem:[%s0 + $0x5c] sm:$0xf]
  %v36 = vld [vmem:[%s1] sm:$0xf]
  %v37 = vld [vmem:[%s1 + $0x4] sm:$0xf]
  %v38 = vld [vmem:[%s1 + $0x8] sm:$0xf]
  %v39 = vld [vmem:[%s1 + $0xc] sm:$0xf]
  %v64 = vunpack.c.l.b16 %v12
  %v65 = vunpack.c.l.b16 %v13
  %v66 = vunpack.c.l.b16 %v14
  %v67 = vunpack.c.l.b16 %v15
  %v68 = vunpack.c.l.b16 %v16
  %v69 = vunpack.c.l.b16 %v17
  %v70 = vunpack.c.l.b16 %v18
  %v71 = vunpack.c.l.b16 %v19
  %v72 = vunpack.c.l.b16 %v20
  %v73 = vunpack.c.l.b16 %v21
  %v74 = vunpack.c.l.b16 %v22
  %v75 = vunpack.c.l.b16 %v23
  %v76 = vunpack.c.l.b16 %v24
  %v77 = vunpack.c.l.b16 %v25
  %v78 = vunpack.c.l.b16 %v26
  %v79 = vunpack.c.l.b16 %v27
  %v80 = vunpack.c.l.b16 %v28
  %v81 = vunpack.c.l.b16 %v29
  %v82 = vunpack.c.l.b16 %v30
  %v83 = vunpack.c.l.b16 %v31
  %v84 = vunpack.c.l.b16 %v32
  %v85 = vunpack.c.l.b16 %v33
  %v86 = vunpack.c.l.b16 %v34
  %v87 = vunpack.c.l.b16 %v35
  %v88 = vpack.c.b16 %v65, %v64
  %v89 = vpack.c.b16 %v67, %v66
  %v90 = vpack.c.b16 %v69, %v68
  %v91 = vpack.c.b16 %v71, %v70
  %v92 = vpack.c.b16 %v73, %v72
  %v93 = vpack.c.b16 %v75, %v74
  %v94 = vpack.c.b16 %v77, %v76
  %v95 = vpack.c.b16 %v79, %v78
  %v96 = vpack.c.b16 %v81, %v80
  %v97 = vpack.c.b16 %v83, %v82
  %v98 = vpack.c.b16 %v85, %v84
  %v99 = vpack.c.b16 %v87, %v86
  %v104 = vunpack.c.l.b16 %v36
  %v105 = vunpack.c.l.b16 %v37
  %v106 = vunpack.c.l.b16 %v38
  %v107 = vunpack.c.l.b16 %v39
  %v108 = vpack.c.b16 %v105, %v104
  %v109 = vpack.c.b16 %v107, %v106
  %vm112 = vcmask 261120
  %v114 = vsel %vm112, %v88, 0
  %v117 = vsel %vm112, %v89, 0
  %v120 = vsel %vm112, %v90, 0
  %v123 = vsel %vm112, %v91, 0
  %v126 = vsel %vm112, %v92, 0
  %v129 = vsel %vm112, %v93, 0
  %v132 = vsel %vm112, %v94, 0
  %v135 = vsel %vm112, %v95, 0
  %v138 = vsel %vm112, %v96, 0
  %v141 = vsel %vm112, %v97, 0
  %v144 = vsel %vm112, %v98, 0
  %v147 = vsel %vm112, %v99, 0
  %149 = vmatprep.subr.bf16.mxu0 0
  %150 = vmatpush1.bf16.msra.mxu0 %v108
  %151 = vmatprep.subr.bf16.mxu0 0
  %152 = vmatpush1.bf16.msra.mxu0 %v109
  %153 = vmatprep.subr.bf16.mxu0 0
  %154 = vmatpush1.bf16.msra.mxu0 0
  %155 = vmatprep.subr.bf16.mxu0 0
  %156 = vmatpush1.bf16.msra.mxu0 0
  %157 = vmatprep.subr.bf16.mxu0 0
  %158 = vmatpush1.bf16.msra.mxu0 0
  %159 = vmatprep.subr.bf16.mxu0 0
  %160 = vmatpush1.bf16.msra.mxu0 0
  %161 = vmatprep.subr.bf16.mxu0 0
  %162 = vmatpush1.bf16.msra.mxu0 0
  %163 = vmatprep.subr.bf16.mxu0 0
  %164 = vmatpush1.bf16.msra.mxu0 0
  %165 = vmatprep.subr.bf16.mxu0 0
  %166 = vmatpush1.bf16.msra.mxu0 0
  %167 = vmatprep.subr.bf16.mxu0 0
  %168 = vmatpush1.bf16.msra.mxu0 0
  %169 = vmatprep.subr.bf16.mxu0 0
  %170 = vmatpush1.bf16.msra.mxu0 0
  %171 = vmatprep.subr.bf16.mxu0 0
  %172 = vmatpush1.bf16.msra.mxu0 0
  %173 = vmatprep.subr.bf16.mxu0 0
  %174 = vmatpush1.bf16.msra.mxu0 0
  %175 = vmatprep.subr.bf16.mxu0 0
  %176 = vmatpush1.bf16.msra.mxu0 0
  %177 = vmatprep.subr.bf16.mxu0 0
  %178 = vmatpush1.bf16.msra.mxu0 0
  %179 = vmatprep.subr.bf16.mxu0 0
  %180 = vmatpush1.bf16.msra.mxu0 0
  %181 = vmatprep.mubr.bf16.mxu0 0
  %182 = vmatmul.mubr.bf16.gmra.mrb[0].mxu0 %v114
  %v183 = vpop.f32.mrb[0].mxu0
  %v184 = vadd.f32 0.0, %v183
  %v185 = vpop.f32.mrb[0].mxu0
  %v186 = vpop.f32.mrb[0].mxu0
  %v187 = vadd.f32 0.0, %v186
  %v188 = vpop.f32.mrb[0].mxu0
  %189 = vmatprep.mubr.bf16.mxu0 0
  %190 = vmatmul.mubr.bf16.gmra.mrb[0].mxu0 %v117
  %v191 = vpop.f32.mrb[0].mxu0
  %v192 = vadd.f32 0.0, %v191
  %v193 = vpop.f32.mrb[0].mxu0
  %v194 = vpop.f32.mrb[0].mxu0
  %v195 = vadd.f32 0.0, %v194
  %v196 = vpop.f32.mrb[0].mxu0
  %197 = vmatprep.mubr.bf16.mxu0 0
  %198 = vmatmul.mubr.bf16.gmra.mrb[0].mxu0 %v120
  %v199 = vpop.f32.mrb[0].mxu0
  %v200 = vadd.f32 0.0, %v199
  %v201 = vpop.f32.mrb[0].mxu0
  %v202 = vpop.f32.mrb[0].mxu0
  %v203 = vadd.f32 0.0, %v202
  %v204 = vpop.f32.mrb[0].mxu0
  %205 = vmatprep.mubr.bf16.mxu0 0
  %206 = vmatmul.mubr.bf16.gmra.mrb[0].mxu0 %v123
  %v207 = vpop.f32.mrb[0].mxu0
  %v208 = vadd.f32 0.0, %v207
  %v209 = vpop.f32.mrb[0].mxu0
  %v210 = vpop.f32.mrb[0].mxu0
  %v211 = vadd.f32 0.0, %v210
  %v212 = vpop.f32.mrb[0].mxu0
  %213 = vmatprep.mubr.bf16.mxu0 0
  %214 = vmatmul.mubr.bf16.gmra.mrb[0].mxu0 %v126
  %v215 = vpop.f32.mrb[0].mxu0
  %v216 = vadd.f32 0.0, %v215
  %v217 = vpop.f32.mrb[0].mxu0
  %v218 = vpop.f32.mrb[0].mxu0
  %v219 = vadd.f32 0.0, %v218
  %v220 = vpop.f32.mrb[0].mxu0
  %221 = vmatprep.mubr.bf16.mxu0 0
  %222 = vmatmul.mubr.bf16.gmra.mrb[0].mxu0 %v129
  %v223 = vpop.f32.mrb[0].mxu0
  %v224 = vadd.f32 0.0, %v223
  %v225 = vpop.f32.mrb[0].mxu0
  %v226 = vpop.f32.mrb[0].mxu0
  %v227 = vadd.f32 0.0, %v226
  %v228 = vpop.f32.mrb[0].mxu0
  %229 = vmatprep.mubr.bf16.mxu0 0
  %230 = vmatmul.mubr.bf16.gmra.mrb[0].mxu0 %v132
  %v231 = vpop.f32.mrb[0].mxu0
  %v232 = vadd.f32 0.0, %v231
  %v233 = vpop.f32.mrb[0].mxu0
  %v234 = vpop.f32.mrb[0].mxu0
  %v235 = vadd.f32 0.0, %v234
  %v236 = vpop.f32.mrb[0].mxu0
  %237 = vmatprep.mubr.bf16.mxu0 0
  %238 = vmatmul.mubr.bf16.gmra.mrb[0].mxu0 %v135
  %v239 = vpop.f32.mrb[0].mxu0
  %v240 = vadd.f32 0.0, %v239
  %v241 = vpop.f32.mrb[0].mxu0
  %v242 = vpop.f32.mrb[0].mxu0
  %v243 = vadd.f32 0.0, %v242
  %v244 = vpop.f32.mrb[0].mxu0
  %245 = vmatprep.mubr.bf16.mxu0 0
  %246 = vmatmul.mubr.bf16.gmra.mrb[0].mxu0 %v138
  %v247 = vpop.f32.mrb[0].mxu0
  %v248 = vadd.f32 0.0, %v247
  %v249 = vpop.f32.mrb[0].mxu0
  %v250 = vpop.f32.mrb[0].mxu0
  %v251 = vadd.f32 0.0, %v250
  %v252 = vpop.f32.mrb[0].mxu0
  %253 = vmatprep.mubr.bf16.mxu0 0
  %254 = vmatmul.mubr.bf16.gmra.mrb[0].mxu0 %v141
  %v255 = vpop.f32.mrb[0].mxu0
  %v256 = vadd.f32 0.0, %v255
  %v257 = vpop.f32.mrb[0].mxu0
  %v258 = vpop.f32.mrb[0].mxu0
  %v259 = vadd.f32 0.0, %v258
  %v260 = vpop.f32.mrb[0].mxu0
  %261 = vmatprep.mubr.bf16.mxu0 0
  %262 = vmatmul.mubr.bf16.gmra.mrb[0].mxu0 %v144
  %v263 = vpop.f32.mrb[0].mxu0
  %v264 = vadd.f32 0.0, %v263
  %v265 = vpop.f32.mrb[0].mxu0
  %v266 = vpop.f32.mrb[0].mxu0
  %v267 = vadd.f32 0.0, %v266
  %v268 = vpop.f32.mrb[0].mxu0
  %269 = vmatprep.mubr.bf16.mxu0 0
  %270 = vmatmul.mubr.bf16.gmra.mrb[0].mxu0 %v147
  %v271 = vpop.f32.mrb[0].mxu0
  %v272 = vadd.f32 0.0, %v271
  %v273 = vpop.f32.mrb[0].mxu0
  %v274 = vpop.f32.mrb[0].mxu0
  %v275 = vadd.f32 0.0, %v274
  %v276 = vpop.f32.mrb[0].mxu0
  %277 = vdwg.mxu0
  %278 = vst [vmem:[%s2] sm:$0xff] %v184
  %279 = vst [vmem:[%s2 + $0x8] sm:$0xff] %v187
  %280 = vst [vmem:[%s2 + $0x10] sm:$0xff] %v192
  %281 = vst [vmem:[%s2 + $0x18] sm:$0xff] %v195
  %282 = vst [vmem:[%s2 + $0x20] sm:$0xff] %v200
  %283 = vst [vmem:[%s2 + $0x28] sm:$0xff] %v203
  %284 = vst [vmem:[%s2 + $0x30] sm:$0xff] %v208
  %285 = vst [vmem:[%s2 + $0x38] sm:$0xff] %v211
  %286 = vst [vmem:[%s2 + $0x40] sm:$0xff] %v216
  %287 = vst [vmem:[%s2 + $0x48] sm:$0xff] %v219
  %288 = vst [vmem:[%s2 + $0x50] sm:$0xff] %v224
  %289 = vst [vmem:[%s2 + $0x58] sm:$0xff] %v227
  %290 = vst [vmem:[%s2 + $0x60] sm:$0xff] %v232
  %291 = vst [vmem:[%s2 + $0x68] sm:$0xff] %v235
  %292 = vst [vmem:[%s2 + $0x70] sm:$0xff] %v240
  %293 = vst [vmem:[%s2 + $0x78] sm:$0xff] %v243
  %294 = vst [vmem:[%s2 + $0x80] sm:$0xff] %v248
  %295 = vst [vmem:[%s2 + $0x88] sm:$0xff] %v251
  %296 = vst [vmem:[%s2 + $0x90] sm:$0xff] %v256
  %297 = vst [vmem:[%s2 + $0x98] sm:$0xff] %v259
  %298 = vst [vmem:[%s2 + $0xa0] sm:$0xff] %v264
  %299 = vst [vmem:[%s2 + $0xa8] sm:$0xff] %v267
  %300 = vst [vmem:[%s2 + $0xb0] sm:$0xff] %v272
  %301 = vst [vmem:[%s2 + $0xb8] sm:$0xff] %v275
  // Predicated region
  $region10: #{mamba_pose_forward.19} parent=0 // pred_check
    _
  $region11: #{mamba_pose_forward.19} parent=0 // pred_check_branch
    %303 = sbr.rel (0) target = $region13
  $region12: #{mamba_pose_forward.19} parent=0 // pred_region
    _
  $region13: #{mamba_pose_forward.19} parent=0 // pred_fallthru
    _
  // Predicated region
  $region14: #{mamba_pose_forward.19} parent=0 // pred_check
    _
  $region15: #{mamba_pose_forward.19} parent=0 // pred_check_branch
    %305 = sbr.rel (0) target = $region17
  $region16: #{mamba_pose_forward.19} parent=0 // pred_region
    _
  $region17: #{mamba_pose_forward.19} parent=0 // pred_fallthru
    _

// kernel: mamba_pose_forward.20
$region0: #{mamba_pose_forward.20}
  #allocation0 [shape = 'u32[]', space=smem, size = 0x4, offset = 0x4, fixed_abs, tag = 'smem constant byte address 0x4 - core index']
  #allocation1 [shape = 'u32[144,128]{1,0:T(1,128)}', space=vmem, size = 0x12000, scoped, tag = 'internal scratch']
  %s0 = inlined_call_operand.vmem [shape: f32[2,99,64], index: 0, kind: input, shape index: {}]
  %s1 = inlined_call_operand.vmem [shape: f32[4,64], index: 1, kind: input, shape index: {}]
  %s2 = inlined_call_operand.vmem [shape: f32[1,64], index: 2, kind: input, shape index: {}]
  %s3 = inlined_call_operand.vmem [shape: f32[2,96,64], index: 3, kind: output, shape index: {}]
  %s4 = sld [smem:[#allocation0]]
  $region45: #{mamba_pose_forward.20} parent=0
    _
  %s6 = ssub.s32 1, %s4
  %s7 = scalar_select 0, %s6, %s4
  loop: start=0, step=1, limit=4
  $region2: #{mamba_pose_forward.20} parent=0 // loop_pre_header
    _
  $region3: #{mamba_pose_forward.20} parent=0 // loop_header
    %s9 = sphi 0, %s13
    %p10 = scmp.ge.s32.totalorder %s9, 4
    %s16 = sphi 0, %s28
    %s17 = sphi 0, %s24
    %s18 = sphi 0, %s16
    %s19 = sphi 0, %s17
    %s20 = sphi 0, %s18
    %s21 = sphi 0, %s19
    %s33 = sphi 0, %s35
    %s36 = sphi 0, %s33
    %s37 = sphi 0, %s36
    %s53 = sphi 0, %s37
    %s59 = sphi 0, %s61
    %s62 = sphi 0, %s59
    %s63 = sphi 0, %s62
    %s79 = sphi 0, %s63
    %s85 = sphi 0, %s87
    %s88 = sphi 0, %s85
    %s89 = sphi 0, %s88
    %s105 = sphi 0, %s89
    %s113 = sphi 0, %s115
    %s116 = sphi 0, %s113
    %s117 = sphi 0, %s116
    %s133 = sphi 0, %s117
  $region4: #{mamba_pose_forward.20} parent=0 // loop_header_branch
    %12 = sbr.rel (%p10) target = $region8
  $region5: #{mamba_pose_forward.20} parent=0 // loop_body
    %s14 = ssub.s32 %s9, 1
    %s15 = ssub.s32 %s9, 2
    %s22 = sadd.s32 1, %s17
    %p23 = scmp.ge.s32.totalorder %s22, 1
    %s24 = scalar_select %p23, 0, %s22
    %s25 = sadd.s32 1, %s16
    %s26 = scalar_select %p23, %s25, %s16
    %p27 = scmp.ge.s32.totalorder %s26, 2
    %s28 = scalar_select %p27, 0, %s26
    %s29 = ssub.s32 %s16, %s28
    %s30 = ssub.s32 %s17, %s24
    %s31 = sor.u32 %s29, %s30
    %p32 = scmp.eq.s32.totalorder %s31, 0
    %s34 = sadd.s32 %s33, 1
    %s35 = scalar_select %p32, %s33, %s34
    %p38 = pneg %p32
    %p39 = scmp.eq.s32.totalorder %s9, 1
    %p40 = por %p38, %p39
    %p41 = scmp.ne.s32.totalorder %s33, %s36
    %p42 = scmp.eq.s32.totalorder %s9, 0
    %p43 = por %p41, %p42
    %p44 = scmp.ne.s32.totalorder %s33, %s36
    %p45 = scmp.eq.s32.totalorder %s14, 1
    %p46 = por %p44, %p45
    %p47 = scmp.ne.s32.totalorder %s36, %s37
    %p48 = scmp.eq.s32.totalorder %s14, 0
    %p49 = por %p47, %p48
    %p50 = scmp.ne.s32.totalorder %s36, %s37
    %p51 = scmp.eq.s32.totalorder %s15, 1
    %p52 = por %p50, %p51
    %p54 = scmp.ne.s32.totalorder %s37, %s53
    %p55 = scmp.eq.s32.totalorder %s15, 0
    %p56 = por %p54, %p55
    %s57 = ssub.s32 %s17, %s24
    %p58 = scmp.eq.s32.totalorder %s57, 0
    %s60 = sadd.s32 %s59, 1
    %s61 = scalar_select %p58, %s59, %s60
    %p64 = pneg %p58
    %p65 = scmp.eq.s32.totalorder %s9, 1
    %p66 = por %p64, %p65
    %p67 = scmp.ne.s32.totalorder %s59, %s62
    %p68 = scmp.eq.s32.totalorder %s9, 0
    %p69 = por %p67, %p68
    %p70 = scmp.ne.s32.totalorder %s59, %s62
    %p71 = scmp.eq.s32.totalorder %s14, 1
    %p72 = por %p70, %p71
    %p73 = scmp.ne.s32.totalorder %s62, %s63
    %p74 = scmp.eq.s32.totalorder %s14, 0
    %p75 = por %p73, %p74
    %p76 = scmp.ne.s32.totalorder %s62, %s63
    %p77 = scmp.eq.s32.totalorder %s15, 1
    %p78 = por %p76, %p77
    %p80 = scmp.ne.s32.totalorder %s63, %s79
    %p81 = scmp.eq.s32.totalorder %s15, 0
    %p82 = por %p80, %p81
    %s83 = ssub.s32 %s17, %s24
    %p84 = scmp.eq.s32.totalorder %s83, 0
    %s86 = sadd.s32 %s85, 1
    %s87 = scalar_select %p84, %s85, %s86
    %p90 = pneg %p84
    %p91 = scmp.eq.s32.totalorder %s9, 1
    %p92 = por %p90, %p91
    %p93 = scmp.ne.s32.totalorder %s85, %s88
    %p94 = scmp.eq.s32.totalorder %s9, 0
    %p95 = por %p93, %p94
    %p96 = scmp.ne.s32.totalorder %s85, %s88
    %p97 = scmp.eq.s32.totalorder %s14, 1
    %p98 = por %p96, %p97
    %p99 = scmp.ne.s32.totalorder %s88, %s89
    %p100 = scmp.eq.s32.totalorder %s14, 0
    %p101 = por %p99, %p100
    %p102 = scmp.ne.s32.totalorder %s88, %s89
    %p103 = scmp.eq.s32.totalorder %s15, 1
    %p104 = por %p102, %p103
    %p106 = scmp.ne.s32.totalorder %s89, %s105
    %p107 = scmp.eq.s32.totalorder %s15, 0
    %p108 = por %p106, %p107
    %s109 = ssub.s32 %s16, %s28
    %s110 = ssub.s32 %s17, %s24
    %s111 = sor.u32 %s109, %s110
    %p112 = scmp.eq.s32.totalorder %s111, 0
    %s114 = sadd.s32 %s113, 1
    %s115 = scalar_select %p112, %s113, %s114
    %p118 = pneg %p112
    %p119 = scmp.eq.s32.totalorder %s9, 1
    %p120 = por %p118, %p119
    %p121 = scmp.ne.s32.totalorder %s113, %s116
    %p122 = scmp.eq.s32.totalorder %s9, 0
    %p123 = por %p121, %p122
    %p124 = scmp.ne.s32.totalorder %s113, %s116
    %p125 = scmp.eq.s32.totalorder %s14, 1
    %p126 = por %p124, %p125
    %p127 = scmp.ne.s32.totalorder %s116, %s117
    %p128 = scmp.eq.s32.totalorder %s14, 0
    %p129 = por %p127, %p128
    %p130 = scmp.ne.s32.totalorder %s116, %s117
    %p131 = scmp.eq.s32.totalorder %s15, 1
    %p132 = por %p130, %p131
    %p134 = scmp.ne.s32.totalorder %s117, %s133
    %p135 = scmp.eq.s32.totalorder %s15, 0
    %p136 = por %p134, %p135
    %p137 = scmp.le.s32.totalorder 1, %s9
    %p138 = scmp.lt.s32.totalorder %s9, 3
    %p139 = pnand %p137, %p138
    %p140 = pneg %p139
    // Predicated region
    $region9: #{mamba_pose_forward.20} parent=5 // pred_check
      _
    $region10: #{mamba_pose_forward.20} parent=5 // pred_check_branch
      %142 = sbr.rel (%p139) target = $region12
    $region11: #{mamba_pose_forward.20} parent=5 // pred_region
      %s143 = ssub.s32 %s9, 1
      // Predicated region
      $region13: #{mamba_pose_forward.20} parent=11 // pred_check
        %p144 = pneg %p75
      $region14: #{mamba_pose_forward.20} parent=11 // pred_check_branch
        %146 = sbr.rel (%p144) target = $region16
      $region15: #{mamba_pose_forward.20} parent=11 // pred_region
        %p147 = scmp.lt.s32.totalorder %s19, 0
        %s148 = scalar_select %p147, %s19, 0
        %s149 = smul.addr %s148, 4
        %s150 = scalar_lea.vmem %s1, %s149
      $region16: #{mamba_pose_forward.20} parent=11 // pred_fallthru
        _
      // Predicated region
      $region17: #{mamba_pose_forward.20} parent=11 // pred_check
        %p151 = pneg %p101
      $region18: #{mamba_pose_forward.20} parent=11 // pred_check_branch
        %153 = sbr.rel (%p151) target = $region20
      $region19: #{mamba_pose_forward.20} parent=11 // pred_region
        %p154 = scmp.lt.s32.totalorder %s19, 0
        %s155 = scalar_select %p154, %s19, 0
        %s156 = scalar_lea.vmem %s2, %s155
      $region20: #{mamba_pose_forward.20} parent=11 // pred_fallthru
        _
    $region12: #{mamba_pose_forward.20} parent=5 // pred_fallthru
      _
    %p157 = scmp.lt.s32.totalorder %s9, 2
    // Predicated region
    $region21: #{mamba_pose_forward.20} parent=5 // pred_check
      %p158 = pneg %p157
    $region22: #{mamba_pose_forward.20} parent=5 // pred_check_branch
      %160 = sbr.rel (%p158) target = $region24
    $region23: #{mamba_pose_forward.20} parent=5 // pred_region
      // Predicated region
      $region25: #{mamba_pose_forward.20} parent=23 // pred_check
        %p161 = pneg %p43
      $region26: #{mamba_pose_forward.20} parent=23 // pred_check_branch
        %163 = sbr.rel (%p161) target = $region28
      $region27: #{mamba_pose_forward.20} parent=23 // pred_region
        %p164 = scmp.lt.s32.totalorder %s16, 1
        %s165 = scalar_select %p164, %s16, 1
        %p166 = scmp.lt.s32.totalorder %s17, 0
        %s167 = scalar_select %p166, %s17, 0
        %s168 = smul.addr %s165, 13
        %s169 = sadd.s32 %s167, %s168
        %s170 = smul.addr %s169, 8
        %s171 = scalar_lea.vmem %s0, %s170
      $region28: #{mamba_pose_forward.20} parent=23 // pred_fallthru
        _
    $region24: #{mamba_pose_forward.20} parent=5 // pred_fallthru
      _
    %p172 = scmp.le.s32.totalorder 1, %s9
    %p173 = scmp.lt.s32.totalorder %s9, 3
    %p174 = pnand %p172, %p173
    %p175 = pneg %p174
    // Predicated region
    $region29: #{mamba_pose_forward.20} parent=5 // pred_check
      _
    $region30: #{mamba_pose_forward.20} parent=5 // pred_check_branch
      %177 = sbr.rel (%p174) target = $region32
    $region31: #{mamba_pose_forward.20} parent=5 // pred_region
      %s178 = ssub.s32 %s9, 1
      %p179 = scmp.lt.s32.totalorder %s18, 1
      %s180 = scalar_select %p179, %s18, 1
      %p181 = scmp.lt.s32.totalorder %s19, 0
      %s182 = scalar_select %p181, %s19, 0
      %s183 = smul.addr %s180, 13
      %s184 = sadd.s32 %s182, %s183
      %s185 = smul.addr %s184, 8
      %s186 = scalar_lea.vmem %s0, %s185
      %p187 = pneg %p49
      %p188 = pneg %p46
      %p189 = scmp.lt.s32.totalorder %s19, 0
      %s190 = scalar_select %p189, %s19, 0
      %s191 = smul.addr %s190, 4
      %s192 = scalar_lea.vmem %s1, %s191
      %p193 = pneg %p75
      %p194 = pneg %p72
      %p195 = scmp.lt.s32.totalorder %s19, 0
      %s196 = scalar_select %p195, %s19, 0
      %s197 = scalar_lea.vmem %s2, %s196
      %p198 = pneg %p101
      %p199 = pneg %p98
      %p200 = pneg %p129
      %p201 = pneg %p126
      %p202 = scmp.lt.s32.totalorder %s18, 1
      %s203 = scalar_select %p202, %s18, 1
      %p204 = scmp.lt.s32.totalorder %s19, 0
      %s205 = scalar_select %p204, %s19, 0
      %s206 = smul.addr %s203, 12
      %s207 = sadd.s32 %s205, %s206
      %s208 = smul.addr %s207, 8
      %s209 = scalar_lea.vmem %s3, %s208
      %p210 = scmp.lt.s32.totalorder %s18, 1
      %s211 = scalar_select %p210, %s18, 1
      %p212 = scmp.lt.s32.totalorder %s19, 0
      %s213 = scalar_select %p212, %s19, 0
      %s214 = smul.addr %s211, 13
      %s215 = sadd.s32 %s213, %s214
      %s216 = smul.addr %s215, 8
      %s217 = scalar_lea.vmem %s0, %s216
      %p218 = scmp.lt.s32.totalorder %s19, 0
      %s219 = scalar_select %p218, %s19, 0
      %s220 = smul.addr %s219, 4
      %s221 = scalar_lea.vmem %s1, %s220
      %p222 = scmp.lt.s32.totalorder %s19, 0
      %s223 = scalar_select %p222, %s19, 0
      %s224 = scalar_lea.vmem %s2, %s223
      %p225 = scmp.lt.s32.totalorder %s18, 1
      %s226 = scalar_select %p225, %s18, 1
      %p227 = scmp.lt.s32.totalorder %s19, 0
      %s228 = scalar_select %p227, %s19, 0
      %s229 = smul.addr %s226, 12
      %s230 = sadd.s32 %s228, %s229
      %s231 = smul.addr %s230, 8
      %s232 = scalar_lea.vmem %s3, %s231
      %v233 = vld [vmem:[%s221] sm:$0xf]
      %v234 = vld [vmem:[%s217] sm:$0xff]
      %v235 = vld [vmem:[%s217 + $0x8] sm:$0xff]
      %v236 = vld [vmem:[%s217 + $0x10] sm:$0xff]
      %v237 = vld [vmem:[%s217 + $0x18] sm:$0xff]
      %v238 = vld [vmem:[%s217 + $0x20] sm:$0xff]
      %v239 = vld [vmem:[%s217 + $0x28] sm:$0xff]
      %v240 = vld [vmem:[%s217 + $0x30] sm:$0xff]
      %v241 = vld [vmem:[%s217 + $0x38] sm:$0xff]
      %v242 = vld [vmem:[%s217 + $0x40] sm:$0xff]
      %v243 = vld [vmem:[%s217 + $0x48] sm:$0xff]
      %v244 = vld [vmem:[%s217 + $0x50] sm:$0xff]
      %v245 = vld [vmem:[%s217 + $0x58] sm:$0xff]
      %v246 = vlaneseq
      %v247 = vshrl.u32 %v246, 7
      %v248 = vsub.s32 0, %v247
      %v249 = vrot.slane %v233, %v248
      %v250 = vmul.f32 %v234, %v249
      %v251 = vmul.f32 %v235, %v249
      %v252 = vmul.f32 %v236, %v249
      %v253 = vmul.f32 %v237, %v249
      %v254 = vmul.f32 %v238, %v249
      %v255 = vmul.f32 %v239, %v249
      %v256 = vmul.f32 %v240, %v249
      %v257 = vmul.f32 %v241, %v249
      %v258 = vmul.f32 %v242, %v249
      %v259 = vmul.f32 %v243, %v249
      %v260 = vmul.f32 %v244, %v249
      %v261 = vmul.f32 %v245, %v249
      %v262 = vld [vmem:[%s217 + $0x1] sm:$0xff]
      %v263 = vld [vmem:[%s217 + $0x9] sm:$0xff]
      %v264 = vld [vmem:[%s217 + $0x11] sm:$0xff]
      %v265 = vld [vmem:[%s217 + $0x19] sm:$0xff]
      %v266 = vld [vmem:[%s217 + $0x21] sm:$0xff]
      %v267 = vld [vmem:[%s217 + $0x29] sm:$0xff]
      %v268 = vld [vmem:[%s217 + $0x31] sm:$0xff]
      %v269 = vld [vmem:[%s217 + $0x39] sm:$0xff]
      %v270 = vld [vmem:[%s217 + $0x41] sm:$0xff]
      %v271 = vld [vmem:[%s217 + $0x49] sm:$0xff]
      %v272 = vld [vmem:[%s217 + $0x51] sm:$0xff]
      %v273 = vld [vmem:[%s217 + $0x59] sm:$0xff]
      %v274 = vlaneseq
      %v275 = vshrl.u32 %v274, 7
      %v276 = vsub.s32 1, %v275
      %v277 = vrot.slane %v233, %v276
      %v278 = vmul.f32 %v262, %v277
      %v279 = vmul.f32 %v263, %v277
      %v280 = vmul.f32 %v264, %v277
      %v281 = vmul.f32 %v265, %v277
      %v282 = vmul.f32 %v266, %v277
      %v283 = vmul.f32 %v267, %v277
      %v284 = vmul.f32 %v268, %v277
      %v285 = vmul.f32 %v269, %v277
      %v286 = vmul.f32 %v270, %v277
      %v287 = vmul.f32 %v271, %v277
      %v288 = vmul.f32 %v272, %v277
      %v289 = vmul.f32 %v273, %v277
      %v290 = vadd.f32 %v250, %v278
      %v291 = vadd.f32 %v251, %v279
      %v292 = vadd.f32 %v252, %v280
      %v293 = vadd.f32 %v253, %v281
      %v294 = vadd.f32 %v254, %v282
      %v295 = vadd.f32 %v255, %v283
      %v296 = vadd.f32 %v256, %v284
      %v297 = vadd.f32 %v257, %v285
      %v298 = vadd.f32 %v258, %v286
      %v299 = vadd.f32 %v259, %v287
      %v300 = vadd.f32 %v260, %v288
      %v301 = vadd.f32 %v261, %v289
      %v302 = vld [vmem:[%s217 + $0x2] sm:$0xff]
      %v303 = vld [vmem:[%s217 + $0xa] sm:$0xff]
      %v304 = vld [vmem:[%s217 + $0x12] sm:$0xff]
      %v305 = vld [vmem:[%s217 + $0x1a] sm:$0xff]
      %v306 = vld [vmem:[%s217 + $0x22] sm:$0xff]
      %v307 = vld [vmem:[%s217 + $0x2a] sm:$0xff]
      %v308 = vld [vmem:[%s217 + $0x32] sm:$0xff]
      %v309 = vld [vmem:[%s217 + $0x3a] sm:$0xff]
      %v310 = vld [vmem:[%s217 + $0x42] sm:$0xff]
      %v311 = vld [vmem:[%s217 + $0x4a] sm:$0xff]
      %v312 = vld [vmem:[%s217 + $0x52] sm:$0xff]
      %v313 = vld [vmem:[%s217 + $0x5a] sm:$0xff]
      %v314 = vlaneseq
      %v315 = vshrl.u32 %v314, 7
      %v316 = vsub.s32 2, %v315
      %v317 = vrot.slane %v233, %v316
      %v318 = vmul.f32 %v302, %v317
      %v319 = vmul.f32 %v303, %v317
      %v320 = vmul.f32 %v304, %v317
      %v321 = vmul.f32 %v305, %v317
      %v322 = vmul.f32 %v306, %v317
      %v323 = vmul.f32 %v307, %v317
      %v324 = vmul.f32 %v308, %v317
      %v325 = vmul.f32 %v309, %v317
      %v326 = vmul.f32 %v310, %v317
      %v327 = vmul.f32 %v311, %v317
      %v328 = vmul.f32 %v312, %v317
      %v329 = vmul.f32 %v313, %v317
      %v330 = vadd.f32 %v290, %v318
      %v331 = vadd.f32 %v291, %v319
      %v332 = vadd.f32 %v292, %v320
      %v333 = vadd.f32 %v293, %v321
      %v334 = vadd.f32 %v294, %v322
      %v335 = vadd.f32 %v295, %v323
      %v336 = vadd.f32 %v296, %v324
      %v337 = vadd.f32 %v297, %v325
      %v338 = vadd.f32 %v298, %v326
      %v339 = vadd.f32 %v299, %v327
      %v340 = vadd.f32 %v300, %v328
      %v341 = vadd.f32 %v301, %v329
      %v342 = vld [vmem:[%s217 + $0x3] sm:$0xff]
      %v343 = vld [vmem:[%s217 + $0xb] sm:$0xff]
      %v344 = vld [vmem:[%s217 + $0x13] sm:$0xff]
      %v345 = vld [vmem:[%s217 + $0x1b] sm:$0xff]
      %v346 = vld [vmem:[%s217 + $0x23] sm:$0xff]
      %v347 = vld [vmem:[%s217 + $0x2b] sm:$0xff]
      %v348 = vld [vmem:[%s217 + $0x33] sm:$0xff]
      %v349 = vld [vmem:[%s217 + $0x3b] sm:$0xff]
      %v350 = vld [vmem:[%s217 + $0x43] sm:$0xff]
      %v351 = vld [vmem:[%s217 + $0x4b] sm:$0xff]
      %v352 = vld [vmem:[%s217 + $0x53] sm:$0xff]
      %v353 = vld [vmem:[%s217 + $0x5b] sm:$0xff]
      %v354 = vlaneseq
      %v355 = vshrl.u32 %v354, 7
      %v356 = vsub.s32 3, %v355
      %v357 = vrot.slane %v233, %v356
      %v358 = vmul.f32 %v342, %v357
      %v359 = vmul.f32 %v343, %v357
      %v360 = vmul.f32 %v344, %v357
      %v361 = vmul.f32 %v345, %v357
      %v362 = vmul.f32 %v346, %v357
      %v363 = vmul.f32 %v347, %v357
      %v364 = vmul.f32 %v348, %v357
      %v365 = vmul.f32 %v349, %v357
      %v366 = vmul.f32 %v350, %v357
      %v367 = vmul.f32 %v351, %v357
      %v368 = vmul.f32 %v352, %v357
      %v369 = vmul.f32 %v353, %v357
      %v370 = vadd.f32 %v330, %v358
      %v371 = vadd.f32 %v331, %v359
      %v372 = vadd.f32 %v332, %v360
      %v373 = vadd.f32 %v333, %v361
      %v374 = vadd.f32 %v334, %v362
      %v375 = vadd.f32 %v335, %v363
      %v376 = vadd.f32 %v336, %v364
      %v377 = vadd.f32 %v337, %v365
      %v378 = vadd.f32 %v338, %v366
      %v379 = vadd.f32 %v339, %v367
      %v380 = vadd.f32 %v340, %v368
      %v381 = vadd.f32 %v341, %v369
      %v382 = vld [vmem:[%s224] sm:$0x1]
      %v384 = vlaneseq
      %v385 = vshrl.u32 %v384, 7
      %v386 = vsub.s32 0, %v385
      %v387 = vrot.slane %v382, %v386
      %v389 = vadd.f32 %v370, %v387
      %v390 = vadd.f32 %v371, %v387
      %v391 = vadd.f32 %v372, %v387
      %v392 = vadd.f32 %v373, %v387
      %v393 = vadd.f32 %v374, %v387
      %v394 = vadd.f32 %v375, %v387
      %v395 = vadd.f32 %v376, %v387
      %v396 = vadd.f32 %v377, %v387
      %v397 = vadd.f32 %v378, %v387
      %v398 = vadd.f32 %v379, %v387
      %v399 = vadd.f32 %v380, %v387
      %v400 = vadd.f32 %v381, %v387
      %v401 = vxor.u32 %v389, 2147483648
      %v402 = vxor.u32 %v390, 2147483648
      %v403 = vxor.u32 %v391, 2147483648
      %v404 = vxor.u32 %v392, 2147483648
      %v405 = vxor.u32 %v393, 2147483648
      %v406 = vxor.u32 %v394, 2147483648
      %v407 = vxor.u32 %v395, 2147483648
      %v408 = vxor.u32 %v396, 2147483648
      %v409 = vxor.u32 %v397, 2147483648
      %v410 = vxor.u32 %v398, 2147483648
      %v411 = vxor.u32 %v399, 2147483648
      %v412 = vxor.u32 %v400, 2147483648
      %v413 = vmul.f32 %v401, 1.442695
      %v414 = vpow.pop %v413
      %v415 = vmul.f32 %v402, 1.442695
      %v416 = vpow.pop %v415
      %v417 = vmul.f32 %v403, 1.442695
      %v418 = vpow.pop %v417
      %v419 = vmul.f32 %v404, 1.442695
      %v420 = vpow.pop %v419
      %v421 = vmul.f32 %v405, 1.442695
      %v422 = vpow.pop %v421
      %v423 = vmul.f32 %v406, 1.442695
      %v424 = vpow.pop %v423
      %v425 = vmul.f32 %v407, 1.442695
      %v426 = vpow.pop %v425
      %v427 = vmul.f32 %v408, 1.442695
      %v428 = vpow.pop %v427
      %v429 = vmul.f32 %v409, 1.442695
      %v430 = vpow.pop %v429
      %v431 = vmul.f32 %v410, 1.442695
      %v432 = vpow.pop %v431
      %v433 = vmul.f32 %v411, 1.442695
      %v434 = vpow.pop %v433
      %v435 = vmul.f32 %v412, 1.442695
      %v436 = vpow.pop %v435
      %v437 = vadd.f32 %v414, 1.0
      %v438 = vadd.f32 %v416, 1.0
      %v439 = vadd.f32 %v418, 1.0
      %v440 = vadd.f32 %v420, 1.0
      %v441 = vadd.f32 %v422, 1.0
      %v442 = vadd.f32 %v424, 1.0
      %v443 = vadd.f32 %v426, 1.0
      %v444 = vadd.f32 %v428, 1.0
      %v445 = vadd.f32 %v430, 1.0
      %v446 = vadd.f32 %v432, 1.0
      %v447 = vadd.f32 %v434, 1.0
      %v448 = vadd.f32 %v436, 1.0
      %v449 = vrcp.pop %v437
      %v450 = vmul.f32 1.0, %v449
      %v451 = vrcp.pop %v438
      %v452 = vmul.f32 1.0, %v451
      %v453 = vrcp.pop %v439
      %v454 = vmul.f32 1.0, %v453
      %v455 = vrcp.pop %v440
      %v456 = vmul.f32 1.0, %v455
      %v457 = vrcp.pop %v441
      %v458 = vmul.f32 1.0, %v457
      %v459 = vrcp.pop %v442
      %v460 = vmul.f32 1.0, %v459
      %v461 = vrcp.pop %v443
      %v462 = vmul.f32 1.0, %v461
      %v463 = vrcp.pop %v444
      %v464 = vmul.f32 1.0, %v463
      %v465 = vrcp.pop %v445
      %v466 = vmul.f32 1.0, %v465
      %v467 = vrcp.pop %v446
      %v468 = vmul.f32 1.0, %v467
      %v469 = vrcp.pop %v447
      %v470 = vmul.f32 1.0, %v469
      %v471 = vrcp.pop %v448
      %v472 = vmul.f32 1.0, %v471
      %v473 = vmul.f32 %v389, %v450
      %v474 = vmul.f32 %v390, %v452
      %v475 = vmul.f32 %v391, %v454
      %v476 = vmul.f32 %v392, %v456
      %v477 = vmul.f32 %v393, %v458
      %v478 = vmul.f32 %v394, %v460
      %v479 = vmul.f32 %v395, %v462
      %v480 = vmul.f32 %v396, %v464
      %v481 = vmul.f32 %v397, %v466
      %v482 = vmul.f32 %v398, %v468
      %v483 = vmul.f32 %v399, %v470
      %v484 = vmul.f32 %v400, %v472
      %vm485 = vcmask 523264
      %486 = vst.msk [vmem:[%s232] sm:$0xff] %vm485, %v473
      %487 = vst.msk [vmem:[%s232 + $0x8] sm:$0xff] %vm485, %v474
      %488 = vst.msk [vmem:[%s232 + $0x10] sm:$0xff] %vm485, %v475
      %489 = vst.msk [vmem:[%s232 + $0x18] sm:$0xff] %vm485, %v476
      %490 = vst.msk [vmem:[%s232 + $0x20] sm:$0xff] %vm485, %v477
      %491 = vst.msk [vmem:[%s232 + $0x28] sm:$0xff] %vm485, %v478
      %492 = vst.msk [vmem:[%s232 + $0x30] sm:$0xff] %vm485, %v479
      %493 = vst.msk [vmem:[%s232 + $0x38] sm:$0xff] %vm485, %v480
      %494 = vst.msk [vmem:[%s232 + $0x40] sm:$0xff] %vm485, %v481
      %495 = vst.msk [vmem:[%s232 + $0x48] sm:$0xff] %vm485, %v482
      %496 = vst.msk [vmem:[%s232 + $0x50] sm:$0xff] %vm485, %v483
      %497 = vst.msk [vmem:[%s232 + $0x58] sm:$0xff] %vm485, %v484
      %p498 = scmp.lt.s32.totalorder %s18, 1
      %s499 = scalar_select %p498, %s18, 1
      %p500 = scmp.lt.s32.totalorder %s19, 0
      %s501 = scalar_select %p500, %s19, 0
      %s502 = smul.addr %s499, 12
      %s503 = sadd.s32 %s501, %s502
      %s504 = smul.addr %s503, 8
      %s505 = scalar_lea.vmem %s3, %s504
      // Predicated region
      $region33: #{mamba_pose_forward.20} parent=31 // pred_check
        %p506 = pneg %p126
      $region34: #{mamba_pose_forward.20} parent=31 // pred_check_branch
        %508 = sbr.rel (%p506) target = $region36
      $region35: #{mamba_pose_forward.20} parent=31 // pred_region
        _
      $region36: #{mamba_pose_forward.20} parent=31 // pred_fallthru
        _
    $region32: #{mamba_pose_forward.20} parent=5 // pred_fallthru
      _
    %p509 = scmp.le.s32.totalorder 2, %s9
    // Predicated region
    $region37: #{mamba_pose_forward.20} parent=5 // pred_check
      %p510 = pneg %p509
    $region38: #{mamba_pose_forward.20} parent=5 // pred_check_branch
      %512 = sbr.rel (%p510) target = $region40
    $region39: #{mamba_pose_forward.20} parent=5 // pred_region
      %s513 = ssub.s32 %s9, 2
      // Predicated region
      $region41: #{mamba_pose_forward.20} parent=39 // pred_check
        %p514 = pneg %p132
      $region42: #{mamba_pose_forward.20} parent=39 // pred_check_branch
        %516 = sbr.rel (%p514) target = $region44
      $region43: #{mamba_pose_forward.20} parent=39 // pred_region
        %p517 = scmp.lt.s32.totalorder %s20, 1
        %s518 = scalar_select %p517, %s20, 1
        %p519 = scmp.lt.s32.totalorder %s21, 0
        %s520 = scalar_select %p519, %s21, 0
        %s521 = smul.addr %s518, 12
        %s522 = sadd.s32 %s520, %s521
        %s523 = smul.addr %s522, 8
        %s524 = scalar_lea.vmem %s3, %s523
      $region44: #{mamba_pose_forward.20} parent=39 // pred_fallthru
        _
    $region40: #{mamba_pose_forward.20} parent=5 // pred_fallthru
      _
  $region6: #{mamba_pose_forward.20} parent=0 // loop_footer
    %s13 = sadd.s32 1, %s9
  $region7: #{mamba_pose_forward.20} parent=0 // loop_footer_branch
    %8 = sbr.rel target = $region3
  $region8: #{mamba_pose_forward.20} parent=0 // loop_exit
    _

// kernel: mamba_pose_forward.21
$region0: #{mamba_pose_forward.21}
  #allocation0 [shape = 'u32[]', space=smem, size = 0x4, offset = 0x4, fixed_abs, tag = 'smem constant byte address 0x4 - core index']
  #allocation1 [shape = 'u32[144,128]{1,0:T(1,128)}', space=vmem, size = 0x12000, scoped, tag = 'internal scratch']
  %s0 = inlined_call_operand.vmem [shape: bf16[192,64], index: 0, kind: input, shape index: {}]
  %s1 = inlined_call_operand.vmem [shape: bf16[64,72], index: 1, kind: input, shape index: {}]
  %s2 = inlined_call_operand.vmem [shape: f32[1,72], index: 2, kind: input, shape index: {}]
  %s3 = inlined_call_operand.vmem [shape: f32[192,72], index: 3, kind: output, shape index: {}]
  %s4 = sld [smem:[#allocation0]]
  $region22: #{mamba_pose_forward.21} parent=0
    _
  %s6 = ssub.s32 1, %s4
  %s7 = scalar_select 0, %s6, %s4
  // Predicated region
  $region2: #{mamba_pose_forward.21} parent=0 // pred_check
    _
  $region3: #{mamba_pose_forward.21} parent=0 // pred_check_branch
    %9 = sbr.rel (0) target = $region5
  $region4: #{mamba_pose_forward.21} parent=0 // pred_region
    _
  $region5: #{mamba_pose_forward.21} parent=0 // pred_fallthru
    _
  // Predicated region
  $region6: #{mamba_pose_forward.21} parent=0 // pred_check
    _
  $region7: #{mamba_pose_forward.21} parent=0 // pred_check_branch
    %11 = sbr.rel (0) target = $region9
  $region8: #{mamba_pose_forward.21} parent=0 // pred_region
    _
  $region9: #{mamba_pose_forward.21} parent=0 // pred_fallthru
    _
  // Predicated region
  $region10: #{mamba_pose_forward.21} parent=0 // pred_check
    _
  $region11: #{mamba_pose_forward.21} parent=0 // pred_check_branch
    %13 = sbr.rel (0) target = $region13
  $region12: #{mamba_pose_forward.21} parent=0 // pred_region
    _
  $region13: #{mamba_pose_forward.21} parent=0 // pred_fallthru
    _
  %v15 = vld [vmem:[%s0] sm:$0xf]
  %v16 = vld [vmem:[%s0 + $0x4] sm:$0xf]
  %v17 = vld [vmem:[%s0 + $0x8] sm:$0xf]
  %v18 = vld [vmem:[%s0 + $0xc] sm:$0xf]
  %v19 = vld [vmem:[%s0 + $0x10] sm:$0xf]
  %v20 = vld [vmem:[%s0 + $0x14] sm:$0xf]
  %v21 = vld [vmem:[%s0 + $0x18] sm:$0xf]
  %v22 = vld [vmem:[%s0 + $0x1c] sm:$0xf]
  %v23 = vld [vmem:[%s0 + $0x20] sm:$0xf]
  %v24 = vld [vmem:[%s0 + $0x24] sm:$0xf]
  %v25 = vld [vmem:[%s0 + $0x28] sm:$0xf]
  %v26 = vld [vmem:[%s0 + $0x2c] sm:$0xf]
  %v27 = vld [vmem:[%s0 + $0x30] sm:$0xf]
  %v28 = vld [vmem:[%s0 + $0x34] sm:$0xf]
  %v29 = vld [vmem:[%s0 + $0x38] sm:$0xf]
  %v30 = vld [vmem:[%s0 + $0x3c] sm:$0xf]
  %v31 = vld [vmem:[%s0 + $0x40] sm:$0xf]
  %v32 = vld [vmem:[%s0 + $0x44] sm:$0xf]
  %v33 = vld [vmem:[%s0 + $0x48] sm:$0xf]
  %v34 = vld [vmem:[%s0 + $0x4c] sm:$0xf]
  %v35 = vld [vmem:[%s0 + $0x50] sm:$0xf]
  %v36 = vld [vmem:[%s0 + $0x54] sm:$0xf]
  %v37 = vld [vmem:[%s0 + $0x58] sm:$0xf]
  %v38 = vld [vmem:[%s0 + $0x5c] sm:$0xf]
  %v39 = vld [vmem:[%s1] sm:$0xf]
  %v40 = vld [vmem:[%s1 + $0x4] sm:$0xf]
  %v41 = vld [vmem:[%s1 + $0x8] sm:$0xf]
  %v42 = vld [vmem:[%s1 + $0xc] sm:$0xf]
  %v43 = vld [vmem:[%s1 + $0x10] sm:$0xf]
  %v44 = vld [vmem:[%s1 + $0x14] sm:$0xf]
  %v45 = vld [vmem:[%s1 + $0x18] sm:$0xf]
  %v46 = vld [vmem:[%s1 + $0x1c] sm:$0xf]
  %v47 = vld [vmem:[%s2] sm:$0x1]
  %v49 = vlaneseq
  %v50 = vshrl.u32 %v49, 7
  %v51 = vsub.s32 0, %v50
  %v52 = vrot.slane %v47, %v51
  %v78 = vunpack.c.l.b16 %v15
  %v79 = vunpack.c.l.b16 %v16
  %v80 = vunpack.c.l.b16 %v17
  %v81 = vunpack.c.l.b16 %v18
  %v82 = vunpack.c.l.b16 %v19
  %v83 = vunpack.c.l.b16 %v20
  %v84 = vunpack.c.l.b16 %v21
  %v85 = vunpack.c.l.b16 %v22
  %v86 = vunpack.c.l.b16 %v23
  %v87 = vunpack.c.l.b16 %v24
  %v88 = vunpack.c.l.b16 %v25
  %v89 = vunpack.c.l.b16 %v26
  %v90 = vunpack.c.l.b16 %v27
  %v91 = vunpack.c.l.b16 %v28
  %v92 = vunpack.c.l.b16 %v29
  %v93 = vunpack.c.l.b16 %v30
  %v94 = vunpack.c.l.b16 %v31
  %v95 = vunpack.c.l.b16 %v32
  %v96 = vunpack.c.l.b16 %v33
  %v97 = vunpack.c.l.b16 %v34
  %v98 = vunpack.c.l.b16 %v35
  %v99 = vunpack.c.l.b16 %v36
  %v100 = vunpack.c.l.b16 %v37
  %v101 = vunpack.c.l.b16 %v38
  %v102 = vpack.c.b16 %v79, %v78
  %v103 = vpack.c.b16 %v81, %v80
  %v104 = vpack.c.b16 %v83, %v82
  %v105 = vpack.c.b16 %v85, %v84
  %v106 = vpack.c.b16 %v87, %v86
  %v107 = vpack.c.b16 %v89, %v88
  %v108 = vpack.c.b16 %v91, %v90
  %v109 = vpack.c.b16 %v93, %v92
  %v110 = vpack.c.b16 %v95, %v94
  %v111 = vpack.c.b16 %v97, %v96
  %v112 = vpack.c.b16 %v99, %v98
  %v113 = vpack.c.b16 %v101, %v100
  %v122 = vunpack.c.l.b16 %v39
  %v123 = vunpack.c.l.b16 %v40
  %v124 = vunpack.c.l.b16 %v41
  %v125 = vunpack.c.l.b16 %v42
  %v126 = vunpack.c.l.b16 %v43
  %v127 = vunpack.c.l.b16 %v44
  %v128 = vunpack.c.l.b16 %v45
  %v129 = vunpack.c.l.b16 %v46
  %v130 = vpack.c.b16 %v123, %v122
  %v131 = vpack.c.b16 %v125, %v124
  %v132 = vpack.c.b16 %v127, %v126
  %v133 = vpack.c.b16 %v129, %v128
  %vm138 = vcmask 523264
  %v140 = vsel %vm138, %v102, 0
  %v143 = vsel %vm138, %v103, 0
  %v146 = vsel %vm138, %v104, 0
  %v149 = vsel %vm138, %v105, 0
  %v152 = vsel %vm138, %v106, 0
  %v155 = vsel %vm138, %v107, 0
  %v158 = vsel %vm138, %v108, 0
  %v161 = vsel %vm138, %v109, 0
  %v164 = vsel %vm138, %v110, 0
  %v167 = vsel %vm138, %v111, 0
  %v170 = vsel %vm138, %v112, 0
  %v173 = vsel %vm138, %v113, 0
  %175 = vmatprep.subr.bf16.mxu0 0
  %176 = vmatpush1.bf16.msra.mxu0 %v130
  %177 = vmatprep.subr.bf16.mxu0 0
  %178 = vmatpush1.bf16.msra.mxu0 %v131
  %179 = vmatprep.subr.bf16.mxu0 0
  %180 = vmatpush1.bf16.msra.mxu0 %v132
  %181 = vmatprep.subr.bf16.mxu0 0
  %182 = vmatpush1.bf16.msra.mxu0 %v133
  %183 = vmatprep.subr.bf16.mxu0 0
  %184 = vmatpush1.bf16.msra.mxu0 0
  %185 = vmatprep.subr.bf16.mxu0 0
  %186 = vmatpush1.bf16.msra.mxu0 0
  %187 = vmatprep.subr.bf16.mxu0 0
  %188 = vmatpush1.bf16.msra.mxu0 0
  %189 = vmatprep.subr.bf16.mxu0 0
  %190 = vmatpush1.bf16.msra.mxu0 0
  %191 = vmatprep.subr.bf16.mxu0 0
  %192 = vmatpush1.bf16.msra.mxu0 0
  %193 = vmatprep.subr.bf16.mxu0 0
  %194 = vmatpush1.bf16.msra.mxu0 0
  %195 = vmatprep.subr.bf16.mxu0 0
  %196 = vmatpush1.bf16.msra.mxu0 0
  %197 = vmatprep.subr.bf16.mxu0 0
  %198 = vmatpush1.bf16.msra.mxu0 0
  %199 = vmatprep.subr.bf16.mxu0 0
  %200 = vmatpush1.bf16.msra.mxu0 0
  %201 = vmatprep.subr.bf16.mxu0 0
  %202 = vmatpush1.bf16.msra.mxu0 0
  %203 = vmatprep.subr.bf16.mxu0 0
  %204 = vmatpush1.bf16.msra.mxu0 0
  %205 = vmatprep.subr.bf16.mxu0 0
  %206 = vmatpush1.bf16.msra.mxu0 0
  %207 = vmatprep.mubr.bf16.mxu0 0
  %208 = vmatmul.mubr.bf16.gmra.mrb[0].mxu0 %v140
  %v209 = vpop.f32.mrb[0].mxu0
  %v210 = vadd.f32 %v52, %v209
  %v211 = vpop.f32.mrb[0].mxu0
  %v212 = vpop.f32.mrb[0].mxu0
  %v213 = vadd.f32 %v52, %v212
  %v214 = vpop.f32.mrb[0].mxu0
  %215 = vmatprep.mubr.bf16.mxu0 0
  %216 = vmatmul.mubr.bf16.gmra.mrb[0].mxu0 %v143
  %v217 = vpop.f32.mrb[0].mxu0
  %v218 = vadd.f32 %v52, %v217
  %v219 = vpop.f32.mrb[0].mxu0
  %v220 = vpop.f32.mrb[0].mxu0
  %v221 = vadd.f32 %v52, %v220
  %v222 = vpop.f32.mrb[0].mxu0
  %223 = vmatprep.mubr.bf16.mxu0 0
  %224 = vmatmul.mubr.bf16.gmra.mrb[0].mxu0 %v146
  %v225 = vpop.f32.mrb[0].mxu0
  %v226 = vadd.f32 %v52, %v225
  %v227 = vpop.f32.mrb[0].mxu0
  %v228 = vpop.f32.mrb[0].mxu0
  %v229 = vadd.f32 %v52, %v228
  %v230 = vpop.f32.mrb[0].mxu0
  %231 = vmatprep.mubr.bf16.mxu0 0
  %232 = vmatmul.mubr.bf16.gmra.mrb[0].mxu0 %v149
  %v233 = vpop.f32.mrb[0].mxu0
  %v234 = vadd.f32 %v52, %v233
  %v235 = vpop.f32.mrb[0].mxu0
  %v236 = vpop.f32.mrb[0].mxu0
  %v237 = vadd.f32 %v52, %v236
  %v238 = vpop.f32.mrb[0].mxu0
  %239 = vmatprep.mubr.bf16.mxu0 0
  %240 = vmatmul.mubr.bf16.gmra.mrb[0].mxu0 %v152
  %v241 = vpop.f32.mrb[0].mxu0
  %v242 = vadd.f32 %v52, %v241
  %v243 = vpop.f32.mrb[0].mxu0
  %v244 = vpop.f32.mrb[0].mxu0
  %v245 = vadd.f32 %v52, %v244
  %v246 = vpop.f32.mrb[0].mxu0
  %247 = vmatprep.mubr.bf16.mxu0 0
  %248 = vmatmul.mubr.bf16.gmra.mrb[0].mxu0 %v155
  %v249 = vpop.f32.mrb[0].mxu0
  %v250 = vadd.f32 %v52, %v249
  %v251 = vpop.f32.mrb[0].mxu0
  %v252 = vpop.f32.mrb[0].mxu0
  %v253 = vadd.f32 %v52, %v252
  %v254 = vpop.f32.mrb[0].mxu0
  %255 = vmatprep.mubr.bf16.mxu0 0
  %256 = vmatmul.mubr.bf16.gmra.mrb[0].mxu0 %v158
  %v257 = vpop.f32.mrb[0].mxu0
  %v258 = vadd.f32 %v52, %v257
  %v259 = vpop.f32.mrb[0].mxu0
  %v260 = vpop.f32.mrb[0].mxu0
  %v261 = vadd.f32 %v52, %v260
  %v262 = vpop.f32.mrb[0].mxu0
  %263 = vmatprep.mubr.bf16.mxu0 0
  %264 = vmatmul.mubr.bf16.gmra.mrb[0].mxu0 %v161
  %v265 = vpop.f32.mrb[0].mxu0
  %v266 = vadd.f32 %v52, %v265
  %v267 = vpop.f32.mrb[0].mxu0
  %v268 = vpop.f32.mrb[0].mxu0
  %v269 = vadd.f32 %v52, %v268
  %v270 = vpop.f32.mrb[0].mxu0
  %271 = vmatprep.mubr.bf16.mxu0 0
  %272 = vmatmul.mubr.bf16.gmra.mrb[0].mxu0 %v164
  %v273 = vpop.f32.mrb[0].mxu0
  %v274 = vadd.f32 %v52, %v273
  %v275 = vpop.f32.mrb[0].mxu0
  %v276 = vpop.f32.mrb[0].mxu0
  %v277 = vadd.f32 %v52, %v276
  %v278 = vpop.f32.mrb[0].mxu0
  %279 = vmatprep.mubr.bf16.mxu0 0
  %280 = vmatmul.mubr.bf16.gmra.mrb[0].mxu0 %v167
  %v281 = vpop.f32.mrb[0].mxu0
  %v282 = vadd.f32 %v52, %v281
  %v283 = vpop.f32.mrb[0].mxu0
  %v284 = vpop.f32.mrb[0].mxu0
  %v285 = vadd.f32 %v52, %v284
  %v286 = vpop.f32.mrb[0].mxu0
  %287 = vmatprep.mubr.bf16.mxu0 0
  %288 = vmatmul.mubr.bf16.gmra.mrb[0].mxu0 %v170
  %v289 = vpop.f32.mrb[0].mxu0
  %v290 = vadd.f32 %v52, %v289
  %v291 = vpop.f32.mrb[0].mxu0
  %v292 = vpop.f32.mrb[0].mxu0
  %v293 = vadd.f32 %v52, %v292
  %v294 = vpop.f32.mrb[0].mxu0
  %295 = vmatprep.mubr.bf16.mxu0 0
  %296 = vmatmul.mubr.bf16.gmra.mrb[0].mxu0 %v173
  %v297 = vpop.f32.mrb[0].mxu0
  %v298 = vadd.f32 %v52, %v297
  %v299 = vpop.f32.mrb[0].mxu0
  %v300 = vpop.f32.mrb[0].mxu0
  %v301 = vadd.f32 %v52, %v300
  %v302 = vpop.f32.mrb[0].mxu0
  %303 = vdwg.mxu0
  %vm304 = vcmask 588800
  %305 = vst.msk [vmem:[%s3] sm:$0xff] %vm304, %v210
  %306 = vst.msk [vmem:[%s3 + $0x8] sm:$0xff] %vm304, %v213
  %307 = vst.msk [vmem:[%s3 + $0x10] sm:$0xff] %vm304, %v218
  %308 = vst.msk [vmem:[%s3 + $0x18] sm:$0xff] %vm304, %v221
  %309 = vst.msk [vmem:[%s3 + $0x20] sm:$0xff] %vm304, %v226
  %310 = vst.msk [vmem:[%s3 + $0x28] sm:$0xff] %vm304, %v229
  %311 = vst.msk [vmem:[%s3 + $0x30] sm:$0xff] %vm304, %v234
  %312 = vst.msk [vmem:[%s3 + $0x38] sm:$0xff] %vm304, %v237
  %313 = vst.msk [vmem:[%s3 + $0x40] sm:$0xff] %vm304, %v242
  %314 = vst.msk [vmem:[%s3 + $0x48] sm:$0xff] %vm304, %v245
  %315 = vst.msk [vmem:[%s3 + $0x50] sm:$0xff] %vm304, %v250
  %316 = vst.msk [vmem:[%s3 + $0x58] sm:$0xff] %vm304, %v253
  %317 = vst.msk [vmem:[%s3 + $0x60] sm:$0xff] %vm304, %v258
  %318 = vst.msk [vmem:[%s3 + $0x68] sm:$0xff] %vm304, %v261
  %319 = vst.msk [vmem:[%s3 + $0x70] sm:$0xff] %vm304, %v266
  %320 = vst.msk [vmem:[%s3 + $0x78] sm:$0xff] %vm304, %v269
  %321 = vst.msk [vmem:[%s3 + $0x80] sm:$0xff] %vm304, %v274
  %322 = vst.msk [vmem:[%s3 + $0x88] sm:$0xff] %vm304, %v277
  %323 = vst.msk [vmem:[%s3 + $0x90] sm:$0xff] %vm304, %v282
  %324 = vst.msk [vmem:[%s3 + $0x98] sm:$0xff] %vm304, %v285
  %325 = vst.msk [vmem:[%s3 + $0xa0] sm:$0xff] %vm304, %v290
  %326 = vst.msk [vmem:[%s3 + $0xa8] sm:$0xff] %vm304, %v293
  %327 = vst.msk [vmem:[%s3 + $0xb0] sm:$0xff] %vm304, %v298
  %328 = vst.msk [vmem:[%s3 + $0xb8] sm:$0xff] %vm304, %v301
  // Predicated region
  $region14: #{mamba_pose_forward.21} parent=0 // pred_check
    _
  $region15: #{mamba_pose_forward.21} parent=0 // pred_check_branch
    %330 = sbr.rel (0) target = $region17
  $region16: #{mamba_pose_forward.21} parent=0 // pred_region
    _
  $region17: #{mamba_pose_forward.21} parent=0 // pred_fallthru
    _
  // Predicated region
  $region18: #{mamba_pose_forward.21} parent=0 // pred_check
    _
  $region19: #{mamba_pose_forward.21} parent=0 // pred_check_branch
    %332 = sbr.rel (0) target = $region21
  $region20: #{mamba_pose_forward.21} parent=0 // pred_region
    _
  $region21: #{mamba_pose_forward.21} parent=0 // pred_fallthru
    _

// kernel: mamba_pose_forward.23
$region0: #{mamba_pose_forward.23}
  #allocation0 [shape = 'u32[]', space=smem, size = 0x4, offset = 0x4, fixed_abs, tag = 'smem constant byte address 0x4 - core index']
  #allocation1 [shape = 'u32[144,128]{1,0:T(1,128)}', space=vmem, size = 0x12000, scoped, tag = 'internal scratch']
  %s0 = inlined_call_operand.vmem [shape: bf16[192,64], index: 0, kind: input, shape index: {}]
  %s1 = inlined_call_operand.vmem [shape: bf16[64,32], index: 1, kind: input, shape index: {}]
  %s2 = inlined_call_operand.vmem [shape: f32[192,32], index: 2, kind: output, shape index: {}]
  %s3 = sld [smem:[#allocation0]]
  $region18: #{mamba_pose_forward.23} parent=0
    _
  %s5 = ssub.s32 1, %s3
  %s6 = scalar_select 0, %s5, %s3
  // Predicated region
  $region2: #{mamba_pose_forward.23} parent=0 // pred_check
    _
  $region3: #{mamba_pose_forward.23} parent=0 // pred_check_branch
    %8 = sbr.rel (0) target = $region5
  $region4: #{mamba_pose_forward.23} parent=0 // pred_region
    _
  $region5: #{mamba_pose_forward.23} parent=0 // pred_fallthru
    _
  // Predicated region
  $region6: #{mamba_pose_forward.23} parent=0 // pred_check
    _
  $region7: #{mamba_pose_forward.23} parent=0 // pred_check_branch
    %10 = sbr.rel (0) target = $region9
  $region8: #{mamba_pose_forward.23} parent=0 // pred_region
    _
  $region9: #{mamba_pose_forward.23} parent=0 // pred_fallthru
    _
  %v12 = vld [vmem:[%s0] sm:$0xf]
  %v13 = vld [vmem:[%s0 + $0x4] sm:$0xf]
  %v14 = vld [vmem:[%s0 + $0x8] sm:$0xf]
  %v15 = vld [vmem:[%s0 + $0xc] sm:$0xf]
  %v16 = vld [vmem:[%s0 + $0x10] sm:$0xf]
  %v17 = vld [vmem:[%s0 + $0x14] sm:$0xf]
  %v18 = vld [vmem:[%s0 + $0x18] sm:$0xf]
  %v19 = vld [vmem:[%s0 + $0x1c] sm:$0xf]
  %v20 = vld [vmem:[%s0 + $0x20] sm:$0xf]
  %v21 = vld [vmem:[%s0 + $0x24] sm:$0xf]
  %v22 = vld [vmem:[%s0 + $0x28] sm:$0xf]
  %v23 = vld [vmem:[%s0 + $0x2c] sm:$0xf]
  %v24 = vld [vmem:[%s0 + $0x30] sm:$0xf]
  %v25 = vld [vmem:[%s0 + $0x34] sm:$0xf]
  %v26 = vld [vmem:[%s0 + $0x38] sm:$0xf]
  %v27 = vld [vmem:[%s0 + $0x3c] sm:$0xf]
  %v28 = vld [vmem:[%s0 + $0x40] sm:$0xf]
  %v29 = vld [vmem:[%s0 + $0x44] sm:$0xf]
  %v30 = vld [vmem:[%s0 + $0x48] sm:$0xf]
  %v31 = vld [vmem:[%s0 + $0x4c] sm:$0xf]
  %v32 = vld [vmem:[%s0 + $0x50] sm:$0xf]
  %v33 = vld [vmem:[%s0 + $0x54] sm:$0xf]
  %v34 = vld [vmem:[%s0 + $0x58] sm:$0xf]
  %v35 = vld [vmem:[%s0 + $0x5c] sm:$0xf]
  %v36 = vld [vmem:[%s1] sm:$0xf]
  %v37 = vld [vmem:[%s1 + $0x4] sm:$0xf]
  %v38 = vld [vmem:[%s1 + $0x8] sm:$0xf]
  %v39 = vld [vmem:[%s1 + $0xc] sm:$0xf]
  %v40 = vld [vmem:[%s1 + $0x10] sm:$0xf]
  %v41 = vld [vmem:[%s1 + $0x14] sm:$0xf]
  %v42 = vld [vmem:[%s1 + $0x18] sm:$0xf]
  %v43 = vld [vmem:[%s1 + $0x1c] sm:$0xf]
  %v68 = vunpack.c.l.b16 %v12
  %v69 = vunpack.c.l.b16 %v13
  %v70 = vunpack.c.l.b16 %v14
  %v71 = vunpack.c.l.b16 %v15
  %v72 = vunpack.c.l.b16 %v16
  %v73 = vunpack.c.l.b16 %v17
  %v74 = vunpack.c.l.b16 %v18
  %v75 = vunpack.c.l.b16 %v19
  %v76 = vunpack.c.l.b16 %v20
  %v77 = vunpack.c.l.b16 %v21
  %v78 = vunpack.c.l.b16 %v22
  %v79 = vunpack.c.l.b16 %v23
  %v80 = vunpack.c.l.b16 %v24
  %v81 = vunpack.c.l.b16 %v25
  %v82 = vunpack.c.l.b16 %v26
  %v83 = vunpack.c.l.b16 %v27
  %v84 = vunpack.c.l.b16 %v28
  %v85 = vunpack.c.l.b16 %v29
  %v86 = vunpack.c.l.b16 %v30
  %v87 = vunpack.c.l.b16 %v31
  %v88 = vunpack.c.l.b16 %v32
  %v89 = vunpack.c.l.b16 %v33
  %v90 = vunpack.c.l.b16 %v34
  %v91 = vunpack.c.l.b16 %v35
  %v92 = vpack.c.b16 %v69, %v68
  %v93 = vpack.c.b16 %v71, %v70
  %v94 = vpack.c.b16 %v73, %v72
  %v95 = vpack.c.b16 %v75, %v74
  %v96 = vpack.c.b16 %v77, %v76
  %v97 = vpack.c.b16 %v79, %v78
  %v98 = vpack.c.b16 %v81, %v80
  %v99 = vpack.c.b16 %v83, %v82
  %v100 = vpack.c.b16 %v85, %v84
  %v101 = vpack.c.b16 %v87, %v86
  %v102 = vpack.c.b16 %v89, %v88
  %v103 = vpack.c.b16 %v91, %v90
  %v112 = vunpack.c.l.b16 %v36
  %v113 = vunpack.c.l.b16 %v37
  %v114 = vunpack.c.l.b16 %v38
  %v115 = vunpack.c.l.b16 %v39
  %v116 = vunpack.c.l.b16 %v40
  %v117 = vunpack.c.l.b16 %v41
  %v118 = vunpack.c.l.b16 %v42
  %v119 = vunpack.c.l.b16 %v43
  %v120 = vpack.c.b16 %v113, %v112
  %v121 = vpack.c.b16 %v115, %v114
  %v122 = vpack.c.b16 %v117, %v116
  %v123 = vpack.c.b16 %v119, %v118
  %vm128 = vcmask 523264
  %v130 = vsel %vm128, %v92, 0
  %v133 = vsel %vm128, %v93, 0
  %v136 = vsel %vm128, %v94, 0
  %v139 = vsel %vm128, %v95, 0
  %v142 = vsel %vm128, %v96, 0
  %v145 = vsel %vm128, %v97, 0
  %v148 = vsel %vm128, %v98, 0
  %v151 = vsel %vm128, %v99, 0
  %v154 = vsel %vm128, %v100, 0
  %v157 = vsel %vm128, %v101, 0
  %v160 = vsel %vm128, %v102, 0
  %v163 = vsel %vm128, %v103, 0
  %165 = vmatprep.subr.bf16.mxu0 0
  %166 = vmatpush1.bf16.msra.mxu0 %v120
  %167 = vmatprep.subr.bf16.mxu0 0
  %168 = vmatpush1.bf16.msra.mxu0 %v121
  %169 = vmatprep.subr.bf16.mxu0 0
  %170 = vmatpush1.bf16.msra.mxu0 %v122
  %171 = vmatprep.subr.bf16.mxu0 0
  %172 = vmatpush1.bf16.msra.mxu0 %v123
  %173 = vmatprep.subr.bf16.mxu0 0
  %174 = vmatpush1.bf16.msra.mxu0 0
  %175 = vmatprep.subr.bf16.mxu0 0
  %176 = vmatpush1.bf16.msra.mxu0 0
  %177 = vmatprep.subr.bf16.mxu0 0
  %178 = vmatpush1.bf16.msra.mxu0 0
  %179 = vmatprep.subr.bf16.mxu0 0
  %180 = vmatpush1.bf16.msra.mxu0 0
  %181 = vmatprep.subr.bf16.mxu0 0
  %182 = vmatpush1.bf16.msra.mxu0 0
  %183 = vmatprep.subr.bf16.mxu0 0
  %184 = vmatpush1.bf16.msra.mxu0 0
  %185 = vmatprep.subr.bf16.mxu0 0
  %186 = vmatpush1.bf16.msra.mxu0 0
  %187 = vmatprep.subr.bf16.mxu0 0
  %188 = vmatpush1.bf16.msra.mxu0 0
  %189 = vmatprep.subr.bf16.mxu0 0
  %190 = vmatpush1.bf16.msra.mxu0 0
  %191 = vmatprep.subr.bf16.mxu0 0
  %192 = vmatpush1.bf16.msra.mxu0 0
  %193 = vmatprep.subr.bf16.mxu0 0
  %194 = vmatpush1.bf16.msra.mxu0 0
  %195 = vmatprep.subr.bf16.mxu0 0
  %196 = vmatpush1.bf16.msra.mxu0 0
  %197 = vmatprep.mubr.bf16.mxu0 0
  %198 = vmatmul.mubr.bf16.gmra.mrb[0].mxu0 %v130
  %v199 = vpop.f32.mrb[0].mxu0
  %v200 = vadd.f32 0.0, %v199
  %v201 = vpop.f32.mrb[0].mxu0
  %v202 = vpop.f32.mrb[0].mxu0
  %v203 = vadd.f32 0.0, %v202
  %v204 = vpop.f32.mrb[0].mxu0
  %205 = vmatprep.mubr.bf16.mxu0 0
  %206 = vmatmul.mubr.bf16.gmra.mrb[0].mxu0 %v133
  %v207 = vpop.f32.mrb[0].mxu0
  %v208 = vadd.f32 0.0, %v207
  %v209 = vpop.f32.mrb[0].mxu0
  %v210 = vpop.f32.mrb[0].mxu0
  %v211 = vadd.f32 0.0, %v210
  %v212 = vpop.f32.mrb[0].mxu0
  %213 = vmatprep.mubr.bf16.mxu0 0
  %214 = vmatmul.mubr.bf16.gmra.mrb[0].mxu0 %v136
  %v215 = vpop.f32.mrb[0].mxu0
  %v216 = vadd.f32 0.0, %v215
  %v217 = vpop.f32.mrb[0].mxu0
  %v218 = vpop.f32.mrb[0].mxu0
  %v219 = vadd.f32 0.0, %v218
  %v220 = vpop.f32.mrb[0].mxu0
  %221 = vmatprep.mubr.bf16.mxu0 0
  %222 = vmatmul.mubr.bf16.gmra.mrb[0].mxu0 %v139
  %v223 = vpop.f32.mrb[0].mxu0
  %v224 = vadd.f32 0.0, %v223
  %v225 = vpop.f32.mrb[0].mxu0
  %v226 = vpop.f32.mrb[0].mxu0
  %v227 = vadd.f32 0.0, %v226
  %v228 = vpop.f32.mrb[0].mxu0
  %229 = vmatprep.mubr.bf16.mxu0 0
  %230 = vmatmul.mubr.bf16.gmra.mrb[0].mxu0 %v142
  %v231 = vpop.f32.mrb[0].mxu0
  %v232 = vadd.f32 0.0, %v231
  %v233 = vpop.f32.mrb[0].mxu0
  %v234 = vpop.f32.mrb[0].mxu0
  %v235 = vadd.f32 0.0, %v234
  %v236 = vpop.f32.mrb[0].mxu0
  %237 = vmatprep.mubr.bf16.mxu0 0
  %238 = vmatmul.mubr.bf16.gmra.mrb[0].mxu0 %v145
  %v239 = vpop.f32.mrb[0].mxu0
  %v240 = vadd.f32 0.0, %v239
  %v241 = vpop.f32.mrb[0].mxu0
  %v242 = vpop.f32.mrb[0].mxu0
  %v243 = vadd.f32 0.0, %v242
  %v244 = vpop.f32.mrb[0].mxu0
  %245 = vmatprep.mubr.bf16.mxu0 0
  %246 = vmatmul.mubr.bf16.gmra.mrb[0].mxu0 %v148
  %v247 = vpop.f32.mrb[0].mxu0
  %v248 = vadd.f32 0.0, %v247
  %v249 = vpop.f32.mrb[0].mxu0
  %v250 = vpop.f32.mrb[0].mxu0
  %v251 = vadd.f32 0.0, %v250
  %v252 = vpop.f32.mrb[0].mxu0
  %253 = vmatprep.mubr.bf16.mxu0 0
  %254 = vmatmul.mubr.bf16.gmra.mrb[0].mxu0 %v151
  %v255 = vpop.f32.mrb[0].mxu0
  %v256 = vadd.f32 0.0, %v255
  %v257 = vpop.f32.mrb[0].mxu0
  %v258 = vpop.f32.mrb[0].mxu0
  %v259 = vadd.f32 0.0, %v258
  %v260 = vpop.f32.mrb[0].mxu0
  %261 = vmatprep.mubr.bf16.mxu0 0
  %262 = vmatmul.mubr.bf16.gmra.mrb[0].mxu0 %v154
  %v263 = vpop.f32.mrb[0].mxu0
  %v264 = vadd.f32 0.0, %v263
  %v265 = vpop.f32.mrb[0].mxu0
  %v266 = vpop.f32.mrb[0].mxu0
  %v267 = vadd.f32 0.0, %v266
  %v268 = vpop.f32.mrb[0].mxu0
  %269 = vmatprep.mubr.bf16.mxu0 0
  %270 = vmatmul.mubr.bf16.gmra.mrb[0].mxu0 %v157
  %v271 = vpop.f32.mrb[0].mxu0
  %v272 = vadd.f32 0.0, %v271
  %v273 = vpop.f32.mrb[0].mxu0
  %v274 = vpop.f32.mrb[0].mxu0
  %v275 = vadd.f32 0.0, %v274
  %v276 = vpop.f32.mrb[0].mxu0
  %277 = vmatprep.mubr.bf16.mxu0 0
  %278 = vmatmul.mubr.bf16.gmra.mrb[0].mxu0 %v160
  %v279 = vpop.f32.mrb[0].mxu0
  %v280 = vadd.f32 0.0, %v279
  %v281 = vpop.f32.mrb[0].mxu0
  %v282 = vpop.f32.mrb[0].mxu0
  %v283 = vadd.f32 0.0, %v282
  %v284 = vpop.f32.mrb[0].mxu0
  %285 = vmatprep.mubr.bf16.mxu0 0
  %286 = vmatmul.mubr.bf16.gmra.mrb[0].mxu0 %v163
  %v287 = vpop.f32.mrb[0].mxu0
  %v288 = vadd.f32 0.0, %v287
  %v289 = vpop.f32.mrb[0].mxu0
  %v290 = vpop.f32.mrb[0].mxu0
  %v291 = vadd.f32 0.0, %v290
  %v292 = vpop.f32.mrb[0].mxu0
  %293 = vdwg.mxu0
  %vm294 = vcmask 261120
  %295 = vst.msk [vmem:[%s2] sm:$0xff] %vm294, %v200
  %296 = vst.msk [vmem:[%s2 + $0x8] sm:$0xff] %vm294, %v203
  %297 = vst.msk [vmem:[%s2 + $0x10] sm:$0xff] %vm294, %v208
  %298 = vst.msk [vmem:[%s2 + $0x18] sm:$0xff] %vm294, %v211
  %299 = vst.msk [vmem:[%s2 + $0x20] sm:$0xff] %vm294, %v216
  %300 = vst.msk [vmem:[%s2 + $0x28] sm:$0xff] %vm294, %v219
  %301 = vst.msk [vmem:[%s2 + $0x30] sm:$0xff] %vm294, %v224
  %302 = vst.msk [vmem:[%s2 + $0x38] sm:$0xff] %vm294, %v227
  %303 = vst.msk [vmem:[%s2 + $0x40] sm:$0xff] %vm294, %v232
  %304 = vst.msk [vmem:[%s2 + $0x48] sm:$0xff] %vm294, %v235
  %305 = vst.msk [vmem:[%s2 + $0x50] sm:$0xff] %vm294, %v240
  %306 = vst.msk [vmem:[%s2 + $0x58] sm:$0xff] %vm294, %v243
  %307 = vst.msk [vmem:[%s2 + $0x60] sm:$0xff] %vm294, %v248
  %308 = vst.msk [vmem:[%s2 + $0x68] sm:$0xff] %vm294, %v251
  %309 = vst.msk [vmem:[%s2 + $0x70] sm:$0xff] %vm294, %v256
  %310 = vst.msk [vmem:[%s2 + $0x78] sm:$0xff] %vm294, %v259
  %311 = vst.msk [vmem:[%s2 + $0x80] sm:$0xff] %vm294, %v264
  %312 = vst.msk [vmem:[%s2 + $0x88] sm:$0xff] %vm294, %v267
  %313 = vst.msk [vmem:[%s2 + $0x90] sm:$0xff] %vm294, %v272
  %314 = vst.msk [vmem:[%s2 + $0x98] sm:$0xff] %vm294, %v275
  %315 = vst.msk [vmem:[%s2 + $0xa0] sm:$0xff] %vm294, %v280
  %316 = vst.msk [vmem:[%s2 + $0xa8] sm:$0xff] %vm294, %v283
  %317 = vst.msk [vmem:[%s2 + $0xb0] sm:$0xff] %vm294, %v288
  %318 = vst.msk [vmem:[%s2 + $0xb8] sm:$0xff] %vm294, %v291
  // Predicated region
  $region10: #{mamba_pose_forward.23} parent=0 // pred_check
    _
  $region11: #{mamba_pose_forward.23} parent=0 // pred_check_branch
    %320 = sbr.rel (0) target = $region13
  $region12: #{mamba_pose_forward.23} parent=0 // pred_region
    _
  $region13: #{mamba_pose_forward.23} parent=0 // pred_fallthru
    _
  // Predicated region
  $region14: #{mamba_pose_forward.23} parent=0 // pred_check
    _
  $region15: #{mamba_pose_forward.23} parent=0 // pred_check_branch
    %322 = sbr.rel (0) target = $region17
  $region16: #{mamba_pose_forward.23} parent=0 // pred_region
    _
  $region17: #{mamba_pose_forward.23} parent=0 // pred_fallthru
    _

// kernel: mamba_pose_forward.22
$region0: #{mamba_pose_forward.22}
  #allocation0 [shape = 'u32[]', space=smem, size = 0x4, offset = 0x4, fixed_abs, tag = 'smem constant byte address 0x4 - core index']
  #allocation1 [shape = 'u32[144,128]{1,0:T(1,128)}', space=vmem, size = 0x12000, scoped, tag = 'internal scratch']
  %s0 = inlined_call_operand.vmem [shape: f32[2,12,8,64], index: 0, kind: input, shape index: {}]
  %s1 = inlined_call_operand.vmem [shape: f32[2,12,8,64], index: 1, kind: input, shape index: {}]
  %s2 = inlined_call_operand.vmem [shape: f32[2,12,8,64], index: 2, kind: input, shape index: {}]
  %s3 = inlined_call_operand.vmem [shape: f32[2,12,4,8], index: 3, kind: input, shape index: {}]
  %s4 = inlined_call_operand.vmem [shape: f32[2,12,4,8], index: 4, kind: input, shape index: {}]
  %s5 = inlined_call_operand.vmem [shape: f32[4,64], index: 5, kind: input, shape index: {}]
  %s6 = inlined_call_operand.vmem [shape: f32[1,64], index: 6, kind: input, shape index: {}]
  %s7 = inlined_call_operand.vmem [shape: f32[2,12,8,64], index: 7, kind: output, shape index: {}]
  %s8 = sld [smem:[#allocation0]]
  $region68: #{mamba_pose_forward.22} parent=0
    _
  %s10 = ssub.s32 1, %s8
  %s11 = scalar_select 0, %s10, %s8
  loop: start=0, step=1, limit=4
  $region2: #{mamba_pose_forward.22} parent=0 // loop_pre_header
    _
  $region3: #{mamba_pose_forward.22} parent=0 // loop_header
    %s13 = sphi 0, %s17
    %p14 = scmp.ge.s32.totalorder %s13, 4
    %s20 = sphi 0, %s32
    %s21 = sphi 0, %s28
    %s22 = sphi 0, %s20
    %s23 = sphi 0, %s21
    %s24 = sphi 0, %s22
    %s25 = sphi 0, %s23
    %s37 = sphi 0, %s39
    %s40 = sphi 0, %s37
    %s41 = sphi 0, %s40
    %s57 = sphi 0, %s41
    %s65 = sphi 0, %s67
    %s68 = sphi 0, %s65
    %s69 = sphi 0, %s68
    %s85 = sphi 0, %s69
    %s93 = sphi 0, %s95
    %s96 = sphi 0, %s93
    %s97 = sphi 0, %s96
    %s113 = sphi 0, %s97
    %s119 = sphi 0, %s121
    %s122 = sphi 0, %s119
    %s123 = sphi 0, %s122
    %s139 = sphi 0, %s123
    %s145 = sphi 0, %s147
    %s148 = sphi 0, %s145
    %s149 = sphi 0, %s148
    %s165 = sphi 0, %s149
    %s171 = sphi 0, %s173
    %s174 = sphi 0, %s171
    %s175 = sphi 0, %s174
    %s191 = sphi 0, %s175
    %s197 = sphi 0, %s199
    %s200 = sphi 0, %s197
    %s201 = sphi 0, %s200
    %s217 = sphi 0, %s201
    %s225 = sphi 0, %s227
    %s228 = sphi 0, %s225
    %s229 = sphi 0, %s228
    %s245 = sphi 0, %s229
  $region4: #{mamba_pose_forward.22} parent=0 // loop_header_branch
    %16 = sbr.rel (%p14) target = $region8
  $region5: #{mamba_pose_forward.22} parent=0 // loop_body
    %s18 = ssub.s32 %s13, 1
    %s19 = ssub.s32 %s13, 2
    %s26 = sadd.s32 1, %s21
    %p27 = scmp.ge.s32.totalorder %s26, 1
    %s28 = scalar_select %p27, 0, %s26
    %s29 = sadd.s32 1, %s20
    %s30 = scalar_select %p27, %s29, %s20
    %p31 = scmp.ge.s32.totalorder %s30, 2
    %s32 = scalar_select %p31, 0, %s30
    %s33 = ssub.s32 %s20, %s32
    %s34 = ssub.s32 %s21, %s28
    %s35 = sor.u32 %s33, %s34
    %p36 = scmp.eq.s32.totalorder %s35, 0
    %s38 = sadd.s32 %s37, 1
    %s39 = scalar_select %p36, %s37, %s38
    %p42 = pneg %p36
    %p43 = scmp.eq.s32.totalorder %s13, 1
    %p44 = por %p42, %p43
    %p45 = scmp.ne.s32.totalorder %s37, %s40
    %p46 = scmp.eq.s32.totalorder %s13, 0
    %p47 = por %p45, %p46
    %p48 = scmp.ne.s32.totalorder %s37, %s40
    %p49 = scmp.eq.s32.totalorder %s18, 1
    %p50 = por %p48, %p49
    %p51 = scmp.ne.s32.totalorder %s40, %s41
    %p52 = scmp.eq.s32.totalorder %s18, 0
    %p53 = por %p51, %p52
    %p54 = scmp.ne.s32.totalorder %s40, %s41
    %p55 = scmp.eq.s32.totalorder %s19, 1
    %p56 = por %p54, %p55
    %p58 = scmp.ne.s32.totalorder %s41, %s57
    %p59 = scmp.eq.s32.totalorder %s19, 0
    %p60 = por %p58, %p59
    %s61 = ssub.s32 %s20, %s32
    %s62 = ssub.s32 %s21, %s28
    %s63 = sor.u32 %s61, %s62
    %p64 = scmp.eq.s32.totalorder %s63, 0
    %s66 = sadd.s32 %s65, 1
    %s67 = scalar_select %p64, %s65, %s66
    %p70 = pneg %p64
    %p71 = scmp.eq.s32.totalorder %s13, 1
    %p72 = por %p70, %p71
    %p73 = scmp.ne.s32.totalorder %s65, %s68
    %p74 = scmp.eq.s32.totalorder %s13, 0
    %p75 = por %p73, %p74
    %p76 = scmp.ne.s32.totalorder %s65, %s68
    %p77 = scmp.eq.s32.totalorder %s18, 1
    %p78 = por %p76, %p77
    %p79 = scmp.ne.s32.totalorder %s68, %s69
    %p80 = scmp.eq.s32.totalorder %s18, 0
    %p81 = por %p79, %p80
    %p82 = scmp.ne.s32.totalorder %s68, %s69
    %p83 = scmp.eq.s32.totalorder %s19, 1
    %p84 = por %p82, %p83
    %p86 = scmp.ne.s32.totalorder %s69, %s85
    %p87 = scmp.eq.s32.totalorder %s19, 0
    %p88 = por %p86, %p87
    %s89 = ssub.s32 %s20, %s32
    %s90 = ssub.s32 %s21, %s28
    %s91 = sor.u32 %s89, %s90
    %p92 = scmp.eq.s32.totalorder %s91, 0
    %s94 = sadd.s32 %s93, 1
    %s95 = scalar_select %p92, %s93, %s94
    %p98 = pneg %p92
    %p99 = scmp.eq.s32.totalorder %s13, 1
    %p100 = por %p98, %p99
    %p101 = scmp.ne.s32.totalorder %s93, %s96
    %p102 = scmp.eq.s32.totalorder %s13, 0
    %p103 = por %p101, %p102
    %p104 = scmp.ne.s32.totalorder %s93, %s96
    %p105 = scmp.eq.s32.totalorder %s18, 1
    %p106 = por %p104, %p105
    %p107 = scmp.ne.s32.totalorder %s96, %s97
    %p108 = scmp.eq.s32.totalorder %s18, 0
    %p109 = por %p107, %p108
    %p110 = scmp.ne.s32.totalorder %s96, %s97
    %p111 = scmp.eq.s32.totalorder %s19, 1
    %p112 = por %p110, %p111
    %p114 = scmp.ne.s32.totalorder %s97, %s113
    %p115 = scmp.eq.s32.totalorder %s19, 0
    %p116 = por %p114, %p115
    %s117 = ssub.s32 %s20, %s32
    %p118 = scmp.eq.s32.totalorder %s117, 0
    %s120 = sadd.s32 %s119, 1
    %s121 = scalar_select %p118, %s119, %s120
    %p124 = pneg %p118
    %p125 = scmp.eq.s32.totalorder %s13, 1
    %p126 = por %p124, %p125
    %p127 = scmp.ne.s32.totalorder %s119, %s122
    %p128 = scmp.eq.s32.totalorder %s13, 0
    %p129 = por %p127, %p128
    %p130 = scmp.ne.s32.totalorder %s119, %s122
    %p131 = scmp.eq.s32.totalorder %s18, 1
    %p132 = por %p130, %p131
    %p133 = scmp.ne.s32.totalorder %s122, %s123
    %p134 = scmp.eq.s32.totalorder %s18, 0
    %p135 = por %p133, %p134
    %p136 = scmp.ne.s32.totalorder %s122, %s123
    %p137 = scmp.eq.s32.totalorder %s19, 1
    %p138 = por %p136, %p137
    %p140 = scmp.ne.s32.totalorder %s123, %s139
    %p141 = scmp.eq.s32.totalorder %s19, 0
    %p142 = por %p140, %p141
    %s143 = ssub.s32 %s20, %s32
    %p144 = scmp.eq.s32.totalorder %s143, 0
    %s146 = sadd.s32 %s145, 1
    %s147 = scalar_select %p144, %s145, %s146
    %p150 = pneg %p144
    %p151 = scmp.eq.s32.totalorder %s13, 1
    %p152 = por %p150, %p151
    %p153 = scmp.ne.s32.totalorder %s145, %s148
    %p154 = scmp.eq.s32.totalorder %s13, 0
    %p155 = por %p153, %p154
    %p156 = scmp.ne.s32.totalorder %s145, %s148
    %p157 = scmp.eq.s32.totalorder %s18, 1
    %p158 = por %p156, %p157
    %p159 = scmp.ne.s32.totalorder %s148, %s149
    %p160 = scmp.eq.s32.totalorder %s18, 0
    %p161 = por %p159, %p160
    %p162 = scmp.ne.s32.totalorder %s148, %s149
    %p163 = scmp.eq.s32.totalorder %s19, 1
    %p164 = por %p162, %p163
    %p166 = scmp.ne.s32.totalorder %s149, %s165
    %p167 = scmp.eq.s32.totalorder %s19, 0
    %p168 = por %p166, %p167
    %s169 = ssub.s32 %s21, %s28
    %p170 = scmp.eq.s32.totalorder %s169, 0
    %s172 = sadd.s32 %s171, 1
    %s173 = scalar_select %p170, %s171, %s172
    %p176 = pneg %p170
    %p177 = scmp.eq.s32.totalorder %s13, 1
    %p178 = por %p176, %p177
    %p179 = scmp.ne.s32.totalorder %s171, %s174
    %p180 = scmp.eq.s32.totalorder %s13, 0
    %p181 = por %p179, %p180
    %p182 = scmp.ne.s32.totalorder %s171, %s174
    %p183 = scmp.eq.s32.totalorder %s18, 1
    %p184 = por %p182, %p183
    %p185 = scmp.ne.s32.totalorder %s174, %s175
    %p186 = scmp.eq.s32.totalorder %s18, 0
    %p187 = por %p185, %p186
    %p188 = scmp.ne.s32.totalorder %s174, %s175
    %p189 = scmp.eq.s32.totalorder %s19, 1
    %p190 = por %p188, %p189
    %p192 = scmp.ne.s32.totalorder %s175, %s191
    %p193 = scmp.eq.s32.totalorder %s19, 0
    %p194 = por %p192, %p193
    %s195 = ssub.s32 %s21, %s28
    %p196 = scmp.eq.s32.totalorder %s195, 0
    %s198 = sadd.s32 %s197, 1
    %s199 = scalar_select %p196, %s197, %s198
    %p202 = pneg %p196
    %p203 = scmp.eq.s32.totalorder %s13, 1
    %p204 = por %p202, %p203
    %p205 = scmp.ne.s32.totalorder %s197, %s200
    %p206 = scmp.eq.s32.totalorder %s13, 0
    %p207 = por %p205, %p206
    %p208 = scmp.ne.s32.totalorder %s197, %s200
    %p209 = scmp.eq.s32.totalorder %s18, 1
    %p210 = por %p208, %p209
    %p211 = scmp.ne.s32.totalorder %s200, %s201
    %p212 = scmp.eq.s32.totalorder %s18, 0
    %p213 = por %p211, %p212
    %p214 = scmp.ne.s32.totalorder %s200, %s201
    %p215 = scmp.eq.s32.totalorder %s19, 1
    %p216 = por %p214, %p215
    %p218 = scmp.ne.s32.totalorder %s201, %s217
    %p219 = scmp.eq.s32.totalorder %s19, 0
    %p220 = por %p218, %p219
    %s221 = ssub.s32 %s20, %s32
    %s222 = ssub.s32 %s21, %s28
    %s223 = sor.u32 %s221, %s222
    %p224 = scmp.eq.s32.totalorder %s223, 0
    %s226 = sadd.s32 %s225, 1
    %s227 = scalar_select %p224, %s225, %s226
    %p230 = pneg %p224
    %p231 = scmp.eq.s32.totalorder %s13, 1
    %p232 = por %p230, %p231
    %p233 = scmp.ne.s32.totalorder %s225, %s228
    %p234 = scmp.eq.s32.totalorder %s13, 0
    %p235 = por %p233, %p234
    %p236 = scmp.ne.s32.totalorder %s225, %s228
    %p237 = scmp.eq.s32.totalorder %s18, 1
    %p238 = por %p236, %p237
    %p239 = scmp.ne.s32.totalorder %s228, %s229
    %p240 = scmp.eq.s32.totalorder %s18, 0
    %p241 = por %p239, %p240
    %p242 = scmp.ne.s32.totalorder %s228, %s229
    %p243 = scmp.eq.s32.totalorder %s19, 1
    %p244 = por %p242, %p243
    %p246 = scmp.ne.s32.totalorder %s229, %s245
    %p247 = scmp.eq.s32.totalorder %s19, 0
    %p248 = por %p246, %p247
    %p249 = scmp.le.s32.totalorder 1, %s13
    %p250 = scmp.lt.s32.totalorder %s13, 3
    %p251 = pnand %p249, %p250
    %p252 = pneg %p251
    // Predicated region
    $region9: #{mamba_pose_forward.22} parent=5 // pred_check
      _
    $region10: #{mamba_pose_forward.22} parent=5 // pred_check_branch
      %254 = sbr.rel (%p251) target = $region12
    $region11: #{mamba_pose_forward.22} parent=5 // pred_region
      %s255 = ssub.s32 %s13, 1
      // Predicated region
      $region13: #{mamba_pose_forward.22} parent=11 // pred_check
        %p256 = pneg %p187
      $region14: #{mamba_pose_forward.22} parent=11 // pred_check_branch
        %258 = sbr.rel (%p256) target = $region16
      $region15: #{mamba_pose_forward.22} parent=11 // pred_region
        %p259 = scmp.lt.s32.totalorder %s23, 0
        %s260 = scalar_select %p259, %s23, 0
        %s261 = smul.addr %s260, 4
        %s262 = scalar_lea.vmem %s5, %s261
      $region16: #{mamba_pose_forward.22} parent=11 // pred_fallthru
        _
      // Predicated region
      $region17: #{mamba_pose_forward.22} parent=11 // pred_check
        %p263 = pneg %p213
      $region18: #{mamba_pose_forward.22} parent=11 // pred_check_branch
        %265 = sbr.rel (%p263) target = $region20
      $region19: #{mamba_pose_forward.22} parent=11 // pred_region
        %p266 = scmp.lt.s32.totalorder %s23, 0
        %s267 = scalar_select %p266, %s23, 0
        %s268 = scalar_lea.vmem %s6, %s267
      $region20: #{mamba_pose_forward.22} parent=11 // pred_fallthru
        _
    $region12: #{mamba_pose_forward.22} parent=5 // pred_fallthru
      _
    %p269 = scmp.lt.s32.totalorder %s13, 2
    // Predicated region
    $region21: #{mamba_pose_forward.22} parent=5 // pred_check
      %p270 = pneg %p269
    $region22: #{mamba_pose_forward.22} parent=5 // pred_check_branch
      %272 = sbr.rel (%p270) target = $region24
    $region23: #{mamba_pose_forward.22} parent=5 // pred_region
      // Predicated region
      $region25: #{mamba_pose_forward.22} parent=23 // pred_check
        %p273 = pneg %p47
      $region26: #{mamba_pose_forward.22} parent=23 // pred_check_branch
        %275 = sbr.rel (%p273) target = $region28
      $region27: #{mamba_pose_forward.22} parent=23 // pred_region
        %p276 = scmp.lt.s32.totalorder %s20, 1
        %s277 = scalar_select %p276, %s20, 1
        %p278 = scmp.lt.s32.totalorder %s21, 0
        %s279 = scalar_select %p278, %s21, 0
        %s280 = smul.addr %s277, 12
        %s281 = sadd.s32 %s279, %s280
        %s282 = smul.addr %s281, 8
        %s283 = scalar_lea.vmem %s0, %s282
      $region28: #{mamba_pose_forward.22} parent=23 // pred_fallthru
        _
      // Predicated region
      $region29: #{mamba_pose_forward.22} parent=23 // pred_check
        %p284 = pneg %p75
      $region30: #{mamba_pose_forward.22} parent=23 // pred_check_branch
        %286 = sbr.rel (%p284) target = $region32
      $region31: #{mamba_pose_forward.22} parent=23 // pred_region
        %p287 = scmp.lt.s32.totalorder %s20, 1
        %s288 = scalar_select %p287, %s20, 1
        %p289 = scmp.lt.s32.totalorder %s21, 0
        %s290 = scalar_select %p289, %s21, 0
        %s291 = smul.addr %s288, 12
        %s292 = sadd.s32 %s290, %s291
        %s293 = smul.addr %s292, 8
        %s294 = scalar_lea.vmem %s1, %s293
      $region32: #{mamba_pose_forward.22} parent=23 // pred_fallthru
        _
      // Predicated region
      $region33: #{mamba_pose_forward.22} parent=23 // pred_check
        %p295 = pneg %p103
      $region34: #{mamba_pose_forward.22} parent=23 // pred_check_branch
        %297 = sbr.rel (%p295) target = $region36
      $region35: #{mamba_pose_forward.22} parent=23 // pred_region
        %p298 = scmp.lt.s32.totalorder %s20, 1
        %s299 = scalar_select %p298, %s20, 1
        %p300 = scmp.lt.s32.totalorder %s21, 0
        %s301 = scalar_select %p300, %s21, 0
        %s302 = smul.addr %s299, 12
        %s303 = sadd.s32 %s301, %s302
        %s304 = smul.addr %s303, 8
        %s305 = scalar_lea.vmem %s2, %s304
      $region36: #{mamba_pose_forward.22} parent=23 // pred_fallthru
        _
      // Predicated region
      $region37: #{mamba_pose_forward.22} parent=23 // pred_check
        %p306 = pneg %p129
      $region38: #{mamba_pose_forward.22} parent=23 // pred_check_branch
        %308 = sbr.rel (%p306) target = $region40
      $region39: #{mamba_pose_forward.22} parent=23 // pred_region
        %p309 = scmp.lt.s32.totalorder %s20, 1
        %s310 = scalar_select %p309, %s20, 1
        %s311 = smul.addr %s310, 12
        %s312 = smul.addr %s311, 4
        %s313 = scalar_lea.vmem %s3, %s312
      $region40: #{mamba_pose_forward.22} parent=23 // pred_fallthru
        _
      // Predicated region
      $region41: #{mamba_pose_forward.22} parent=23 // pred_check
        %p314 = pneg %p155
      $region42: #{mamba_pose_forward.22} parent=23 // pred_check_branch
        %316 = sbr.rel (%p314) target = $region44
      $region43: #{mamba_pose_forward.22} parent=23 // pred_region
        %p317 = scmp.lt.s32.totalorder %s20, 1
        %s318 = scalar_select %p317, %s20, 1
        %s319 = smul.addr %s318, 12
        %s320 = smul.addr %s319, 4
        %s321 = scalar_lea.vmem %s4, %s320
      $region44: #{mamba_pose_forward.22} parent=23 // pred_fallthru
        _
    $region24: #{mamba_pose_forward.22} parent=5 // pred_fallthru
      _
    %p322 = scmp.le.s32.totalorder 1, %s13
    %p323 = scmp.lt.s32.totalorder %s13, 3
    %p324 = pnand %p322, %p323
    %p325 = pneg %p324
    // Predicated region
    $region45: #{mamba_pose_forward.22} parent=5 // pred_check
      _
    $region46: #{mamba_pose_forward.22} parent=5 // pred_check_branch
      %327 = sbr.rel (%p324) target = $region48
    $region47: #{mamba_pose_forward.22} parent=5 // pred_region
      %s328 = ssub.s32 %s13, 1
      %p329 = scmp.lt.s32.totalorder %s22, 1
      %s330 = scalar_select %p329, %s22, 1
      %p331 = scmp.lt.s32.totalorder %s23, 0
      %s332 = scalar_select %p331, %s23, 0
      %s333 = smul.addr %s330, 12
      %s334 = sadd.s32 %s332, %s333
      %s335 = smul.addr %s334, 8
      %s336 = scalar_lea.vmem %s0, %s335
      %p337 = pneg %p53
      %p338 = pneg %p50
      %p339 = scmp.lt.s32.totalorder %s22, 1
      %s340 = scalar_select %p339, %s22, 1
      %p341 = scmp.lt.s32.totalorder %s23, 0
      %s342 = scalar_select %p341, %s23, 0
      %s343 = smul.addr %s340, 12
      %s344 = sadd.s32 %s342, %s343
      %s345 = smul.addr %s344, 8
      %s346 = scalar_lea.vmem %s1, %s345
      %p347 = pneg %p81
      %p348 = pneg %p78
      %p349 = scmp.lt.s32.totalorder %s22, 1
      %s350 = scalar_select %p349, %s22, 1
      %p351 = scmp.lt.s32.totalorder %s23, 0
      %s352 = scalar_select %p351, %s23, 0
      %s353 = smul.addr %s350, 12
      %s354 = sadd.s32 %s352, %s353
      %s355 = smul.addr %s354, 8
      %s356 = scalar_lea.vmem %s2, %s355
      %p357 = pneg %p109
      %p358 = pneg %p106
      %p359 = scmp.lt.s32.totalorder %s22, 1
      %s360 = scalar_select %p359, %s22, 1
      %s361 = smul.addr %s360, 12
      %s362 = smul.addr %s361, 4
      %s363 = scalar_lea.vmem %s3, %s362
      %p364 = pneg %p135
      %p365 = pneg %p132
      %p366 = scmp.lt.s32.totalorder %s22, 1
      %s367 = scalar_select %p366, %s22, 1
      %s368 = smul.addr %s367, 12
      %s369 = smul.addr %s368, 4
      %s370 = scalar_lea.vmem %s4, %s369
      %p371 = pneg %p161
      %p372 = pneg %p158
      %p373 = scmp.lt.s32.totalorder %s23, 0
      %s374 = scalar_select %p373, %s23, 0
      %s375 = smul.addr %s374, 4
      %s376 = scalar_lea.vmem %s5, %s375
      %p377 = pneg %p187
      %p378 = pneg %p184
      %p379 = scmp.lt.s32.totalorder %s23, 0
      %s380 = scalar_select %p379, %s23, 0
      %s381 = scalar_lea.vmem %s6, %s380
      %p382 = pneg %p213
      %p383 = pneg %p210
      %p384 = pneg %p241
      %p385 = pneg %p238
      %p386 = scmp.lt.s32.totalorder %s22, 1
      %s387 = scalar_select %p386, %s22, 1
      %p388 = scmp.lt.s32.totalorder %s23, 0
      %s389 = scalar_select %p388, %s23, 0
      %s390 = smul.addr %s387, 12
      %s391 = sadd.s32 %s389, %s390
      %s392 = smul.addr %s391, 8
      %s393 = scalar_lea.vmem %s7, %s392
      %p394 = scmp.lt.s32.totalorder %s22, 1
      %s395 = scalar_select %p394, %s22, 1
      %p396 = scmp.lt.s32.totalorder %s23, 0
      %s397 = scalar_select %p396, %s23, 0
      %s398 = smul.addr %s395, 12
      %s399 = sadd.s32 %s397, %s398
      %s400 = smul.addr %s399, 8
      %s401 = scalar_lea.vmem %s0, %s400
      %p402 = scmp.lt.s32.totalorder %s22, 1
      %s403 = scalar_select %p402, %s22, 1
      %p404 = scmp.lt.s32.totalorder %s23, 0
      %s405 = scalar_select %p404, %s23, 0
      %s406 = smul.addr %s403, 12
      %s407 = sadd.s32 %s405, %s406
      %s408 = smul.addr %s407, 8
      %s409 = scalar_lea.vmem %s1, %s408
      %p410 = scmp.lt.s32.totalorder %s22, 1
      %s411 = scalar_select %p410, %s22, 1
      %p412 = scmp.lt.s32.totalorder %s23, 0
      %s413 = scalar_select %p412, %s23, 0
      %s414 = smul.addr %s411, 12
      %s415 = sadd.s32 %s413, %s414
      %s416 = smul.addr %s415, 8
      %s417 = scalar_lea.vmem %s2, %s416
      %p418 = scmp.lt.s32.totalorder %s22, 1
      %s419 = scalar_select %p418, %s22, 1
      %s420 = smul.addr %s419, 12
      %s421 = smul.addr %s420, 4
      %s422 = scalar_lea.vmem %s3, %s421
      %p423 = scmp.lt.s32.totalorder %s22, 1
      %s424 = scalar_select %p423, %s22, 1
      %s425 = smul.addr %s424, 12
      %s426 = smul.addr %s425, 4
      %s427 = scalar_lea.vmem %s4, %s426
      %p428 = scmp.lt.s32.totalorder %s23, 0
      %s429 = scalar_select %p428, %s23, 0
      %s430 = smul.addr %s429, 4
      %s431 = scalar_lea.vmem %s5, %s430
      %p432 = scmp.lt.s32.totalorder %s23, 0
      %s433 = scalar_select %p432, %s23, 0
      %s434 = scalar_lea.vmem %s6, %s433
      %p435 = scmp.lt.s32.totalorder %s22, 1
      %s436 = scalar_select %p435, %s22, 1
      %p437 = scmp.lt.s32.totalorder %s23, 0
      %s438 = scalar_select %p437, %s23, 0
      %s439 = smul.addr %s436, 12
      %s440 = sadd.s32 %s438, %s439
      %s441 = smul.addr %s440, 8
      %s442 = scalar_lea.vmem %s7, %s441
      %v443 = vld [vmem:[%s431] sm:$0xf]
      %v444 = vld [vmem:[%s434] sm:$0x1]
      %v445 = vlaneseq
      %v446 = vshrl.u32 %v445, 7
      loop: start=0, step=1, limit=12
      $region49: #{mamba_pose_forward.22} parent=47 // loop_pre_header
        _
      $region50: #{mamba_pose_forward.22} parent=47 // loop_header
        %s448 = sphi 0, %s452
        %p449 = scmp.ge.s32.totalorder %s448, 12
        %v453 = vphi 0.0, %v864
      $region51: #{mamba_pose_forward.22} parent=47 // loop_header_branch
        %451 = sbr.rel (%p449) target = $region55
      $region52: #{mamba_pose_forward.22} parent=47 // loop_body
        %s454 = smul.u32 %s448, 8
        %s455 = scalar_lea.vmem %s401, %s454
        %v456 = vld [vmem:[%s455] sm:$0xff]
        %s457 = scalar_lea.vmem %s409, %s454
        %v458 = vld [vmem:[%s457] sm:$0xff]
        %s459 = scalar_lea.vmem %s417, %s454
        %v460 = vld [vmem:[%s459] sm:$0xff]
        %s461 = smul.u32 %s448, 4
        %s462 = scalar_lea.vmem %s422, %s461
        %v463 = vld [vmem:[%s462] sm:$0xf]
        %s464 = scalar_lea.vmem %s427, %s461
        %v465 = vld [vmem:[%s464] sm:$0xf]
        %v466 = vmax.f32 %v458, 0.0
        %v467 = vand.u32 2147483647, %v458
        %v468 = vsub.f32 0.0, %v467
        %v469 = vmul.f32 %v468, 1.442695
        %v470 = vpow.pop %v469
        %v471 = vadd.f32 %v470, 1.0
        %v472 = vlog2.pop %v471
        %v473 = vmul.f32 %v472, 0.6931472
        %v474 = vmul.f32 -0.5, %v470
        %v475 = vadd.f32 %v474, 1.0
        %v476 = vmul.f32 %v475, %v470
        %v477 = vand.u32 2147483647, %v470
        %vm478 = vcmp.lt.f32.partialorder %v477, 0.0004427343
        %v479 = vsel %vm478, %v476, %v473
        %v480 = vadd.f32 %v466, %v479
        %v481 = vlaneseq
        %v482 = vshrl.u32 %v481, 7
        %v483 = vsub.s32 0, %v482
        %v484 = vrot.slane %v480, %v483
        %v485 = vmul.f32 %v484, %v443
        %v486 = vmul.f32 %v485, 1.442695
        %v487 = vpow.pop %v486
        %v488 = vmul.f32 %v487, %v453
        %v489 = vmul.f32 %v480, %v456
        %v490 = vlaneseq
        %v491 = vshrl.u32 %v490, 7
        %v492 = vsub.s32 0, %v491
        %v493 = vrot.slane %v489, %v492
        %495 = vset.pattern.permute.xlu0 0
        %496 = vperm.xlu0 %495, %v463
        %v497 = vpop.permute.xlu0 %496
        %v499 = vmul.f32 %v493, %v497
        %v500 = vadd.f32 %v488, %v499
        %502 = vset.pattern.permute.xlu0 0
        %503 = vperm.xlu0 %502, %v465
        %v504 = vpop.permute.xlu0 %503
        %v506 = vmul.f32 %v504, %v500
        %vm507 = vcmask 519168
        %v508 = vsel %vm507, %v506, 0.0
        %v509 = vrot.slane %v508, 4
        %v510 = vadd.f32 %v508, %v509
        %v511 = vrot.slane %v510, 2
        %v512 = vadd.f32 %v510, %v511
        %v513 = vrot.slane %v512, 1
        %v514 = vadd.f32 %v512, %v513
        %v515 = vmul.f32 %v444, %v456
        %v516 = vadd.f32 %v514, %v515
        %v517 = vxor.u32 %v460, 2147483648
        %v518 = vmul.f32 %v517, 1.442695
        %v519 = vpow.pop %v518
        %v520 = vadd.f32 %v519, 1.0
        %v521 = vrcp.pop %v520
        %v522 = vmul.f32 1.0, %v521
        %v523 = vmul.f32 %v460, %v522
        %v524 = vmul.f32 %v516, %v523
        %vm525 = vcmp.eq.s32.totalorder %v446, 0
        %v526 = vsel %vm525, 1, 0
        %vm527 = vcmp.eq.s32.totalorder %v526, 1
        %v528 = vlaneseq
        %v529 = vshrl.u32 %v528, 7
        %v530 = vsub.s32 0, %v529
        %v531 = vrot.slane %v524, %v530
        %v532 = vsel %vm527, %v531, 0.0
        %v533 = vlaneseq
        %v534 = vshrl.u32 %v533, 7
        %v535 = vsub.s32 1, %v534
        %v536 = vrot.slane %v480, %v535
        %v537 = vmul.f32 %v536, %v443
        %v538 = vmul.f32 %v537, 1.442695
        %v539 = vpow.pop %v538
        %v540 = vmul.f32 %v539, %v500
        %v541 = vlaneseq
        %v542 = vshrl.u32 %v541, 7
        %v543 = vsub.s32 1, %v542
        %v544 = vrot.slane %v489, %v543
        %545 = vset.pattern.permute.xlu0 1
        %546 = vperm.xlu0 %545, %v463
        %v547 = vpop.permute.xlu0 %546
        %v549 = vmul.f32 %v544, %v547
        %v550 = vadd.f32 %v540, %v549
        %551 = vset.pattern.permute.xlu0 1
        %552 = vperm.xlu0 %551, %v465
        %v553 = vpop.permute.xlu0 %552
        %v555 = vmul.f32 %v553, %v550
        %v556 = vsel %vm507, %v555, 0.0
        %v557 = vrot.slane %v556, 4
        %v558 = vadd.f32 %v556, %v557
        %v559 = vrot.slane %v558, 2
        %v560 = vadd.f32 %v558, %v559
        %v561 = vrot.slane %v560, 1
        %v562 = vadd.f32 %v560, %v561
        %v565 = vunpack.c.l.s4 1966171168
        %v566 = vunpack.c.0.s8 %v565
        %v567 = vlaneseq
        %v568 = vshrl.u32 %v567, 7
        %v569 = vsub.s32 %v566, %v568
        %v570 = vrot.slane %v456, %v569
        %v571 = vcombine.high %v570, %v570
        %v573 = vunpack.c.l.s4 1966171168
        %v574 = vunpack.c.0.s8 %v573
        %v575 = vlaneseq
        %v576 = vshrl.u32 %v575, 7
        %v577 = vsub.s32 %v574, %v576
        %v578 = vrot.slane %v570, %v577
        %v580 = vunpack.c.l.s4 1966171168
        %v581 = vunpack.c.0.s8 %v580
        %v582 = vlaneseq
        %v583 = vshrl.u32 %v582, 7
        %v584 = vsub.s32 %v581, %v583
        %v585 = vrot.slane %v571, %v584
        %v587 = vmul.f32 %v444, %v585
        %v588 = vadd.f32 %v562, %v587
        %v590 = vrot.slane %v523, 1
        %v592 = vmul.f32 %v588, %v590
        %vm593 = vcmp.eq.s32.totalorder %v446, 1
        %v594 = vsel %vm593, 1, 0
        %vm595 = vcmp.eq.s32.totalorder %v594, 1
        %v596 = vlaneseq
        %v597 = vshrl.u32 %v596, 7
        %v598 = vsub.s32 0, %v597
        %v599 = vrot.slane %v592, %v598
        %v600 = vsel %vm595, %v599, %v532
        %v601 = vlaneseq
        %v602 = vshrl.u32 %v601, 7
        %v603 = vsub.s32 2, %v602
        %v604 = vrot.slane %v480, %v603
        %v605 = vmul.f32 %v604, %v443
        %v606 = vmul.f32 %v605, 1.442695
        %v607 = vpow.pop %v606
        %v608 = vmul.f32 %v607, %v550
        %v609 = vlaneseq
        %v610 = vshrl.u32 %v609, 7
        %v611 = vsub.s32 2, %v610
        %v612 = vrot.slane %v489, %v611
        %613 = vset.pattern.permute.xlu0 2
        %614 = vperm.xlu0 %613, %v463
        %v615 = vpop.permute.xlu0 %614
        %v617 = vmul.f32 %v612, %v615
        %v618 = vadd.f32 %v608, %v617
        %619 = vset.pattern.permute.xlu0 2
        %620 = vperm.xlu0 %619, %v465
        %v621 = vpop.permute.xlu0 %620
        %v623 = vmul.f32 %v621, %v618
        %v624 = vsel %vm507, %v623, 0.0
        %v625 = vrot.slane %v624, 4
        %v626 = vadd.f32 %v624, %v625
        %v627 = vrot.slane %v626, 2
        %v628 = vadd.f32 %v626, %v627
        %v629 = vrot.slane %v628, 1
        %v630 = vadd.f32 %v628, %v629
        %v631 = vcombine.high %v578, %v578
        %v633 = vmul.f32 %v444, %v631
        %v634 = vadd.f32 %v630, %v633
        %v635 = vrot.slane %v523, 2
        %v637 = vmul.f32 %v634, %v635
        %vm638 = vcmp.eq.s32.totalorder %v446, 2
        %v639 = vsel %vm638, 1, 0
        %vm640 = vcmp.eq.s32.totalorder %v639, 1
        %v641 = vlaneseq
        %v642 = vshrl.u32 %v641, 7
        %v643 = vsub.s32 0, %v642
        %v644 = vrot.slane %v637, %v643
        %v645 = vsel %vm640, %v644, %v600
        %v646 = vlaneseq
        %v647 = vshrl.u32 %v646, 7
        %v648 = vsub.s32 3, %v647
        %v649 = vrot.slane %v480, %v648
        %v650 = vmul.f32 %v649, %v443
        %v651 = vmul.f32 %v650, 1.442695
        %v652 = vpow.pop %v651
        %v653 = vmul.f32 %v652, %v618
        %v654 = vlaneseq
        %v655 = vshrl.u32 %v654, 7
        %v656 = vsub.s32 3, %v655
        %v657 = vrot.slane %v489, %v656
        %658 = vset.pattern.permute.xlu0 3
        %659 = vperm.xlu0 %658, %v463
        %v660 = vpop.permute.xlu0 %659
        %v662 = vmul.f32 %v657, %v660
        %v663 = vadd.f32 %v653, %v662
        %664 = vset.pattern.permute.xlu0 3
        %665 = vperm.xlu0 %664, %v465
        %v666 = vpop.permute.xlu0 %665
        %v668 = vmul.f32 %v666, %v663
        %v669 = vsel %vm507, %v668, 0.0
        %v670 = vrot.slane %v669, 4
        %v671 = vadd.f32 %v669, %v670
        %v672 = vrot.slane %v671, 2
        %v673 = vadd.f32 %v671, %v672
        %v674 = vrot.slane %v673, 1
        %v675 = vadd.f32 %v673, %v674
        %v676 = vcombine.high %v585, %v585
        %v678 = vmul.f32 %v444, %v676
        %v679 = vadd.f32 %v675, %v678
        %v680 = vrot.slane %v523, 3
        %v682 = vmul.f32 %v679, %v680
        %vm683 = vcmp.eq.s32.totalorder %v446, 3
        %v684 = vsel %vm683, 1, 0
        %vm685 = vcmp.eq.s32.totalorder %v684, 1
        %v686 = vlaneseq
        %v687 = vshrl.u32 %v686, 7
        %v688 = vsub.s32 0, %v687
        %v689 = vrot.slane %v682, %v688
        %v690 = vsel %vm685, %v689, %v645
        %v691 = vlaneseq
        %v692 = vshrl.u32 %v691, 7
        %v693 = vsub.s32 4, %v692
        %v694 = vrot.slane %v480, %v693
        %v695 = vmul.f32 %v694, %v443
        %v696 = vmul.f32 %v695, 1.442695
        %v697 = vpow.pop %v696
        %v698 = vmul.f32 %v697, %v663
        %v699 = vlaneseq
        %v700 = vshrl.u32 %v699, 7
        %v701 = vsub.s32 4, %v700
        %v702 = vrot.slane %v489, %v701
        %703 = vset.pattern.permute.xlu0 4
        %704 = vperm.xlu0 %703, %v463
        %v705 = vpop.permute.xlu0 %704
        %v707 = vmul.f32 %v702, %v705
        %v708 = vadd.f32 %v698, %v707
        %709 = vset.pattern.permute.xlu0 4
        %710 = vperm.xlu0 %709, %v465
        %v711 = vpop.permute.xlu0 %710
        %v713 = vmul.f32 %v711, %v708
        %v714 = vsel %vm507, %v713, 0.0
        %v715 = vrot.slane %v714, 4
        %v716 = vadd.f32 %v714, %v715
        %v717 = vrot.slane %v716, 2
        %v718 = vadd.f32 %v716, %v717
        %v719 = vrot.slane %v718, 1
        %v720 = vadd.f32 %v718, %v719
        %v721 = vcombine.high %v456, %v456
        %v723 = vunpack.c.l.s4 1966171168
        %v724 = vunpack.c.0.s8 %v723
        %v725 = vlaneseq
        %v726 = vshrl.u32 %v725, 7
        %v727 = vsub.s32 %v724, %v726
        %v728 = vrot.slane %v721, %v727
        %v730 = vunpack.c.l.s4 1966171168
        %v731 = vunpack.c.0.s8 %v730
        %v732 = vlaneseq
        %v733 = vshrl.u32 %v732, 7
        %v734 = vsub.s32 %v731, %v733
        %v735 = vrot.slane %v728, %v734
        %v737 = vmul.f32 %v444, %v735
        %v738 = vadd.f32 %v720, %v737
        %v739 = vrot.slane %v523, 4
        %v741 = vmul.f32 %v738, %v739
        %vm742 = vcmp.eq.s32.totalorder %v446, 4
        %v743 = vsel %vm742, 1, 0
        %vm744 = vcmp.eq.s32.totalorder %v743, 1
        %v745 = vlaneseq
        %v746 = vshrl.u32 %v745, 7
        %v747 = vsub.s32 0, %v746
        %v748 = vrot.slane %v741, %v747
        %v749 = vsel %vm744, %v748, %v690
        %v750 = vlaneseq
        %v751 = vshrl.u32 %v750, 7
        %v752 = vsub.s32 5, %v751
        %v753 = vrot.slane %v480, %v752
        %v754 = vmul.f32 %v753, %v443
        %v755 = vmul.f32 %v754, 1.442695
        %v756 = vpow.pop %v755
        %v757 = vmul.f32 %v756, %v708
        %v758 = vlaneseq
        %v759 = vshrl.u32 %v758, 7
        %v760 = vsub.s32 5, %v759
        %v761 = vrot.slane %v489, %v760
        %762 = vset.pattern.permute.xlu0 5
        %763 = vperm.xlu0 %762, %v463
        %v764 = vpop.permute.xlu0 %763
        %v766 = vmul.f32 %v761, %v764
        %v767 = vadd.f32 %v757, %v766
        %768 = vset.pattern.permute.xlu0 5
        %769 = vperm.xlu0 %768, %v465
        %v770 = vpop.permute.xlu0 %769
        %v772 = vmul.f32 %v770, %v767
        %v773 = vsel %vm507, %v772, 0.0
        %v774 = vrot.slane %v773, 4
        %v775 = vadd.f32 %v773, %v774
        %v776 = vrot.slane %v775, 2
        %v777 = vadd.f32 %v775, %v776
        %v778 = vrot.slane %v777, 1
        %v779 = vadd.f32 %v777, %v778
        %v780 = vcombine.high %v728, %v728
        %v782 = vunpack.c.l.s4 1966171168
        %v783 = vunpack.c.0.s8 %v782
        %v784 = vlaneseq
        %v785 = vshrl.u32 %v784, 7
        %v786 = vsub.s32 %v783, %v785
        %v787 = vrot.slane %v780, %v786
        %v789 = vmul.f32 %v444, %v787
        %v790 = vadd.f32 %v779, %v789
        %v791 = vrot.slane %v523, 5
        %v793 = vmul.f32 %v790, %v791
        %vm794 = vcmp.eq.s32.totalorder %v446, 5
        %v795 = vsel %vm794, 1, 0
        %vm796 = vcmp.eq.s32.totalorder %v795, 1
        %v797 = vlaneseq
        %v798 = vshrl.u32 %v797, 7
        %v799 = vsub.s32 0, %v798
        %v800 = vrot.slane %v793, %v799
        %v801 = vsel %vm796, %v800, %v749
        %v802 = vlaneseq
        %v803 = vshrl.u32 %v802, 7
        %v804 = vsub.s32 6, %v803
        %v805 = vrot.slane %v480, %v804
        %v806 = vmul.f32 %v805, %v443
        %v807 = vmul.f32 %v806, 1.442695
        %v808 = vpow.pop %v807
        %v809 = vmul.f32 %v808, %v767
        %v810 = vlaneseq
        %v811 = vshrl.u32 %v810, 7
        %v812 = vsub.s32 6, %v811
        %v813 = vrot.slane %v489, %v812
        %814 = vset.pattern.permute.xlu0 6
        %815 = vperm.xlu0 %814, %v463
        %v816 = vpop.permute.xlu0 %815
        %v818 = vmul.f32 %v813, %v816
        %v819 = vadd.f32 %v809, %v818
        %820 = vset.pattern.permute.xlu0 6
        %821 = vperm.xlu0 %820, %v465
        %v822 = vpop.permute.xlu0 %821
        %v824 = vmul.f32 %v822, %v819
        %v825 = vsel %vm507, %v824, 0.0
        %v826 = vrot.slane %v825, 4
        %v827 = vadd.f32 %v825, %v826
        %v828 = vrot.slane %v827, 2
        %v829 = vadd.f32 %v827, %v828
        %v830 = vrot.slane %v829, 1
        %v831 = vadd.f32 %v829, %v830
        %v832 = vcombine.high %v735, %v735
        %v834 = vmul.f32 %v444, %v832
        %v835 = vadd.f32 %v831, %v834
        %v836 = vrot.slane %v523, 6
        %v838 = vmul.f32 %v835, %v836
        %vm839 = vcmp.eq.s32.totalorder %v446, 6
        %v840 = vsel %vm839, 1, 0
        %vm841 = vcmp.eq.s32.totalorder %v840, 1
        %v842 = vlaneseq
        %v843 = vshrl.u32 %v842, 7
        %v844 = vsub.s32 0, %v843
        %v845 = vrot.slane %v838, %v844
        %v846 = vsel %vm841, %v845, %v801
        %v847 = vlaneseq
        %v848 = vshrl.u32 %v847, 7
        %v849 = vsub.s32 7, %v848
        %v850 = vrot.slane %v480, %v849
        %v851 = vmul.f32 %v850, %v443
        %v852 = vmul.f32 %v851, 1.442695
        %v853 = vpow.pop %v852
        %v854 = vmul.f32 %v853, %v819
        %v855 = vlaneseq
        %v856 = vshrl.u32 %v855, 7
        %v857 = vsub.s32 7, %v856
        %v858 = vrot.slane %v489, %v857
        %859 = vset.pattern.permute.xlu0 7
        %860 = vperm.xlu0 %859, %v463
        %v861 = vpop.permute.xlu0 %860
        %v863 = vmul.f32 %v858, %v861
        %v864 = vadd.f32 %v854, %v863
        %865 = vset.pattern.permute.xlu0 7
        %866 = vperm.xlu0 %865, %v465
        %v867 = vpop.permute.xlu0 %866
        %v869 = vmul.f32 %v867, %v864
        %v870 = vsel %vm507, %v869, 0.0
        %v871 = vrot.slane %v870, 4
        %v872 = vadd.f32 %v870, %v871
        %v873 = vrot.slane %v872, 2
        %v874 = vadd.f32 %v872, %v873
        %v875 = vrot.slane %v874, 1
        %v876 = vadd.f32 %v874, %v875
        %v877 = vcombine.high %v787, %v787
        %v879 = vmul.f32 %v444, %v877
        %v880 = vadd.f32 %v876, %v879
        %v881 = vrot.slane %v523, 7
        %v883 = vmul.f32 %v880, %v881
        %vm884 = vcmp.eq.s32.totalorder %v446, 7
        %v885 = vsel %vm884, 1, 0
        %vm886 = vcmp.eq.s32.totalorder %v885, 1
        %v887 = vlaneseq
        %v888 = vshrl.u32 %v887, 7
        %v889 = vsub.s32 0, %v888
        %v890 = vrot.slane %v883, %v889
        %v891 = vsel %vm886, %v890, %v846
        %s892 = scalar_lea.vmem %s442, %s454
        %vm893 = vcmask 523264
        %894 = vst.msk [vmem:[%s892] sm:$0xff] %vm893, %v891
      $region53: #{mamba_pose_forward.22} parent=47 // loop_footer
        %s452 = sadd.s32 1, %s448
      $region54: #{mamba_pose_forward.22} parent=47 // loop_footer_branch
        %447 = sbr.rel target = $region50
      $region55: #{mamba_pose_forward.22} parent=47 // loop_exit
        _
      %p895 = scmp.lt.s32.totalorder %s22, 1
      %s896 = scalar_select %p895, %s22, 1
      %p897 = scmp.lt.s32.totalorder %s23, 0
      %s898 = scalar_select %p897, %s23, 0
      %s899 = smul.addr %s896, 12
      %s900 = sadd.s32 %s898, %s899
      %s901 = smul.addr %s900, 8
      %s902 = scalar_lea.vmem %s7, %s901
      // Predicated region
      $region56: #{mamba_pose_forward.22} parent=47 // pred_check
        %p903 = pneg %p238
      $region57: #{mamba_pose_forward.22} parent=47 // pred_check_branch
        %905 = sbr.rel (%p903) target = $region59
      $region58: #{mamba_pose_forward.22} parent=47 // pred_region
        _
      $region59: #{mamba_pose_forward.22} parent=47 // pred_fallthru
        _
    $region48: #{mamba_pose_forward.22} parent=5 // pred_fallthru
      _
    %p906 = scmp.le.s32.totalorder 2, %s13
    // Predicated region
    $region60: #{mamba_pose_forward.22} parent=5 // pred_check
      %p907 = pneg %p906
    $region61: #{mamba_pose_forward.22} parent=5 // pred_check_branch
      %909 = sbr.rel (%p907) target = $region63
    $region62: #{mamba_pose_forward.22} parent=5 // pred_region
      %s910 = ssub.s32 %s13, 2
      // Predicated region
      $region64: #{mamba_pose_forward.22} parent=62 // pred_check
        %p911 = pneg %p244
      $region65: #{mamba_pose_forward.22} parent=62 // pred_check_branch
        %913 = sbr.rel (%p911) target = $region67
      $region66: #{mamba_pose_forward.22} parent=62 // pred_region
        %p914 = scmp.lt.s32.totalorder %s24, 1
        %s915 = scalar_select %p914, %s24, 1
        %p916 = scmp.lt.s32.totalorder %s25, 0
        %s917 = scalar_select %p916, %s25, 0
        %s918 = smul.addr %s915, 12
        %s919 = sadd.s32 %s917, %s918
        %s920 = smul.addr %s919, 8
        %s921 = scalar_lea.vmem %s7, %s920
      $region67: #{mamba_pose_forward.22} parent=62 // pred_fallthru
        _
    $region63: #{mamba_pose_forward.22} parent=5 // pred_fallthru
      _
  $region6: #{mamba_pose_forward.22} parent=0 // loop_footer
    %s17 = sadd.s32 1, %s13
  $region7: #{mamba_pose_forward.22} parent=0 // loop_footer_branch
    %12 = sbr.rel target = $region3
  $region8: #{mamba_pose_forward.22} parent=0 // loop_exit
    _

// kernel: mamba_pose_forward.29
$region0: #{mamba_pose_forward.29}
  #allocation0 [shape = 'u32[]', space=smem, size = 0x4, offset = 0x4, fixed_abs, tag = 'smem constant byte address 0x4 - core index']
  #allocation1 [shape = 'u32[144,128]{1,0:T(1,128)}', space=vmem, size = 0x12000, scoped, tag = 'internal scratch']
  %s0 = inlined_call_operand.vmem [shape: bf16[96,64], index: 0, kind: input, shape index: {}]
  %s1 = inlined_call_operand.vmem [shape: bf16[64,32], index: 1, kind: input, shape index: {}]
  %s2 = inlined_call_operand.vmem [shape: f32[1,32], index: 2, kind: input, shape index: {}]
  %s3 = inlined_call_operand.vmem [shape: bf16[32,128], index: 3, kind: input, shape index: {}]
  %s4 = inlined_call_operand.vmem [shape: f32[1,128], index: 4, kind: input, shape index: {}]
  %s5 = inlined_call_operand.vmem [shape: f32[96,128], index: 5, kind: output, shape index: {}]
  %s6 = sld [smem:[#allocation0]]
  $region30: #{mamba_pose_forward.29} parent=0
    _
  %s8 = ssub.s32 1, %s6
  %s9 = scalar_select 0, %s8, %s6
  // Predicated region
  $region2: #{mamba_pose_forward.29} parent=0 // pred_check
    _
  $region3: #{mamba_pose_forward.29} parent=0 // pred_check_branch
    %11 = sbr.rel (0) target = $region5
  $region4: #{mamba_pose_forward.29} parent=0 // pred_region
    _
  $region5: #{mamba_pose_forward.29} parent=0 // pred_fallthru
    _
  // Predicated region
  $region6: #{mamba_pose_forward.29} parent=0 // pred_check
    _
  $region7: #{mamba_pose_forward.29} parent=0 // pred_check_branch
    %13 = sbr.rel (0) target = $region9
  $region8: #{mamba_pose_forward.29} parent=0 // pred_region
    _
  $region9: #{mamba_pose_forward.29} parent=0 // pred_fallthru
    _
  // Predicated region
  $region10: #{mamba_pose_forward.29} parent=0 // pred_check
    _
  $region11: #{mamba_pose_forward.29} parent=0 // pred_check_branch
    %15 = sbr.rel (0) target = $region13
  $region12: #{mamba_pose_forward.29} parent=0 // pred_region
    _
  $region13: #{mamba_pose_forward.29} parent=0 // pred_fallthru
    _
  // Predicated region
  $region14: #{mamba_pose_forward.29} parent=0 // pred_check
    _
  $region15: #{mamba_pose_forward.29} parent=0 // pred_check_branch
    %17 = sbr.rel (0) target = $region17
  $region16: #{mamba_pose_forward.29} parent=0 // pred_region
    _
  $region17: #{mamba_pose_forward.29} parent=0 // pred_fallthru
    _
  // Predicated region
  $region18: #{mamba_pose_forward.29} parent=0 // pred_check
    _
  $region19: #{mamba_pose_forward.29} parent=0 // pred_check_branch
    %19 = sbr.rel (0) target = $region21
  $region20: #{mamba_pose_forward.29} parent=0 // pred_region
    _
  $region21: #{mamba_pose_forward.29} parent=0 // pred_fallthru
    _
  %v21 = vld [vmem:[%s0] sm:$0xf]
  %v22 = vld [vmem:[%s0 + $0x4] sm:$0xf]
  %v23 = vld [vmem:[%s0 + $0x8] sm:$0xf]
  %v24 = vld [vmem:[%s0 + $0xc] sm:$0xf]
  %v25 = vld [vmem:[%s0 + $0x10] sm:$0xf]
  %v26 = vld [vmem:[%s0 + $0x14] sm:$0xf]
  %v27 = vld [vmem:[%s0 + $0x18] sm:$0xf]
  %v28 = vld [vmem:[%s0 + $0x1c] sm:$0xf]
  %v29 = vld [vmem:[%s0 + $0x20] sm:$0xf]
  %v30 = vld [vmem:[%s0 + $0x24] sm:$0xf]
  %v31 = vld [vmem:[%s0 + $0x28] sm:$0xf]
  %v32 = vld [vmem:[%s0 + $0x2c] sm:$0xf]
  %v33 = vld [vmem:[%s1] sm:$0xf]
  %v34 = vld [vmem:[%s1 + $0x4] sm:$0xf]
  %v35 = vld [vmem:[%s1 + $0x8] sm:$0xf]
  %v36 = vld [vmem:[%s1 + $0xc] sm:$0xf]
  %v37 = vld [vmem:[%s1 + $0x10] sm:$0xf]
  %v38 = vld [vmem:[%s1 + $0x14] sm:$0xf]
  %v39 = vld [vmem:[%s1 + $0x18] sm:$0xf]
  %v40 = vld [vmem:[%s1 + $0x1c] sm:$0xf]
  %v41 = vld [vmem:[%s2] sm:$0x1]
  %v43 = vlaneseq
  %v44 = vshrl.u32 %v43, 7
  %v45 = vsub.s32 0, %v44
  %v46 = vrot.slane %v41, %v45
  %v60 = vunpack.c.l.b16 %v21
  %v61 = vunpack.c.l.b16 %v22
  %v62 = vunpack.c.l.b16 %v23
  %v63 = vunpack.c.l.b16 %v24
  %v64 = vunpack.c.l.b16 %v25
  %v65 = vunpack.c.l.b16 %v26
  %v66 = vunpack.c.l.b16 %v27
  %v67 = vunpack.c.l.b16 %v28
  %v68 = vunpack.c.l.b16 %v29
  %v69 = vunpack.c.l.b16 %v30
  %v70 = vunpack.c.l.b16 %v31
  %v71 = vunpack.c.l.b16 %v32
  %v72 = vpack.c.b16 %v61, %v60
  %v73 = vpack.c.b16 %v63, %v62
  %v74 = vpack.c.b16 %v65, %v64
  %v75 = vpack.c.b16 %v67, %v66
  %v76 = vpack.c.b16 %v69, %v68
  %v77 = vpack.c.b16 %v71, %v70
  %v86 = vunpack.c.l.b16 %v33
  %v87 = vunpack.c.l.b16 %v34
  %v88 = vunpack.c.l.b16 %v35
  %v89 = vunpack.c.l.b16 %v36
  %v90 = vunpack.c.l.b16 %v37
  %v91 = vunpack.c.l.b16 %v38
  %v92 = vunpack.c.l.b16 %v39
  %v93 = vunpack.c.l.b16 %v40
  %v94 = vpack.c.b16 %v87, %v86
  %v95 = vpack.c.b16 %v89, %v88
  %v96 = vpack.c.b16 %v91, %v90
  %v97 = vpack.c.b16 %v93, %v92
  %vm102 = vcmask 523264
  %v104 = vsel %vm102, %v72, 0
  %v107 = vsel %vm102, %v73, 0
  %v110 = vsel %vm102, %v74, 0
  %v113 = vsel %vm102, %v75, 0
  %v116 = vsel %vm102, %v76, 0
  %v119 = vsel %vm102, %v77, 0
  %121 = vmatprep.subr.bf16.mxu0 0
  %122 = vmatpush1.bf16.msra.mxu0 %v94
  %123 = vmatprep.subr.bf16.mxu0 0
  %124 = vmatpush1.bf16.msra.mxu0 %v95
  %125 = vmatprep.subr.bf16.mxu0 0
  %126 = vmatpush1.bf16.msra.mxu0 %v96
  %127 = vmatprep.subr.bf16.mxu0 0
  %128 = vmatpush1.bf16.msra.mxu0 %v97
  %129 = vmatprep.subr.bf16.mxu0 0
  %130 = vmatpush1.bf16.msra.mxu0 0
  %131 = vmatprep.subr.bf16.mxu0 0
  %132 = vmatpush1.bf16.msra.mxu0 0
  %133 = vmatprep.subr.bf16.mxu0 0
  %134 = vmatpush1.bf16.msra.mxu0 0
  %135 = vmatprep.subr.bf16.mxu0 0
  %136 = vmatpush1.bf16.msra.mxu0 0
  %137 = vmatprep.subr.bf16.mxu0 0
  %138 = vmatpush1.bf16.msra.mxu0 0
  %139 = vmatprep.subr.bf16.mxu0 0
  %140 = vmatpush1.bf16.msra.mxu0 0
  %141 = vmatprep.subr.bf16.mxu0 0
  %142 = vmatpush1.bf16.msra.mxu0 0
  %143 = vmatprep.subr.bf16.mxu0 0
  %144 = vmatpush1.bf16.msra.mxu0 0
  %145 = vmatprep.subr.bf16.mxu0 0
  %146 = vmatpush1.bf16.msra.mxu0 0
  %147 = vmatprep.subr.bf16.mxu0 0
  %148 = vmatpush1.bf16.msra.mxu0 0
  %149 = vmatprep.subr.bf16.mxu0 0
  %150 = vmatpush1.bf16.msra.mxu0 0
  %151 = vmatprep.subr.bf16.mxu0 0
  %152 = vmatpush1.bf16.msra.mxu0 0
  %153 = vmatprep.mubr.bf16.mxu0 0
  %154 = vmatmul.mubr.bf16.gmra.mrb[0].mxu0 %v104
  %v155 = vpop.f32.mrb[0].mxu0
  %v156 = vadd.f32 %v46, %v155
  %v157 = vpop.f32.mrb[0].mxu0
  %v158 = vpop.f32.mrb[0].mxu0
  %v159 = vadd.f32 %v46, %v158
  %v160 = vpop.f32.mrb[0].mxu0
  %161 = vmatprep.mubr.bf16.mxu0 0
  %162 = vmatmul.mubr.bf16.gmra.mrb[0].mxu0 %v107
  %v163 = vpop.f32.mrb[0].mxu0
  %v164 = vadd.f32 %v46, %v163
  %v165 = vpop.f32.mrb[0].mxu0
  %v166 = vpop.f32.mrb[0].mxu0
  %v167 = vadd.f32 %v46, %v166
  %v168 = vpop.f32.mrb[0].mxu0
  %169 = vmatprep.mubr.bf16.mxu0 0
  %170 = vmatmul.mubr.bf16.gmra.mrb[0].mxu0 %v110
  %v171 = vpop.f32.mrb[0].mxu0
  %v172 = vadd.f32 %v46, %v171
  %v173 = vpop.f32.mrb[0].mxu0
  %v174 = vpop.f32.mrb[0].mxu0
  %v175 = vadd.f32 %v46, %v174
  %v176 = vpop.f32.mrb[0].mxu0
  %177 = vmatprep.mubr.bf16.mxu0 0
  %178 = vmatmul.mubr.bf16.gmra.mrb[0].mxu0 %v113
  %v179 = vpop.f32.mrb[0].mxu0
  %v180 = vadd.f32 %v46, %v179
  %v181 = vpop.f32.mrb[0].mxu0
  %v182 = vpop.f32.mrb[0].mxu0
  %v183 = vadd.f32 %v46, %v182
  %v184 = vpop.f32.mrb[0].mxu0
  %185 = vmatprep.mubr.bf16.mxu0 0
  %186 = vmatmul.mubr.bf16.gmra.mrb[0].mxu0 %v116
  %v187 = vpop.f32.mrb[0].mxu0
  %v188 = vadd.f32 %v46, %v187
  %v189 = vpop.f32.mrb[0].mxu0
  %v190 = vpop.f32.mrb[0].mxu0
  %v191 = vadd.f32 %v46, %v190
  %v192 = vpop.f32.mrb[0].mxu0
  %193 = vmatprep.mubr.bf16.mxu0 0
  %194 = vmatmul.mubr.bf16.gmra.mrb[0].mxu0 %v119
  %v195 = vpop.f32.mrb[0].mxu0
  %v196 = vadd.f32 %v46, %v195
  %v197 = vpop.f32.mrb[0].mxu0
  %v198 = vpop.f32.mrb[0].mxu0
  %v199 = vadd.f32 %v46, %v198
  %v200 = vpop.f32.mrb[0].mxu0
  %201 = vdwg.mxu0
  %v202 = vtanh.pop %v156
  %v203 = vtanh.pop %v159
  %v204 = vtanh.pop %v164
  %v205 = vtanh.pop %v167
  %v206 = vtanh.pop %v172
  %v207 = vtanh.pop %v175
  %v208 = vtanh.pop %v180
  %v209 = vtanh.pop %v183
  %v210 = vtanh.pop %v188
  %v211 = vtanh.pop %v191
  %v212 = vtanh.pop %v196
  %v213 = vtanh.pop %v199
  %v214 = vpack.c.bf16 %v203, %v202
  %v215 = vpack.c.bf16 %v205, %v204
  %v216 = vpack.c.bf16 %v207, %v206
  %v217 = vpack.c.bf16 %v209, %v208
  %v218 = vpack.c.bf16 %v211, %v210
  %v219 = vpack.c.bf16 %v213, %v212
  %v220 = vld [vmem:[%s3] sm:$0xf]
  %v221 = vld [vmem:[%s3 + $0x4] sm:$0xf]
  %v222 = vld [vmem:[%s3 + $0x8] sm:$0xf]
  %v223 = vld [vmem:[%s3 + $0xc] sm:$0xf]
  %v224 = vld [vmem:[%s4] sm:$0x1]
  %v226 = vlaneseq
  %v227 = vshrl.u32 %v226, 7
  %v228 = vsub.s32 0, %v227
  %v229 = vrot.slane %v224, %v228
  %v235 = vunpack.c.l.b16 %v220
  %v236 = vunpack.c.l.b16 %v221
  %v237 = vunpack.c.l.b16 %v222
  %v238 = vunpack.c.l.b16 %v223
  %v239 = vpack.c.b16 %v236, %v235
  %v240 = vpack.c.b16 %v238, %v237
  %vm243 = vcmask 261120
  %v245 = vsel %vm243, %v214, 0
  %v248 = vsel %vm243, %v215, 0
  %v251 = vsel %vm243, %v216, 0
  %v254 = vsel %vm243, %v217, 0
  %v257 = vsel %vm243, %v218, 0
  %v260 = vsel %vm243, %v219, 0
  %262 = vmatprep.subr.bf16.mxu0 0
  %263 = vmatpush1.bf16.msra.mxu0 %v239
  %264 = vmatprep.subr.bf16.mxu0 0
  %265 = vmatpush1.bf16.msra.mxu0 %v240
  %266 = vmatprep.subr.bf16.mxu0 0
  %267 = vmatpush1.bf16.msra.mxu0 0
  %268 = vmatprep.subr.bf16.mxu0 0
  %269 = vmatpush1.bf16.msra.mxu0 0
  %270 = vmatprep.subr.bf16.mxu0 0
  %271 = vmatpush1.bf16.msra.mxu0 0
  %272 = vmatprep.subr.bf16.mxu0 0
  %273 = vmatpush1.bf16.msra.mxu0 0
  %274 = vmatprep.subr.bf16.mxu0 0
  %275 = vmatpush1.bf16.msra.mxu0 0
  %276 = vmatprep.subr.bf16.mxu0 0
  %277 = vmatpush1.bf16.msra.mxu0 0
  %278 = vmatprep.subr.bf16.mxu0 0
  %279 = vmatpush1.bf16.msra.mxu0 0
  %280 = vmatprep.subr.bf16.mxu0 0
  %281 = vmatpush1.bf16.msra.mxu0 0
  %282 = vmatprep.subr.bf16.mxu0 0
  %283 = vmatpush1.bf16.msra.mxu0 0
  %284 = vmatprep.subr.bf16.mxu0 0
  %285 = vmatpush1.bf16.msra.mxu0 0
  %286 = vmatprep.subr.bf16.mxu0 0
  %287 = vmatpush1.bf16.msra.mxu0 0
  %288 = vmatprep.subr.bf16.mxu0 0
  %289 = vmatpush1.bf16.msra.mxu0 0
  %290 = vmatprep.subr.bf16.mxu0 0
  %291 = vmatpush1.bf16.msra.mxu0 0
  %292 = vmatprep.subr.bf16.mxu0 0
  %293 = vmatpush1.bf16.msra.mxu0 0
  %294 = vmatprep.mubr.bf16.mxu0 0
  %295 = vmatmul.mubr.bf16.gmra.mrb[0].mxu0 %v245
  %v296 = vpop.f32.mrb[0].mxu0
  %v297 = vadd.f32 %v229, %v296
  %v298 = vpop.f32.mrb[0].mxu0
  %v299 = vpop.f32.mrb[0].mxu0
  %v300 = vadd.f32 %v229, %v299
  %v301 = vpop.f32.mrb[0].mxu0
  %302 = vmatprep.mubr.bf16.mxu0 0
  %303 = vmatmul.mubr.bf16.gmra.mrb[0].mxu0 %v248
  %v304 = vpop.f32.mrb[0].mxu0
  %v305 = vadd.f32 %v229, %v304
  %v306 = vpop.f32.mrb[0].mxu0
  %v307 = vpop.f32.mrb[0].mxu0
  %v308 = vadd.f32 %v229, %v307
  %v309 = vpop.f32.mrb[0].mxu0
  %310 = vmatprep.mubr.bf16.mxu0 0
  %311 = vmatmul.mubr.bf16.gmra.mrb[0].mxu0 %v251
  %v312 = vpop.f32.mrb[0].mxu0
  %v313 = vadd.f32 %v229, %v312
  %v314 = vpop.f32.mrb[0].mxu0
  %v315 = vpop.f32.mrb[0].mxu0
  %v316 = vadd.f32 %v229, %v315
  %v317 = vpop.f32.mrb[0].mxu0
  %318 = vmatprep.mubr.bf16.mxu0 0
  %319 = vmatmul.mubr.bf16.gmra.mrb[0].mxu0 %v254
  %v320 = vpop.f32.mrb[0].mxu0
  %v321 = vadd.f32 %v229, %v320
  %v322 = vpop.f32.mrb[0].mxu0
  %v323 = vpop.f32.mrb[0].mxu0
  %v324 = vadd.f32 %v229, %v323
  %v325 = vpop.f32.mrb[0].mxu0
  %326 = vmatprep.mubr.bf16.mxu0 0
  %327 = vmatmul.mubr.bf16.gmra.mrb[0].mxu0 %v257
  %v328 = vpop.f32.mrb[0].mxu0
  %v329 = vadd.f32 %v229, %v328
  %v330 = vpop.f32.mrb[0].mxu0
  %v331 = vpop.f32.mrb[0].mxu0
  %v332 = vadd.f32 %v229, %v331
  %v333 = vpop.f32.mrb[0].mxu0
  %334 = vmatprep.mubr.bf16.mxu0 0
  %335 = vmatmul.mubr.bf16.gmra.mrb[0].mxu0 %v260
  %v336 = vpop.f32.mrb[0].mxu0
  %v337 = vadd.f32 %v229, %v336
  %v338 = vpop.f32.mrb[0].mxu0
  %v339 = vpop.f32.mrb[0].mxu0
  %v340 = vadd.f32 %v229, %v339
  %v341 = vpop.f32.mrb[0].mxu0
  %342 = vdwg.mxu0
  %343 = vst [vmem:[%s5] sm:$0xff] %v297
  %344 = vst [vmem:[%s5 + $0x8] sm:$0xff] %v300
  %345 = vst [vmem:[%s5 + $0x10] sm:$0xff] %v305
  %346 = vst [vmem:[%s5 + $0x18] sm:$0xff] %v308
  %347 = vst [vmem:[%s5 + $0x20] sm:$0xff] %v313
  %348 = vst [vmem:[%s5 + $0x28] sm:$0xff] %v316
  %349 = vst [vmem:[%s5 + $0x30] sm:$0xff] %v321
  %350 = vst [vmem:[%s5 + $0x38] sm:$0xff] %v324
  %351 = vst [vmem:[%s5 + $0x40] sm:$0xff] %v329
  %352 = vst [vmem:[%s5 + $0x48] sm:$0xff] %v332
  %353 = vst [vmem:[%s5 + $0x50] sm:$0xff] %v337
  %354 = vst [vmem:[%s5 + $0x58] sm:$0xff] %v340
  // Predicated region
  $region22: #{mamba_pose_forward.29} parent=0 // pred_check
    _
  $region23: #{mamba_pose_forward.29} parent=0 // pred_check_branch
    %356 = sbr.rel (0) target = $region25
  $region24: #{mamba_pose_forward.29} parent=0 // pred_region
    _
  $region25: #{mamba_pose_forward.29} parent=0 // pred_fallthru
    _
  // Predicated region
  $region26: #{mamba_pose_forward.29} parent=0 // pred_check
    _
  $region27: #{mamba_pose_forward.29} parent=0 // pred_check_branch
    %358 = sbr.rel (0) target = $region29
  $region28: #{mamba_pose_forward.29} parent=0 // pred_region
    _
  $region29: #{mamba_pose_forward.29} parent=0 // pred_fallthru
    _

</llo_original>
